<compile_context>
chip_gen: v6e
topology: v6e:2x2x1
jax: 0.10.0
libtpu: 0.0.40
codegen_flags: <defaults>
</compile_context>

<pallas_src>
import functools

import jax
import jax.numpy as jnp
from jax.experimental import pallas as pl
from jax.experimental.pallas import tpu as pltpu


# ----------------------------------------------------------------------------
# Fused RDBs forward kernel (one grid step == one batch element)
# ----------------------------------------------------------------------------
def _rdbs_fused_kernel(*refs, in_ch, out_ch, layer_num, n_cells, H, W):
    Hp, Wp = H + 2, W + 2
    F = Hp * Wp                  # flattened padded-frame length
    E = Wp + 1                   # frame offset inside the extended scratch

    it = iter(refs)
    x_ref = next(it)             # (1, in_ch, H*W)   lane-dense HBM block
    mask_ref = next(it)          # (1, F)            1.0 at interior positions
    cells = []
    for _ in range(n_cells):
        layers = [(next(it), next(it)) for _ in range(layer_num)]
        w1 = next(it)
        b1 = next(it)
        cells.append((layers, w1, b1))
    wc1_ref = next(it)
    bc1_ref = next(it)
    wc2_ref = next(it)
    bc2_ref = next(it)
    o_ref = next(it)             # (1, in_ch, H*W)   lane-dense HBM block
    feat = next(it)              # (c_max, L) extended padded frame, ch-first
    patches = next(it)           # (9*c_max, F) im2col staging buffer
    cat = next(it)               # (n_cells*in_ch, F) concat of cell outputs

    cdt = feat.dtype
    mask = mask_ref[...]         # (1, F) float32

    def conv3x3(cin, w_ref, b_ref, relu):
        # Gather the 9 shifted taps of channels [0:cin] (static slices of the
        # extended frame), then contract them in ONE MXU matmul with K=9*cin.
        for ky in range(3):
            for kx in range(3):
                t = ky * 3 + kx
                s = ky * Wp + kx
                patches[t * cin:(t + 1) * cin, :] = feat[0:cin, s:s + F]
        y = jnp.dot(w_ref[...], patches[0:9 * cin, :],
                    preferred_element_type=jnp.float32)        # (cout, F)
        y = y + b_ref[...]
        if relu:
            y = jnp.maximum(y, 0.0)
        return y * mask          # keep the halo at exactly zero

    # -- per-image setup -----------------------------------------------------
    feat[...] = jnp.zeros_like(feat)          # halo / extension regions <- 0
    for h in range(H):                        # place input rows in the frame
        col = E + (h + 1) * Wp + 1
        feat[0:in_ch, col:col + W] = x_ref[0, :, h * W:(h + 1) * W].astype(cdt)
    cur = feat[0:in_ch, E:E + F].astype(jnp.float32)           # (in_ch, F)

    # -- RDB cells -------------------------------------------------------------
    for ci in range(n_cells):
        layers, w1_ref, b1_ref = cells[ci]
        residual = cur
        c_total = in_ch
        for (w_ref, b_ref) in layers:         # Rdb_g: conv3x3 + ReLU, concat
            y = conv3x3(c_total, w_ref, b_ref, relu=True)
            feat[c_total:c_total + out_ch, E:E + F] = y.astype(cdt)
            c_total += out_ch
        h_all = feat[0:c_total, E:E + F]      # whole concat stack, channels-first
        z = jnp.dot(w1_ref[...], h_all, preferred_element_type=jnp.float32)
        z = (z + b1_ref[...]) * mask + residual         # 1x1 proj + residual
        cat[ci * in_ch:(ci + 1) * in_ch, :] = z.astype(cdt)
        feat[0:in_ch, E:E + F] = z.astype(cdt)          # next cell's input
        cur = z

    # -- tail: 1x1 over concat of cell outputs, then final 3x3 -----------------
    y1 = jnp.dot(wc1_ref[...], cat[...], preferred_element_type=jnp.float32)
    y1 = (y1 + bc1_ref[...]) * mask
    feat[0:in_ch, E:E + F] = y1.astype(cdt)
    y2 = conv3x3(in_ch, wc2_ref, bc2_ref, relu=False)           # (in_ch, F)
    feat[0:in_ch, E:E + F] = y2.astype(cdt)
    for h in range(H):                         # frame -> dense (in_ch, H*W)
        col = E + (h + 1) * Wp + 1
        o_ref[0, :, h * W:(h + 1) * W] = (
            feat[0:in_ch, col:col + W].astype(o_ref.dtype))


# ----------------------------------------------------------------------------
# Wrapper: NCHW in / NCHW out, single pallas_call for the whole forward pass
# ----------------------------------------------------------------------------
def rdbs_forward(params, x_nchw, *, operand_dtype=jnp.float32):
    """Fused Pallas forward of RDBs.  x_nchw: (N, C, H, W).
    operand_dtype=jnp.bfloat16 halves HBM/VMEM traffic (v6e/v7x); accumulation
    stays float32 either way."""
    N, C, H, W = x_nchw.shape
    n_cells = len(params["cells"])
    layer_num = len(params["cells"][0]["layers"])
    out_ch = params["cells"][0]["layers"][0][0].shape[-1]
    Hp, Wp = H + 2, W + 2
    F = Hp * Wp
    L = F + 2 * (Wp + 1)
    c_max = C + layer_num * out_ch
    cdt = operand_dtype

    # Interior (non-halo) mask over the flattened padded frame (built in XLA).
    pos = jnp.arange(F, dtype=jnp.int32)
    hh, ww = pos // Wp, pos % Wp
    mask = (((hh >= 1) & (hh <= H)) & ((ww >= 1) & (ww <= W)))
    mask = mask.astype(jnp.float32).reshape(1, F)

    # Flat argument list: x, mask, per-cell [(w3,b3)*layer_num, w1, b1],
    # wc1, bc1, wc2, bc2 -- weights pre-arranged for channels-first matmuls.
    args = [x_nchw.reshape(N, C, H * W).astype(cdt), mask]
    for cell in params["cells"]:
        for (w, b) in cell["layers"]:                        # (3,3,cin,cout)
            cin, cout = w.shape[2], w.shape[3]
            args.append(jnp.transpose(w, (3, 0, 1, 2))
                        .reshape(cout, 9 * cin).astype(cdt))
            args.append(b.reshape(cout, 1).astype(jnp.float32))
        args.append(cell["w1"].T.astype(cdt))                # (C, c_total)
        args.append(cell["b1"].reshape(C, 1).astype(jnp.float32))
    args.append(params["w_conv1"].T.astype(cdt))             # (C, n_cells*C)
    args.append(params["b_conv1"].reshape(C, 1).astype(jnp.float32))
    wc2 = params["w_conv2"]                                  # (3,3,C,C)
    args.append(jnp.transpose(wc2, (3, 0, 1, 2)).reshape(C, 9 * C).astype(cdt))
    args.append(params["b_conv2"].reshape(C, 1).astype(jnp.float32))

    kern = functools.partial(_rdbs_fused_kernel, in_ch=C, out_ch=out_ch,
                             layer_num=layer_num, n_cells=n_cells, H=H, W=W)

    in_specs = [pl.BlockSpec((1, C, H * W), lambda n: (n, 0, 0))]
    in_specs += [pl.BlockSpec(a.shape, lambda n: (0, 0)) for a in args[1:]]

    out = pl.pallas_call(
        kern,
        out_shape=jax.ShapeDtypeStruct((N, C, H * W), x_nchw.dtype),
        grid_spec=pltpu.PrefetchScalarGridSpec(
            num_scalar_prefetch=0,
            grid=(N,),
            in_specs=in_specs,
            out_specs=pl.BlockSpec((1, C, H * W), lambda n: (n, 0, 0)),
            scratch_shapes=[
                pltpu.VMEM((c_max, L), cdt),          # extended padded frame
                pltpu.VMEM((9 * c_max, F), cdt),      # im2col staging buffer
                pltpu.VMEM((n_cells * C, F), cdt),    # concat of cell outputs
            ],
        ),
        compiler_params=pltpu.CompilerParams(
            dimension_semantics=("parallel",),   # shard batch over v7x's 2 TCs
            vmem_limit_bytes=32 * 1024 * 1024,   # > v5e's 16 MiB default
        ),
    )(*args)
    return out.reshape(N, C, H, W)


# ----------------------------------------------------------------------------
# Parameter construction (deterministic synthetic init, PyTorch module shapes)
# ----------------------------------------------------------------------------
def init_rdbs_params(key, in_channel, out_channel, layer_num, rdbs_layer_num):
    def nrm(k, shape):
        return 0.1 * jax.random.normal(k, shape, jnp.float32)

    params = {"cells": []}
    kidx = 0

    def nk():
        nonlocal kidx
        kidx += 1
        return jax.random.fold_in(key, kidx)

    for _ in range(rdbs_layer_num):
        next_in = in_channel
        layers = []
        for _ in range(layer_num):
            w = nrm(nk(), (3, 3, next_in, out_channel))   # conv3x3 weight (HWIO)
            b = nrm(nk(), (out_channel,))
            layers.append((w, b))
            next_in += out_channel
        w1 = nrm(nk(), (next_in, in_channel))             # 1x1 back-projection
        b1 = nrm(nk(), (in_channel,))
        params["cells"].append({"layers": layers, "w1": w1, "b1": b1})

    params["w_conv1"] = nrm(nk(), (in_channel * rdbs_layer_num, in_channel))
    params["b_conv1"] = nrm(nk(), (in_channel,))
    params["w_conv2"] = nrm(nk(), (3, 3, in_channel, in_channel))
    params["b_conv2"] = nrm(nk(), (in_channel,))
    return params


# ----------------------------------------------------------------------------
# Pure-JAX reference (lax.conv) for a correctness sanity check
# ----------------------------------------------------------------------------
def _ref_conv(x_nhwc, w_hwio, b, pad):
    y = jax.lax.conv_general_dilated(
        x_nhwc, w_hwio, window_strides=(1, 1), padding=pad,
        dimension_numbers=("NHWC", "HWIO", "NHWC"))
    return y + b.reshape(1, 1, 1, -1)


def rdbs_forward_ref(params, x_nchw):
    x = jnp.transpose(x_nchw, (0, 2, 3, 1))
    outs = []
    for cell in params["cells"]:
        residual = x
        h = x
        for (w, b) in cell["layers"]:
            y = jnp.maximum(_ref_conv(h, w, b, "SAME"), 0.0)
            h = jnp.concatenate([h, y], axis=-1)
        w1 = cell["w1"].reshape(1, 1, *cell["w1"].shape)
        x = _ref_conv(h, w1, cell["b1"], "VALID") + residual
        outs.append(x)
    cat = jnp.concatenate(outs, axis=-1)
    wc1 = params["w_conv1"].reshape(1, 1, *params["w_conv1"].shape)
    y = _ref_conv(cat, wc1, params["b_conv1"], "VALID")
    y = _ref_conv(y, params["w_conv2"], params["b_conv2"], "SAME")
    return jnp.transpose(y, (0, 3, 1, 2))


# ----------------------------------------------------------------------------
if __name__ == "__main__":
    # RDBs(in_channel=4, out_channel=4, layer_num=3, RDBs_layer_num=2)
    in_channel, out_channel, layer_num, rdbs_layer_num = 4, 4, 3, 2
    N, H, W = 2, 16, 16

    root = jax.random.PRNGKey(0)
    k_in, k_par = jax.random.split(root)
    x = jax.random.normal(k_in, (N, in_channel, H, W), jnp.float32)
    params = init_rdbs_params(k_par, in_channel, out_channel,
                              layer_num, rdbs_layer_num)

    out = jax.block_until_ready(jax.jit(rdbs_forward)(params, x))
    assert out.shape == (N, in_channel, H, W), out.shape

    ref = jax.block_until_ready(rdbs_forward_ref(params, x))
    # Tolerance accommodates TPU default (bf16-pass) matmul precision on either
    # the Pallas MXU path or the XLA conv reference; real indexing/weight bugs
    # would produce O(1) errors and still fail this check.
    assert jnp.allclose(out, ref, atol=2e-2, rtol=2e-2), (
        float(jnp.max(jnp.abs(out - ref))))

    print("KERNEL_OK")
</pallas_src>

<mosaic_0001>
module attributes {stable_mosaic.version = 11 : i64} {
  func.func @_rdbs_fused_kernel(%arg0: i32, %arg1: memref<1x4x256xf32, #tpu.memory_space<vmem>>, %arg2: memref<1x324xf32, #tpu.memory_space<vmem>>, %arg3: memref<4x36xf32, #tpu.memory_space<vmem>>, %arg4: memref<4x1xf32, #tpu.memory_space<vmem>>, %arg5: memref<4x72xf32, #tpu.memory_space<vmem>>, %arg6: memref<4x1xf32, #tpu.memory_space<vmem>>, %arg7: memref<4x108xf32, #tpu.memory_space<vmem>>, %arg8: memref<4x1xf32, #tpu.memory_space<vmem>>, %arg9: memref<4x16xf32, #tpu.memory_space<vmem>>, %arg10: memref<4x1xf32, #tpu.memory_space<vmem>>, %arg11: memref<4x36xf32, #tpu.memory_space<vmem>>, %arg12: memref<4x1xf32, #tpu.memory_space<vmem>>, %arg13: memref<4x72xf32, #tpu.memory_space<vmem>>, %arg14: memref<4x1xf32, #tpu.memory_space<vmem>>, %arg15: memref<4x108xf32, #tpu.memory_space<vmem>>, %arg16: memref<4x1xf32, #tpu.memory_space<vmem>>, %arg17: memref<4x16xf32, #tpu.memory_space<vmem>>, %arg18: memref<4x1xf32, #tpu.memory_space<vmem>>, %arg19: memref<4x8xf32, #tpu.memory_space<vmem>>, %arg20: memref<4x1xf32, #tpu.memory_space<vmem>>, %arg21: memref<4x36xf32, #tpu.memory_space<vmem>>, %arg22: memref<4x1xf32, #tpu.memory_space<vmem>>, %arg23: memref<1x4x256xf32, #tpu.memory_space<vmem>>, %arg24: memref<16x362xf32, #tpu.memory_space<vmem>>, %arg25: memref<144x324xf32, #tpu.memory_space<vmem>>, %arg26: memref<8x324xf32, #tpu.memory_space<vmem>>) attributes {dimension_semantics = [#tpu.dimension_semantics<parallel>], iteration_bounds = array<i64: 2>, scalar_prefetch = 0 : i64, scratch_operands = 3 : i64, tpu.core_type = #tpu.core_type<tc>, window_params = [{transform_indices = @transform_0, window_bounds = array<i64: 1, 4, 256>}, {pipeline_mode = #tpu.pipeline_mode<synchronous>, transform_indices = @transform_1, window_bounds = array<i64: 1, 324>}, {pipeline_mode = #tpu.pipeline_mode<synchronous>, transform_indices = @transform_2, window_bounds = array<i64: 4, 36>}, {pipeline_mode = #tpu.pipeline_mode<synchronous>, transform_indices = @transform_3, window_bounds = array<i64: 4, 1>}, {pipeline_mode = #tpu.pipeline_mode<synchronous>, transform_indices = @transform_4, window_bounds = array<i64: 4, 72>}, {pipeline_mode = #tpu.pipeline_mode<synchronous>, transform_indices = @transform_5, window_bounds = array<i64: 4, 1>}, {pipeline_mode = #tpu.pipeline_mode<synchronous>, transform_indices = @transform_6, window_bounds = array<i64: 4, 108>}, {pipeline_mode = #tpu.pipeline_mode<synchronous>, transform_indices = @transform_7, window_bounds = array<i64: 4, 1>}, {pipeline_mode = #tpu.pipeline_mode<synchronous>, transform_indices = @transform_8, window_bounds = array<i64: 4, 16>}, {pipeline_mode = #tpu.pipeline_mode<synchronous>, transform_indices = @transform_9, window_bounds = array<i64: 4, 1>}, {pipeline_mode = #tpu.pipeline_mode<synchronous>, transform_indices = @transform_10, window_bounds = array<i64: 4, 36>}, {pipeline_mode = #tpu.pipeline_mode<synchronous>, transform_indices = @transform_11, window_bounds = array<i64: 4, 1>}, {pipeline_mode = #tpu.pipeline_mode<synchronous>, transform_indices = @transform_12, window_bounds = array<i64: 4, 72>}, {pipeline_mode = #tpu.pipeline_mode<synchronous>, transform_indices = @transform_13, window_bounds = array<i64: 4, 1>}, {pipeline_mode = #tpu.pipeline_mode<synchronous>, transform_indices = @transform_14, window_bounds = array<i64: 4, 108>}, {pipeline_mode = #tpu.pipeline_mode<synchronous>, transform_indices = @transform_15, window_bounds = array<i64: 4, 1>}, {pipeline_mode = #tpu.pipeline_mode<synchronous>, transform_indices = @transform_16, window_bounds = array<i64: 4, 16>}, {pipeline_mode = #tpu.pipeline_mode<synchronous>, transform_indices = @transform_17, window_bounds = array<i64: 4, 1>}, {pipeline_mode = #tpu.pipeline_mode<synchronous>, transform_indices = @transform_18, window_bounds = array<i64: 4, 8>}, {pipeline_mode = #tpu.pipeline_mode<synchronous>, transform_indices = @transform_19, window_bounds = array<i64: 4, 1>}, {pipeline_mode = #tpu.pipeline_mode<synchronous>, transform_indices = @transform_20, window_bounds = array<i64: 4, 36>}, {pipeline_mode = #tpu.pipeline_mode<synchronous>, transform_indices = @transform_21, window_bounds = array<i64: 4, 1>}, {transform_indices = @transform_22, window_bounds = array<i64: 1, 4, 256>}]} {
    %c0 = arith.constant 0 : index
    %c0_0 = arith.constant 0 : index
    %0 = vector.load %arg2[%c0, %c0_0] : memref<1x324xf32, #tpu.memory_space<vmem>>, vector<1x324xf32>
    %cst = arith.constant 0.000000e+00 : f32
    %1 = vector.broadcast %cst : f32 to vector<16x362xf32>
    %c0_1 = arith.constant 0 : index
    %c0_2 = arith.constant 0 : index
    %2 = vector.load %arg24[%c0_1, %c0_2] : memref<16x362xf32, #tpu.memory_space<vmem>>, vector<16x362xf32>
    tpu.vector_store %arg24[%c0_1, %c0_2], %1 {strides = array<i32>} : memref<16x362xf32, #tpu.memory_space<vmem>>, vector<16x362xf32>,
    %c0_3 = arith.constant 0 : index
    %c0_4 = arith.constant 0 : index
    %c0_5 = arith.constant 0 : index
    %3 = vector.load %arg1[%c0_3, %c0_4, %c0_5] : memref<1x4x256xf32, #tpu.memory_space<vmem>>, vector<1x4x16xf32>
    %4 = vector.shape_cast %3 : vector<1x4x16xf32> to vector<4x16xf32>
    %c0_6 = arith.constant 0 : index
    %c38 = arith.constant 38 : index
    %5 = vector.load %arg24[%c0_6, %c38] : memref<16x362xf32, #tpu.memory_space<vmem>>, vector<4x16xf32>
    tpu.vector_store %arg24[%c0_6, %c38], %4 {strides = array<i32>} : memref<16x362xf32, #tpu.memory_space<vmem>>, vector<4x16xf32>,
    %c0_7 = arith.constant 0 : index
    %c0_8 = arith.constant 0 : index
    %c16 = arith.constant 16 : index
    %6 = vector.load %arg1[%c0_7, %c0_8, %c16] : memref<1x4x256xf32, #tpu.memory_space<vmem>>, vector<1x4x16xf32>
    %7 = vector.shape_cast %6 : vector<1x4x16xf32> to vector<4x16xf32>
    %c0_9 = arith.constant 0 : index
    %c56 = arith.constant 56 : index
    %8 = vector.load %arg24[%c0_9, %c56] : memref<16x362xf32, #tpu.memory_space<vmem>>, vector<4x16xf32>
    tpu.vector_store %arg24[%c0_9, %c56], %7 {strides = array<i32>} : memref<16x362xf32, #tpu.memory_space<vmem>>, vector<4x16xf32>,
    %c0_10 = arith.constant 0 : index
    %c0_11 = arith.constant 0 : index
    %c32 = arith.constant 32 : index
    %9 = vector.load %arg1[%c0_10, %c0_11, %c32] : memref<1x4x256xf32, #tpu.memory_space<vmem>>, vector<1x4x16xf32>
    %10 = vector.shape_cast %9 : vector<1x4x16xf32> to vector<4x16xf32>
    %c0_12 = arith.constant 0 : index
    %c74 = arith.constant 74 : index
    %11 = vector.load %arg24[%c0_12, %c74] : memref<16x362xf32, #tpu.memory_space<vmem>>, vector<4x16xf32>
    tpu.vector_store %arg24[%c0_12, %c74], %10 {strides = array<i32>} : memref<16x362xf32, #tpu.memory_space<vmem>>, vector<4x16xf32>,
    %c0_13 = arith.constant 0 : index
    %c0_14 = arith.constant 0 : index
    %c48 = arith.constant 48 : index
    %12 = vector.load %arg1[%c0_13, %c0_14, %c48] : memref<1x4x256xf32, #tpu.memory_space<vmem>>, vector<1x4x16xf32>
    %13 = vector.shape_cast %12 : vector<1x4x16xf32> to vector<4x16xf32>
    %c0_15 = arith.constant 0 : index
    %c92 = arith.constant 92 : index
    %14 = vector.load %arg24[%c0_15, %c92] : memref<16x362xf32, #tpu.memory_space<vmem>>, vector<4x16xf32>
    tpu.vector_store %arg24[%c0_15, %c92], %13 {strides = array<i32>} : memref<16x362xf32, #tpu.memory_space<vmem>>, vector<4x16xf32>,
    %c0_16 = arith.constant 0 : index
    %c0_17 = arith.constant 0 : index
    %c64 = arith.constant 64 : index
    %15 = vector.load %arg1[%c0_16, %c0_17, %c64] : memref<1x4x256xf32, #tpu.memory_space<vmem>>, vector<1x4x16xf32>
    %16 = vector.shape_cast %15 : vector<1x4x16xf32> to vector<4x16xf32>
    %c0_18 = arith.constant 0 : index
    %c110 = arith.constant 110 : index
    %17 = vector.load %arg24[%c0_18, %c110] : memref<16x362xf32, #tpu.memory_space<vmem>>, vector<4x16xf32>
    tpu.vector_store %arg24[%c0_18, %c110], %16 {strides = array<i32>} : memref<16x362xf32, #tpu.memory_space<vmem>>, vector<4x16xf32>,
    %c0_19 = arith.constant 0 : index
    %c0_20 = arith.constant 0 : index
    %c80 = arith.constant 80 : index
    %18 = vector.load %arg1[%c0_19, %c0_20, %c80] : memref<1x4x256xf32, #tpu.memory_space<vmem>>, vector<1x4x16xf32>
    %19 = vector.shape_cast %18 : vector<1x4x16xf32> to vector<4x16xf32>
    %c0_21 = arith.constant 0 : index
    %c128 = arith.constant 128 : index
    %20 = vector.load %arg24[%c0_21, %c128] : memref<16x362xf32, #tpu.memory_space<vmem>>, vector<4x16xf32>
    tpu.vector_store %arg24[%c0_21, %c128], %19 {strides = array<i32>} : memref<16x362xf32, #tpu.memory_space<vmem>>, vector<4x16xf32>,
    %c0_22 = arith.constant 0 : index
    %c0_23 = arith.constant 0 : index
    %c96 = arith.constant 96 : index
    %21 = vector.load %arg1[%c0_22, %c0_23, %c96] : memref<1x4x256xf32, #tpu.memory_space<vmem>>, vector<1x4x16xf32>
    %22 = vector.shape_cast %21 : vector<1x4x16xf32> to vector<4x16xf32>
    %c0_24 = arith.constant 0 : index
    %c146 = arith.constant 146 : index
    %23 = vector.load %arg24[%c0_24, %c146] : memref<16x362xf32, #tpu.memory_space<vmem>>, vector<4x16xf32>
    tpu.vector_store %arg24[%c0_24, %c146], %22 {strides = array<i32>} : memref<16x362xf32, #tpu.memory_space<vmem>>, vector<4x16xf32>,
    %c0_25 = arith.constant 0 : index
    %c0_26 = arith.constant 0 : index
    %c112 = arith.constant 112 : index
    %24 = vector.load %arg1[%c0_25, %c0_26, %c112] : memref<1x4x256xf32, #tpu.memory_space<vmem>>, vector<1x4x16xf32>
    %25 = vector.shape_cast %24 : vector<1x4x16xf32> to vector<4x16xf32>
    %c0_27 = arith.constant 0 : index
    %c164 = arith.constant 164 : index
    %26 = vector.load %arg24[%c0_27, %c164] : memref<16x362xf32, #tpu.memory_space<vmem>>, vector<4x16xf32>
    tpu.vector_store %arg24[%c0_27, %c164], %25 {strides = array<i32>} : memref<16x362xf32, #tpu.memory_space<vmem>>, vector<4x16xf32>,
    %c0_28 = arith.constant 0 : index
    %c0_29 = arith.constant 0 : index
    %c128_30 = arith.constant 128 : index
    %27 = vector.load %arg1[%c0_28, %c0_29, %c128_30] : memref<1x4x256xf32, #tpu.memory_space<vmem>>, vector<1x4x16xf32>
    %28 = vector.shape_cast %27 : vector<1x4x16xf32> to vector<4x16xf32>
    %c0_31 = arith.constant 0 : index
    %c182 = arith.constant 182 : index
    %29 = vector.load %arg24[%c0_31, %c182] : memref<16x362xf32, #tpu.memory_space<vmem>>, vector<4x16xf32>
    tpu.vector_store %arg24[%c0_31, %c182], %28 {strides = array<i32>} : memref<16x362xf32, #tpu.memory_space<vmem>>, vector<4x16xf32>,
    %c0_32 = arith.constant 0 : index
    %c0_33 = arith.constant 0 : index
    %c144 = arith.constant 144 : index
    %30 = vector.load %arg1[%c0_32, %c0_33, %c144] : memref<1x4x256xf32, #tpu.memory_space<vmem>>, vector<1x4x16xf32>
    %31 = vector.shape_cast %30 : vector<1x4x16xf32> to vector<4x16xf32>
    %c0_34 = arith.constant 0 : index
    %c200 = arith.constant 200 : index
    %32 = vector.load %arg24[%c0_34, %c200] : memref<16x362xf32, #tpu.memory_space<vmem>>, vector<4x16xf32>
    tpu.vector_store %arg24[%c0_34, %c200], %31 {strides = array<i32>} : memref<16x362xf32, #tpu.memory_space<vmem>>, vector<4x16xf32>,
    %c0_35 = arith.constant 0 : index
    %c0_36 = arith.constant 0 : index
    %c160 = arith.constant 160 : index
    %33 = vector.load %arg1[%c0_35, %c0_36, %c160] : memref<1x4x256xf32, #tpu.memory_space<vmem>>, vector<1x4x16xf32>
    %34 = vector.shape_cast %33 : vector<1x4x16xf32> to vector<4x16xf32>
    %c0_37 = arith.constant 0 : index
    %c218 = arith.constant 218 : index
    %35 = vector.load %arg24[%c0_37, %c218] : memref<16x362xf32, #tpu.memory_space<vmem>>, vector<4x16xf32>
    tpu.vector_store %arg24[%c0_37, %c218], %34 {strides = array<i32>} : memref<16x362xf32, #tpu.memory_space<vmem>>, vector<4x16xf32>,
    %c0_38 = arith.constant 0 : index
    %c0_39 = arith.constant 0 : index
    %c176 = arith.constant 176 : index
    %36 = vector.load %arg1[%c0_38, %c0_39, %c176] : memref<1x4x256xf32, #tpu.memory_space<vmem>>, vector<1x4x16xf32>
    %37 = vector.shape_cast %36 : vector<1x4x16xf32> to vector<4x16xf32>
    %c0_40 = arith.constant 0 : index
    %c236 = arith.constant 236 : index
    %38 = vector.load %arg24[%c0_40, %c236] : memref<16x362xf32, #tpu.memory_space<vmem>>, vector<4x16xf32>
    tpu.vector_store %arg24[%c0_40, %c236], %37 {strides = array<i32>} : memref<16x362xf32, #tpu.memory_space<vmem>>, vector<4x16xf32>,
    %c0_41 = arith.constant 0 : index
    %c0_42 = arith.constant 0 : index
    %c192 = arith.constant 192 : index
    %39 = vector.load %arg1[%c0_41, %c0_42, %c192] : memref<1x4x256xf32, #tpu.memory_space<vmem>>, vector<1x4x16xf32>
    %40 = vector.shape_cast %39 : vector<1x4x16xf32> to vector<4x16xf32>
    %c0_43 = arith.constant 0 : index
    %c254 = arith.constant 254 : index
    %41 = vector.load %arg24[%c0_43, %c254] : memref<16x362xf32, #tpu.memory_space<vmem>>, vector<4x16xf32>
    tpu.vector_store %arg24[%c0_43, %c254], %40 {strides = array<i32>} : memref<16x362xf32, #tpu.memory_space<vmem>>, vector<4x16xf32>,
    %c0_44 = arith.constant 0 : index
    %c0_45 = arith.constant 0 : index
    %c208 = arith.constant 208 : index
    %42 = vector.load %arg1[%c0_44, %c0_45, %c208] : memref<1x4x256xf32, #tpu.memory_space<vmem>>, vector<1x4x16xf32>
    %43 = vector.shape_cast %42 : vector<1x4x16xf32> to vector<4x16xf32>
    %c0_46 = arith.constant 0 : index
    %c272 = arith.constant 272 : index
    %44 = vector.load %arg24[%c0_46, %c272] : memref<16x362xf32, #tpu.memory_space<vmem>>, vector<4x16xf32>
    tpu.vector_store %arg24[%c0_46, %c272], %43 {strides = array<i32>} : memref<16x362xf32, #tpu.memory_space<vmem>>, vector<4x16xf32>,
    %c0_47 = arith.constant 0 : index
    %c0_48 = arith.constant 0 : index
    %c224 = arith.constant 224 : index
    %45 = vector.load %arg1[%c0_47, %c0_48, %c224] : memref<1x4x256xf32, #tpu.memory_space<vmem>>, vector<1x4x16xf32>
    %46 = vector.shape_cast %45 : vector<1x4x16xf32> to vector<4x16xf32>
    %c0_49 = arith.constant 0 : index
    %c290 = arith.constant 290 : index
    %47 = vector.load %arg24[%c0_49, %c290] : memref<16x362xf32, #tpu.memory_space<vmem>>, vector<4x16xf32>
    tpu.vector_store %arg24[%c0_49, %c290], %46 {strides = array<i32>} : memref<16x362xf32, #tpu.memory_space<vmem>>, vector<4x16xf32>,
    %c0_50 = arith.constant 0 : index
    %c0_51 = arith.constant 0 : index
    %c240 = arith.constant 240 : index
    %48 = vector.load %arg1[%c0_50, %c0_51, %c240] : memref<1x4x256xf32, #tpu.memory_space<vmem>>, vector<1x4x16xf32>
    %49 = vector.shape_cast %48 : vector<1x4x16xf32> to vector<4x16xf32>
    %c0_52 = arith.constant 0 : index
    %c308 = arith.constant 308 : index
    %50 = vector.load %arg24[%c0_52, %c308] : memref<16x362xf32, #tpu.memory_space<vmem>>, vector<4x16xf32>
    tpu.vector_store %arg24[%c0_52, %c308], %49 {strides = array<i32>} : memref<16x362xf32, #tpu.memory_space<vmem>>, vector<4x16xf32>,
    %c0_53 = arith.constant 0 : index
    %c19 = arith.constant 19 : index
    %51 = vector.load %arg24[%c0_53, %c19] : memref<16x362xf32, #tpu.memory_space<vmem>>, vector<4x324xf32>
    %c0_54 = arith.constant 0 : index
    %c0_55 = arith.constant 0 : index
    %52 = vector.load %arg24[%c0_54, %c0_55] : memref<16x362xf32, #tpu.memory_space<vmem>>, vector<4x324xf32>
    %c0_56 = arith.constant 0 : index
    %c0_57 = arith.constant 0 : index
    %53 = vector.load %arg25[%c0_56, %c0_57] : memref<144x324xf32, #tpu.memory_space<vmem>>, vector<4x324xf32>
    tpu.vector_store %arg25[%c0_56, %c0_57], %52 {strides = array<i32>} : memref<144x324xf32, #tpu.memory_space<vmem>>, vector<4x324xf32>,
    %c0_58 = arith.constant 0 : index
    %c1 = arith.constant 1 : index
    %54 = vector.load %arg24[%c0_58, %c1] : memref<16x362xf32, #tpu.memory_space<vmem>>, vector<4x324xf32>
    %c4 = arith.constant 4 : index
    %c0_59 = arith.constant 0 : index
    %55 = vector.load %arg25[%c4, %c0_59] : memref<144x324xf32, #tpu.memory_space<vmem>>, vector<4x324xf32>
    tpu.vector_store %arg25[%c4, %c0_59], %54 {strides = array<i32>} : memref<144x324xf32, #tpu.memory_space<vmem>>, vector<4x324xf32>,
    %c0_60 = arith.constant 0 : index
    %c2 = arith.constant 2 : index
    %56 = vector.load %arg24[%c0_60, %c2] : memref<16x362xf32, #tpu.memory_space<vmem>>, vector<4x324xf32>
    %c8 = arith.constant 8 : index
    %c0_61 = arith.constant 0 : index
    %57 = vector.load %arg25[%c8, %c0_61] : memref<144x324xf32, #tpu.memory_space<vmem>>, vector<4x324xf32>
    tpu.vector_store %arg25[%c8, %c0_61], %56 {strides = array<i32>} : memref<144x324xf32, #tpu.memory_space<vmem>>, vector<4x324xf32>,
    %c0_62 = arith.constant 0 : index
    %c18 = arith.constant 18 : index
    %58 = vector.load %arg24[%c0_62, %c18] : memref<16x362xf32, #tpu.memory_space<vmem>>, vector<4x324xf32>
    %c12 = arith.constant 12 : index
    %c0_63 = arith.constant 0 : index
    %59 = vector.load %arg25[%c12, %c0_63] : memref<144x324xf32, #tpu.memory_space<vmem>>, vector<4x324xf32>
    tpu.vector_store %arg25[%c12, %c0_63], %58 {strides = array<i32>} : memref<144x324xf32, #tpu.memory_space<vmem>>, vector<4x324xf32>,
    %c0_64 = arith.constant 0 : index
    %c19_65 = arith.constant 19 : index
    %60 = vector.load %arg24[%c0_64, %c19_65] : memref<16x362xf32, #tpu.memory_space<vmem>>, vector<4x324xf32>
    %c16_66 = arith.constant 16 : index
    %c0_67 = arith.constant 0 : index
    %61 = vector.load %arg25[%c16_66, %c0_67] : memref<144x324xf32, #tpu.memory_space<vmem>>, vector<4x324xf32>
    tpu.vector_store %arg25[%c16_66, %c0_67], %60 {strides = array<i32>} : memref<144x324xf32, #tpu.memory_space<vmem>>, vector<4x324xf32>,
    %c0_68 = arith.constant 0 : index
    %c20 = arith.constant 20 : index
    %62 = vector.load %arg24[%c0_68, %c20] : memref<16x362xf32, #tpu.memory_space<vmem>>, vector<4x324xf32>
    %c20_69 = arith.constant 20 : index
    %c0_70 = arith.constant 0 : index
    %63 = vector.load %arg25[%c20_69, %c0_70] : memref<144x324xf32, #tpu.memory_space<vmem>>, vector<4x324xf32>
    tpu.vector_store %arg25[%c20_69, %c0_70], %62 {strides = array<i32>} : memref<144x324xf32, #tpu.memory_space<vmem>>, vector<4x324xf32>,
    %c0_71 = arith.constant 0 : index
    %c36 = arith.constant 36 : index
    %64 = vector.load %arg24[%c0_71, %c36] : memref<16x362xf32, #tpu.memory_space<vmem>>, vector<4x324xf32>
    %c24 = arith.constant 24 : index
    %c0_72 = arith.constant 0 : index
    %65 = vector.load %arg25[%c24, %c0_72] : memref<144x324xf32, #tpu.memory_space<vmem>>, vector<4x324xf32>
    tpu.vector_store %arg25[%c24, %c0_72], %64 {strides = array<i32>} : memref<144x324xf32, #tpu.memory_space<vmem>>, vector<4x324xf32>,
    %c0_73 = arith.constant 0 : index
    %c37 = arith.constant 37 : index
    %66 = vector.load %arg24[%c0_73, %c37] : memref<16x362xf32, #tpu.memory_space<vmem>>, vector<4x324xf32>
    %c28 = arith.constant 28 : index
    %c0_74 = arith.constant 0 : index
    %67 = vector.load %arg25[%c28, %c0_74] : memref<144x324xf32, #tpu.memory_space<vmem>>, vector<4x324xf32>
    tpu.vector_store %arg25[%c28, %c0_74], %66 {strides = array<i32>} : memref<144x324xf32, #tpu.memory_space<vmem>>, vector<4x324xf32>,
    %c0_75 = arith.constant 0 : index
    %c38_76 = arith.constant 38 : index
    %68 = vector.load %arg24[%c0_75, %c38_76] : memref<16x362xf32, #tpu.memory_space<vmem>>, vector<4x324xf32>
    %c32_77 = arith.constant 32 : index
    %c0_78 = arith.constant 0 : index
    %69 = vector.load %arg25[%c32_77, %c0_78] : memref<144x324xf32, #tpu.memory_space<vmem>>, vector<4x324xf32>
    tpu.vector_store %arg25[%c32_77, %c0_78], %68 {strides = array<i32>} : memref<144x324xf32, #tpu.memory_space<vmem>>, vector<4x324xf32>,
    %c0_79 = arith.constant 0 : index
    %c0_80 = arith.constant 0 : index
    %70 = vector.load %arg3[%c0_79, %c0_80] : memref<4x36xf32, #tpu.memory_space<vmem>>, vector<4x36xf32>
    %c0_81 = arith.constant 0 : index
    %c0_82 = arith.constant 0 : index
    %71 = vector.load %arg25[%c0_81, %c0_82] : memref<144x324xf32, #tpu.memory_space<vmem>>, vector<36x324xf32>
    %cst_83 = arith.constant dense<0.000000e+00> : vector<4x324xf32>
    %72 = tpu.matmul %70, %71, %cst_83 {dimension_numbers = #tpu.dot_dimension_numbers<[1], [0], [0], [1], [0, 0, 1, 1], [], []>} : vector<4x36xf32>, vector<36x324xf32>, vector<4x324xf32> -> vector<4x324xf32>
    %c0_84 = arith.constant 0 : index
    %c0_85 = arith.constant 0 : index
    %73 = vector.load %arg4[%c0_84, %c0_85] : memref<4x1xf32, #tpu.memory_space<vmem>>, vector<4x1xf32>
    %74 = vector.broadcast %73 : vector<4x1xf32> to vector<4x324xf32>
    %75 = arith.addf %72, %74 : vector<4x324xf32>
    %cst_86 = arith.constant 0.000000e+00 : f32
    %76 = vector.broadcast %cst_86 : f32 to vector<4x324xf32>
    %77 = arith.maximumf %75, %76 : vector<4x324xf32>
    %78 = vector.broadcast %0 : vector<1x324xf32> to vector<4x324xf32>
    %79 = arith.mulf %77, %78 : vector<4x324xf32>
    %c4_87 = arith.constant 4 : index
    %c19_88 = arith.constant 19 : index
    %80 = vector.load %arg24[%c4_87, %c19_88] : memref<16x362xf32, #tpu.memory_space<vmem>>, vector<4x324xf32>
    tpu.vector_store %arg24[%c4_87, %c19_88], %79 {strides = array<i32>} : memref<16x362xf32, #tpu.memory_space<vmem>>, vector<4x324xf32>,
    %c0_89 = arith.constant 0 : index
    %c0_90 = arith.constant 0 : index
    %81 = vector.load %arg24[%c0_89, %c0_90] : memref<16x362xf32, #tpu.memory_space<vmem>>, vector<8x324xf32>
    %c0_91 = arith.constant 0 : index
    %c0_92 = arith.constant 0 : index
    %82 = vector.load %arg25[%c0_91, %c0_92] : memref<144x324xf32, #tpu.memory_space<vmem>>, vector<8x324xf32>
    tpu.vector_store %arg25[%c0_91, %c0_92], %81 {strides = array<i32>} : memref<144x324xf32, #tpu.memory_space<vmem>>, vector<8x324xf32>,
    %c0_93 = arith.constant 0 : index
    %c1_94 = arith.constant 1 : index
    %83 = vector.load %arg24[%c0_93, %c1_94] : memref<16x362xf32, #tpu.memory_space<vmem>>, vector<8x324xf32>
    %c8_95 = arith.constant 8 : index
    %c0_96 = arith.constant 0 : index
    %84 = vector.load %arg25[%c8_95, %c0_96] : memref<144x324xf32, #tpu.memory_space<vmem>>, vector<8x324xf32>
    tpu.vector_store %arg25[%c8_95, %c0_96], %83 {strides = array<i32>} : memref<144x324xf32, #tpu.memory_space<vmem>>, vector<8x324xf32>,
    %c0_97 = arith.constant 0 : index
    %c2_98 = arith.constant 2 : index
    %85 = vector.load %arg24[%c0_97, %c2_98] : memref<16x362xf32, #tpu.memory_space<vmem>>, vector<8x324xf32>
    %c16_99 = arith.constant 16 : index
    %c0_100 = arith.constant 0 : index
    %86 = vector.load %arg25[%c16_99, %c0_100] : memref<144x324xf32, #tpu.memory_space<vmem>>, vector<8x324xf32>
    tpu.vector_store %arg25[%c16_99, %c0_100], %85 {strides = array<i32>} : memref<144x324xf32, #tpu.memory_space<vmem>>, vector<8x324xf32>,
    %c0_101 = arith.constant 0 : index
    %c18_102 = arith.constant 18 : index
    %87 = vector.load %arg24[%c0_101, %c18_102] : memref<16x362xf32, #tpu.memory_space<vmem>>, vector<8x324xf32>
    %c24_103 = arith.constant 24 : index
    %c0_104 = arith.constant 0 : index
    %88 = vector.load %arg25[%c24_103, %c0_104] : memref<144x324xf32, #tpu.memory_space<vmem>>, vector<8x324xf32>
    tpu.vector_store %arg25[%c24_103, %c0_104], %87 {strides = array<i32>} : memref<144x324xf32, #tpu.memory_space<vmem>>, vector<8x324xf32>,
    %c0_105 = arith.constant 0 : index
    %c19_106 = arith.constant 19 : index
    %89 = vector.load %arg24[%c0_105, %c19_106] : memref<16x362xf32, #tpu.memory_space<vmem>>, vector<8x324xf32>
    %c32_107 = arith.constant 32 : index
    %c0_108 = arith.constant 0 : index
    %90 = vector.load %arg25[%c32_107, %c0_108] : memref<144x324xf32, #tpu.memory_space<vmem>>, vector<8x324xf32>
    tpu.vector_store %arg25[%c32_107, %c0_108], %89 {strides = array<i32>} : memref<144x324xf32, #tpu.memory_space<vmem>>, vector<8x324xf32>,
    %c0_109 = arith.constant 0 : index
    %c20_110 = arith.constant 20 : index
    %91 = vector.load %arg24[%c0_109, %c20_110] : memref<16x362xf32, #tpu.memory_space<vmem>>, vector<8x324xf32>
    %c40 = arith.constant 40 : index
    %c0_111 = arith.constant 0 : index
    %92 = vector.load %arg25[%c40, %c0_111] : memref<144x324xf32, #tpu.memory_space<vmem>>, vector<8x324xf32>
    tpu.vector_store %arg25[%c40, %c0_111], %91 {strides = array<i32>} : memref<144x324xf32, #tpu.memory_space<vmem>>, vector<8x324xf32>,
    %c0_112 = arith.constant 0 : index
    %c36_113 = arith.constant 36 : index
    %93 = vector.load %arg24[%c0_112, %c36_113] : memref<16x362xf32, #tpu.memory_space<vmem>>, vector<8x324xf32>
    %c48_114 = arith.constant 48 : index
    %c0_115 = arith.constant 0 : index
    %94 = vector.load %arg25[%c48_114, %c0_115] : memref<144x324xf32, #tpu.memory_space<vmem>>, vector<8x324xf32>
    tpu.vector_store %arg25[%c48_114, %c0_115], %93 {strides = array<i32>} : memref<144x324xf32, #tpu.memory_space<vmem>>, vector<8x324xf32>,
    %c0_116 = arith.constant 0 : index
    %c37_117 = arith.constant 37 : index
    %95 = vector.load %arg24[%c0_116, %c37_117] : memref<16x362xf32, #tpu.memory_space<vmem>>, vector<8x324xf32>
    %c56_118 = arith.constant 56 : index
    %c0_119 = arith.constant 0 : index
    %96 = vector.load %arg25[%c56_118, %c0_119] : memref<144x324xf32, #tpu.memory_space<vmem>>, vector<8x324xf32>
    tpu.vector_store %arg25[%c56_118, %c0_119], %95 {strides = array<i32>} : memref<144x324xf32, #tpu.memory_space<vmem>>, vector<8x324xf32>,
    %c0_120 = arith.constant 0 : index
    %c38_121 = arith.constant 38 : index
    %97 = vector.load %arg24[%c0_120, %c38_121] : memref<16x362xf32, #tpu.memory_space<vmem>>, vector<8x324xf32>
    %c64_122 = arith.constant 64 : index
    %c0_123 = arith.constant 0 : index
    %98 = vector.load %arg25[%c64_122, %c0_123] : memref<144x324xf32, #tpu.memory_space<vmem>>, vector<8x324xf32>
    tpu.vector_store %arg25[%c64_122, %c0_123], %97 {strides = array<i32>} : memref<144x324xf32, #tpu.memory_space<vmem>>, vector<8x324xf32>,
    %c0_124 = arith.constant 0 : index
    %c0_125 = arith.constant 0 : index
    %99 = vector.load %arg5[%c0_124, %c0_125] : memref<4x72xf32, #tpu.memory_space<vmem>>, vector<4x72xf32>
    %c0_126 = arith.constant 0 : index
    %c0_127 = arith.constant 0 : index
    %100 = vector.load %arg25[%c0_126, %c0_127] : memref<144x324xf32, #tpu.memory_space<vmem>>, vector<72x324xf32>
    %cst_128 = arith.constant dense<0.000000e+00> : vector<4x324xf32>
    %101 = tpu.matmul %99, %100, %cst_128 {dimension_numbers = #tpu.dot_dimension_numbers<[1], [0], [0], [1], [0, 0, 1, 1], [], []>} : vector<4x72xf32>, vector<72x324xf32>, vector<4x324xf32> -> vector<4x324xf32>
    %c0_129 = arith.constant 0 : index
    %c0_130 = arith.constant 0 : index
    %102 = vector.load %arg6[%c0_129, %c0_130] : memref<4x1xf32, #tpu.memory_space<vmem>>, vector<4x1xf32>
    %103 = vector.broadcast %102 : vector<4x1xf32> to vector<4x324xf32>
    %104 = arith.addf %101, %103 : vector<4x324xf32>
    %cst_131 = arith.constant 0.000000e+00 : f32
    %105 = vector.broadcast %cst_131 : f32 to vector<4x324xf32>
    %106 = arith.maximumf %104, %105 : vector<4x324xf32>
    %107 = vector.broadcast %0 : vector<1x324xf32> to vector<4x324xf32>
    %108 = arith.mulf %106, %107 : vector<4x324xf32>
    %c8_132 = arith.constant 8 : index
    %c19_133 = arith.constant 19 : index
    %109 = vector.load %arg24[%c8_132, %c19_133] : memref<16x362xf32, #tpu.memory_space<vmem>>, vector<4x324xf32>
    tpu.vector_store %arg24[%c8_132, %c19_133], %108 {strides = array<i32>} : memref<16x362xf32, #tpu.memory_space<vmem>>, vector<4x324xf32>,
    %c0_134 = arith.constant 0 : index
    %c0_135 = arith.constant 0 : index
    %110 = vector.load %arg24[%c0_134, %c0_135] : memref<16x362xf32, #tpu.memory_space<vmem>>, vector<12x324xf32>
    %c0_136 = arith.constant 0 : index
    %c0_137 = arith.constant 0 : index
    %111 = vector.load %arg25[%c0_136, %c0_137] : memref<144x324xf32, #tpu.memory_space<vmem>>, vector<12x324xf32>
    tpu.vector_store %arg25[%c0_136, %c0_137], %110 {strides = array<i32>} : memref<144x324xf32, #tpu.memory_space<vmem>>, vector<12x324xf32>,
    %c0_138 = arith.constant 0 : index
    %c1_139 = arith.constant 1 : index
    %112 = vector.load %arg24[%c0_138, %c1_139] : memref<16x362xf32, #tpu.memory_space<vmem>>, vector<12x324xf32>
    %c12_140 = arith.constant 12 : index
    %c0_141 = arith.constant 0 : index
    %113 = vector.load %arg25[%c12_140, %c0_141] : memref<144x324xf32, #tpu.memory_space<vmem>>, vector<12x324xf32>
    tpu.vector_store %arg25[%c12_140, %c0_141], %112 {strides = array<i32>} : memref<144x324xf32, #tpu.memory_space<vmem>>, vector<12x324xf32>,
    %c0_142 = arith.constant 0 : index
    %c2_143 = arith.constant 2 : index
    %114 = vector.load %arg24[%c0_142, %c2_143] : memref<16x362xf32, #tpu.memory_space<vmem>>, vector<12x324xf32>
    %c24_144 = arith.constant 24 : index
    %c0_145 = arith.constant 0 : index
    %115 = vector.load %arg25[%c24_144, %c0_145] : memref<144x324xf32, #tpu.memory_space<vmem>>, vector<12x324xf32>
    tpu.vector_store %arg25[%c24_144, %c0_145], %114 {strides = array<i32>} : memref<144x324xf32, #tpu.memory_space<vmem>>, vector<12x324xf32>,
    %c0_146 = arith.constant 0 : index
    %c18_147 = arith.constant 18 : index
    %116 = vector.load %arg24[%c0_146, %c18_147] : memref<16x362xf32, #tpu.memory_space<vmem>>, vector<12x324xf32>
    %c36_148 = arith.constant 36 : index
    %c0_149 = arith.constant 0 : index
    %117 = vector.load %arg25[%c36_148, %c0_149] : memref<144x324xf32, #tpu.memory_space<vmem>>, vector<12x324xf32>
    tpu.vector_store %arg25[%c36_148, %c0_149], %116 {strides = array<i32>} : memref<144x324xf32, #tpu.memory_space<vmem>>, vector<12x324xf32>,
    %c0_150 = arith.constant 0 : index
    %c19_151 = arith.constant 19 : index
    %118 = vector.load %arg24[%c0_150, %c19_151] : memref<16x362xf32, #tpu.memory_space<vmem>>, vector<12x324xf32>
    %c48_152 = arith.constant 48 : index
    %c0_153 = arith.constant 0 : index
    %119 = vector.load %arg25[%c48_152, %c0_153] : memref<144x324xf32, #tpu.memory_space<vmem>>, vector<12x324xf32>
    tpu.vector_store %arg25[%c48_152, %c0_153], %118 {strides = array<i32>} : memref<144x324xf32, #tpu.memory_space<vmem>>, vector<12x324xf32>,
    %c0_154 = arith.constant 0 : index
    %c20_155 = arith.constant 20 : index
    %120 = vector.load %arg24[%c0_154, %c20_155] : memref<16x362xf32, #tpu.memory_space<vmem>>, vector<12x324xf32>
    %c60 = arith.constant 60 : index
    %c0_156 = arith.constant 0 : index
    %121 = vector.load %arg25[%c60, %c0_156] : memref<144x324xf32, #tpu.memory_space<vmem>>, vector<12x324xf32>
    tpu.vector_store %arg25[%c60, %c0_156], %120 {strides = array<i32>} : memref<144x324xf32, #tpu.memory_space<vmem>>, vector<12x324xf32>,
    %c0_157 = arith.constant 0 : index
    %c36_158 = arith.constant 36 : index
    %122 = vector.load %arg24[%c0_157, %c36_158] : memref<16x362xf32, #tpu.memory_space<vmem>>, vector<12x324xf32>
    %c72 = arith.constant 72 : index
    %c0_159 = arith.constant 0 : index
    %123 = vector.load %arg25[%c72, %c0_159] : memref<144x324xf32, #tpu.memory_space<vmem>>, vector<12x324xf32>
    tpu.vector_store %arg25[%c72, %c0_159], %122 {strides = array<i32>} : memref<144x324xf32, #tpu.memory_space<vmem>>, vector<12x324xf32>,
    %c0_160 = arith.constant 0 : index
    %c37_161 = arith.constant 37 : index
    %124 = vector.load %arg24[%c0_160, %c37_161] : memref<16x362xf32, #tpu.memory_space<vmem>>, vector<12x324xf32>
    %c84 = arith.constant 84 : index
    %c0_162 = arith.constant 0 : index
    %125 = vector.load %arg25[%c84, %c0_162] : memref<144x324xf32, #tpu.memory_space<vmem>>, vector<12x324xf32>
    tpu.vector_store %arg25[%c84, %c0_162], %124 {strides = array<i32>} : memref<144x324xf32, #tpu.memory_space<vmem>>, vector<12x324xf32>,
    %c0_163 = arith.constant 0 : index
    %c38_164 = arith.constant 38 : index
    %126 = vector.load %arg24[%c0_163, %c38_164] : memref<16x362xf32, #tpu.memory_space<vmem>>, vector<12x324xf32>
    %c96_165 = arith.constant 96 : index
    %c0_166 = arith.constant 0 : index
    %127 = vector.load %arg25[%c96_165, %c0_166] : memref<144x324xf32, #tpu.memory_space<vmem>>, vector<12x324xf32>
    tpu.vector_store %arg25[%c96_165, %c0_166], %126 {strides = array<i32>} : memref<144x324xf32, #tpu.memory_space<vmem>>, vector<12x324xf32>,
    %c0_167 = arith.constant 0 : index
    %c0_168 = arith.constant 0 : index
    %128 = vector.load %arg7[%c0_167, %c0_168] : memref<4x108xf32, #tpu.memory_space<vmem>>, vector<4x108xf32>
    %c0_169 = arith.constant 0 : index
    %c0_170 = arith.constant 0 : index
    %129 = vector.load %arg25[%c0_169, %c0_170] : memref<144x324xf32, #tpu.memory_space<vmem>>, vector<108x324xf32>
    %cst_171 = arith.constant dense<0.000000e+00> : vector<4x324xf32>
    %130 = tpu.matmul %128, %129, %cst_171 {dimension_numbers = #tpu.dot_dimension_numbers<[1], [0], [0], [1], [0, 0, 1, 1], [], []>} : vector<4x108xf32>, vector<108x324xf32>, vector<4x324xf32> -> vector<4x324xf32>
    %c0_172 = arith.constant 0 : index
    %c0_173 = arith.constant 0 : index
    %131 = vector.load %arg8[%c0_172, %c0_173] : memref<4x1xf32, #tpu.memory_space<vmem>>, vector<4x1xf32>
    %132 = vector.broadcast %131 : vector<4x1xf32> to vector<4x324xf32>
    %133 = arith.addf %130, %132 : vector<4x324xf32>
    %cst_174 = arith.constant 0.000000e+00 : f32
    %134 = vector.broadcast %cst_174 : f32 to vector<4x324xf32>
    %135 = arith.maximumf %133, %134 : vector<4x324xf32>
    %136 = vector.broadcast %0 : vector<1x324xf32> to vector<4x324xf32>
    %137 = arith.mulf %135, %136 : vector<4x324xf32>
    %c12_175 = arith.constant 12 : index
    %c19_176 = arith.constant 19 : index
    %138 = vector.load %arg24[%c12_175, %c19_176] : memref<16x362xf32, #tpu.memory_space<vmem>>, vector<4x324xf32>
    tpu.vector_store %arg24[%c12_175, %c19_176], %137 {strides = array<i32>} : memref<16x362xf32, #tpu.memory_space<vmem>>, vector<4x324xf32>,
    %c0_177 = arith.constant 0 : index
    %c19_178 = arith.constant 19 : index
    %139 = vector.load %arg24[%c0_177, %c19_178] : memref<16x362xf32, #tpu.memory_space<vmem>>, vector<16x324xf32>
    %c0_179 = arith.constant 0 : index
    %c0_180 = arith.constant 0 : index
    %140 = vector.load %arg9[%c0_179, %c0_180] : memref<4x16xf32, #tpu.memory_space<vmem>>, vector<4x16xf32>
    %cst_181 = arith.constant dense<0.000000e+00> : vector<4x324xf32>
    %141 = tpu.matmul %140, %139, %cst_181 {dimension_numbers = #tpu.dot_dimension_numbers<[1], [0], [0], [1], [0, 0, 1, 1], [], []>} : vector<4x16xf32>, vector<16x324xf32>, vector<4x324xf32> -> vector<4x324xf32>
    %c0_182 = arith.constant 0 : index
    %c0_183 = arith.constant 0 : index
    %142 = vector.load %arg10[%c0_182, %c0_183] : memref<4x1xf32, #tpu.memory_space<vmem>>, vector<4x1xf32>
    %143 = vector.broadcast %142 : vector<4x1xf32> to vector<4x324xf32>
    %144 = arith.addf %141, %143 : vector<4x324xf32>
    %145 = vector.broadcast %0 : vector<1x324xf32> to vector<4x324xf32>
    %146 = arith.mulf %144, %145 : vector<4x324xf32>
    %147 = arith.addf %146, %51 : vector<4x324xf32>
    %c0_184 = arith.constant 0 : index
    %c0_185 = arith.constant 0 : index
    %148 = vector.load %arg26[%c0_184, %c0_185] : memref<8x324xf32, #tpu.memory_space<vmem>>, vector<4x324xf32>
    tpu.vector_store %arg26[%c0_184, %c0_185], %147 {strides = array<i32>} : memref<8x324xf32, #tpu.memory_space<vmem>>, vector<4x324xf32>,
    %c0_186 = arith.constant 0 : index
    %c19_187 = arith.constant 19 : index
    %149 = vector.load %arg24[%c0_186, %c19_187] : memref<16x362xf32, #tpu.memory_space<vmem>>, vector<4x324xf32>
    tpu.vector_store %arg24[%c0_186, %c19_187], %147 {strides = array<i32>} : memref<16x362xf32, #tpu.memory_space<vmem>>, vector<4x324xf32>,
    %c0_188 = arith.constant 0 : index
    %c0_189 = arith.constant 0 : index
    %150 = vector.load %arg24[%c0_188, %c0_189] : memref<16x362xf32, #tpu.memory_space<vmem>>, vector<4x324xf32>
    %c0_190 = arith.constant 0 : index
    %c0_191 = arith.constant 0 : index
    %151 = vector.load %arg25[%c0_190, %c0_191] : memref<144x324xf32, #tpu.memory_space<vmem>>, vector<4x324xf32>
    tpu.vector_store %arg25[%c0_190, %c0_191], %150 {strides = array<i32>} : memref<144x324xf32, #tpu.memory_space<vmem>>, vector<4x324xf32>,
    %c0_192 = arith.constant 0 : index
    %c1_193 = arith.constant 1 : index
    %152 = vector.load %arg24[%c0_192, %c1_193] : memref<16x362xf32, #tpu.memory_space<vmem>>, vector<4x324xf32>
    %c4_194 = arith.constant 4 : index
    %c0_195 = arith.constant 0 : index
    %153 = vector.load %arg25[%c4_194, %c0_195] : memref<144x324xf32, #tpu.memory_space<vmem>>, vector<4x324xf32>
    tpu.vector_store %arg25[%c4_194, %c0_195], %152 {strides = array<i32>} : memref<144x324xf32, #tpu.memory_space<vmem>>, vector<4x324xf32>,
    %c0_196 = arith.constant 0 : index
    %c2_197 = arith.constant 2 : index
    %154 = vector.load %arg24[%c0_196, %c2_197] : memref<16x362xf32, #tpu.memory_space<vmem>>, vector<4x324xf32>
    %c8_198 = arith.constant 8 : index
    %c0_199 = arith.constant 0 : index
    %155 = vector.load %arg25[%c8_198, %c0_199] : memref<144x324xf32, #tpu.memory_space<vmem>>, vector<4x324xf32>
    tpu.vector_store %arg25[%c8_198, %c0_199], %154 {strides = array<i32>} : memref<144x324xf32, #tpu.memory_space<vmem>>, vector<4x324xf32>,
    %c0_200 = arith.constant 0 : index
    %c18_201 = arith.constant 18 : index
    %156 = vector.load %arg24[%c0_200, %c18_201] : memref<16x362xf32, #tpu.memory_space<vmem>>, vector<4x324xf32>
    %c12_202 = arith.constant 12 : index
    %c0_203 = arith.constant 0 : index
    %157 = vector.load %arg25[%c12_202, %c0_203] : memref<144x324xf32, #tpu.memory_space<vmem>>, vector<4x324xf32>
    tpu.vector_store %arg25[%c12_202, %c0_203], %156 {strides = array<i32>} : memref<144x324xf32, #tpu.memory_space<vmem>>, vector<4x324xf32>,
    %c0_204 = arith.constant 0 : index
    %c19_205 = arith.constant 19 : index
    %158 = vector.load %arg24[%c0_204, %c19_205] : memref<16x362xf32, #tpu.memory_space<vmem>>, vector<4x324xf32>
    %c16_206 = arith.constant 16 : index
    %c0_207 = arith.constant 0 : index
    %159 = vector.load %arg25[%c16_206, %c0_207] : memref<144x324xf32, #tpu.memory_space<vmem>>, vector<4x324xf32>
    tpu.vector_store %arg25[%c16_206, %c0_207], %158 {strides = array<i32>} : memref<144x324xf32, #tpu.memory_space<vmem>>, vector<4x324xf32>,
    %c0_208 = arith.constant 0 : index
    %c20_209 = arith.constant 20 : index
    %160 = vector.load %arg24[%c0_208, %c20_209] : memref<16x362xf32, #tpu.memory_space<vmem>>, vector<4x324xf32>
    %c20_210 = arith.constant 20 : index
    %c0_211 = arith.constant 0 : index
    %161 = vector.load %arg25[%c20_210, %c0_211] : memref<144x324xf32, #tpu.memory_space<vmem>>, vector<4x324xf32>
    tpu.vector_store %arg25[%c20_210, %c0_211], %160 {strides = array<i32>} : memref<144x324xf32, #tpu.memory_space<vmem>>, vector<4x324xf32>,
    %c0_212 = arith.constant 0 : index
    %c36_213 = arith.constant 36 : index
    %162 = vector.load %arg24[%c0_212, %c36_213] : memref<16x362xf32, #tpu.memory_space<vmem>>, vector<4x324xf32>
    %c24_214 = arith.constant 24 : index
    %c0_215 = arith.constant 0 : index
    %163 = vector.load %arg25[%c24_214, %c0_215] : memref<144x324xf32, #tpu.memory_space<vmem>>, vector<4x324xf32>
    tpu.vector_store %arg25[%c24_214, %c0_215], %162 {strides = array<i32>} : memref<144x324xf32, #tpu.memory_space<vmem>>, vector<4x324xf32>,
    %c0_216 = arith.constant 0 : index
    %c37_217 = arith.constant 37 : index
    %164 = vector.load %arg24[%c0_216, %c37_217] : memref<16x362xf32, #tpu.memory_space<vmem>>, vector<4x324xf32>
    %c28_218 = arith.constant 28 : index
    %c0_219 = arith.constant 0 : index
    %165 = vector.load %arg25[%c28_218, %c0_219] : memref<144x324xf32, #tpu.memory_space<vmem>>, vector<4x324xf32>
    tpu.vector_store %arg25[%c28_218, %c0_219], %164 {strides = array<i32>} : memref<144x324xf32, #tpu.memory_space<vmem>>, vector<4x324xf32>,
    %c0_220 = arith.constant 0 : index
    %c38_221 = arith.constant 38 : index
    %166 = vector.load %arg24[%c0_220, %c38_221] : memref<16x362xf32, #tpu.memory_space<vmem>>, vector<4x324xf32>
    %c32_222 = arith.constant 32 : index
    %c0_223 = arith.constant 0 : index
    %167 = vector.load %arg25[%c32_222, %c0_223] : memref<144x324xf32, #tpu.memory_space<vmem>>, vector<4x324xf32>
    tpu.vector_store %arg25[%c32_222, %c0_223], %166 {strides = array<i32>} : memref<144x324xf32, #tpu.memory_space<vmem>>, vector<4x324xf32>,
    %c0_224 = arith.constant 0 : index
    %c0_225 = arith.constant 0 : index
    %168 = vector.load %arg11[%c0_224, %c0_225] : memref<4x36xf32, #tpu.memory_space<vmem>>, vector<4x36xf32>
    %c0_226 = arith.constant 0 : index
    %c0_227 = arith.constant 0 : index
    %169 = vector.load %arg25[%c0_226, %c0_227] : memref<144x324xf32, #tpu.memory_space<vmem>>, vector<36x324xf32>
    %cst_228 = arith.constant dense<0.000000e+00> : vector<4x324xf32>
    %170 = tpu.matmul %168, %169, %cst_228 {dimension_numbers = #tpu.dot_dimension_numbers<[1], [0], [0], [1], [0, 0, 1, 1], [], []>} : vector<4x36xf32>, vector<36x324xf32>, vector<4x324xf32> -> vector<4x324xf32>
    %c0_229 = arith.constant 0 : index
    %c0_230 = arith.constant 0 : index
    %171 = vector.load %arg12[%c0_229, %c0_230] : memref<4x1xf32, #tpu.memory_space<vmem>>, vector<4x1xf32>
    %172 = vector.broadcast %171 : vector<4x1xf32> to vector<4x324xf32>
    %173 = arith.addf %170, %172 : vector<4x324xf32>
    %cst_231 = arith.constant 0.000000e+00 : f32
    %174 = vector.broadcast %cst_231 : f32 to vector<4x324xf32>
    %175 = arith.maximumf %173, %174 : vector<4x324xf32>
    %176 = vector.broadcast %0 : vector<1x324xf32> to vector<4x324xf32>
    %177 = arith.mulf %175, %176 : vector<4x324xf32>
    %c4_232 = arith.constant 4 : index
    %c19_233 = arith.constant 19 : index
    %178 = vector.load %arg24[%c4_232, %c19_233] : memref<16x362xf32, #tpu.memory_space<vmem>>, vector<4x324xf32>
    tpu.vector_store %arg24[%c4_232, %c19_233], %177 {strides = array<i32>} : memref<16x362xf32, #tpu.memory_space<vmem>>, vector<4x324xf32>,
    %c0_234 = arith.constant 0 : index
    %c0_235 = arith.constant 0 : index
    %179 = vector.load %arg24[%c0_234, %c0_235] : memref<16x362xf32, #tpu.memory_space<vmem>>, vector<8x324xf32>
    %c0_236 = arith.constant 0 : index
    %c0_237 = arith.constant 0 : index
    %180 = vector.load %arg25[%c0_236, %c0_237] : memref<144x324xf32, #tpu.memory_space<vmem>>, vector<8x324xf32>
    tpu.vector_store %arg25[%c0_236, %c0_237], %179 {strides = array<i32>} : memref<144x324xf32, #tpu.memory_space<vmem>>, vector<8x324xf32>,
    %c0_238 = arith.constant 0 : index
    %c1_239 = arith.constant 1 : index
    %181 = vector.load %arg24[%c0_238, %c1_239] : memref<16x362xf32, #tpu.memory_space<vmem>>, vector<8x324xf32>
    %c8_240 = arith.constant 8 : index
    %c0_241 = arith.constant 0 : index
    %182 = vector.load %arg25[%c8_240, %c0_241] : memref<144x324xf32, #tpu.memory_space<vmem>>, vector<8x324xf32>
    tpu.vector_store %arg25[%c8_240, %c0_241], %181 {strides = array<i32>} : memref<144x324xf32, #tpu.memory_space<vmem>>, vector<8x324xf32>,
    %c0_242 = arith.constant 0 : index
    %c2_243 = arith.constant 2 : index
    %183 = vector.load %arg24[%c0_242, %c2_243] : memref<16x362xf32, #tpu.memory_space<vmem>>, vector<8x324xf32>
    %c16_244 = arith.constant 16 : index
    %c0_245 = arith.constant 0 : index
    %184 = vector.load %arg25[%c16_244, %c0_245] : memref<144x324xf32, #tpu.memory_space<vmem>>, vector<8x324xf32>
    tpu.vector_store %arg25[%c16_244, %c0_245], %183 {strides = array<i32>} : memref<144x324xf32, #tpu.memory_space<vmem>>, vector<8x324xf32>,
    %c0_246 = arith.constant 0 : index
    %c18_247 = arith.constant 18 : index
    %185 = vector.load %arg24[%c0_246, %c18_247] : memref<16x362xf32, #tpu.memory_space<vmem>>, vector<8x324xf32>
    %c24_248 = arith.constant 24 : index
    %c0_249 = arith.constant 0 : index
    %186 = vector.load %arg25[%c24_248, %c0_249] : memref<144x324xf32, #tpu.memory_space<vmem>>, vector<8x324xf32>
    tpu.vector_store %arg25[%c24_248, %c0_249], %185 {strides = array<i32>} : memref<144x324xf32, #tpu.memory_space<vmem>>, vector<8x324xf32>,
    %c0_250 = arith.constant 0 : index
    %c19_251 = arith.constant 19 : index
    %187 = vector.load %arg24[%c0_250, %c19_251] : memref<16x362xf32, #tpu.memory_space<vmem>>, vector<8x324xf32>
    %c32_252 = arith.constant 32 : index
    %c0_253 = arith.constant 0 : index
    %188 = vector.load %arg25[%c32_252, %c0_253] : memref<144x324xf32, #tpu.memory_space<vmem>>, vector<8x324xf32>
    tpu.vector_store %arg25[%c32_252, %c0_253], %187 {strides = array<i32>} : memref<144x324xf32, #tpu.memory_space<vmem>>, vector<8x324xf32>,
    %c0_254 = arith.constant 0 : index
    %c20_255 = arith.constant 20 : index
    %189 = vector.load %arg24[%c0_254, %c20_255] : memref<16x362xf32, #tpu.memory_space<vmem>>, vector<8x324xf32>
    %c40_256 = arith.constant 40 : index
    %c0_257 = arith.constant 0 : index
    %190 = vector.load %arg25[%c40_256, %c0_257] : memref<144x324xf32, #tpu.memory_space<vmem>>, vector<8x324xf32>
    tpu.vector_store %arg25[%c40_256, %c0_257], %189 {strides = array<i32>} : memref<144x324xf32, #tpu.memory_space<vmem>>, vector<8x324xf32>,
    %c0_258 = arith.constant 0 : index
    %c36_259 = arith.constant 36 : index
    %191 = vector.load %arg24[%c0_258, %c36_259] : memref<16x362xf32, #tpu.memory_space<vmem>>, vector<8x324xf32>
    %c48_260 = arith.constant 48 : index
    %c0_261 = arith.constant 0 : index
    %192 = vector.load %arg25[%c48_260, %c0_261] : memref<144x324xf32, #tpu.memory_space<vmem>>, vector<8x324xf32>
    tpu.vector_store %arg25[%c48_260, %c0_261], %191 {strides = array<i32>} : memref<144x324xf32, #tpu.memory_space<vmem>>, vector<8x324xf32>,
    %c0_262 = arith.constant 0 : index
    %c37_263 = arith.constant 37 : index
    %193 = vector.load %arg24[%c0_262, %c37_263] : memref<16x362xf32, #tpu.memory_space<vmem>>, vector<8x324xf32>
    %c56_264 = arith.constant 56 : index
    %c0_265 = arith.constant 0 : index
    %194 = vector.load %arg25[%c56_264, %c0_265] : memref<144x324xf32, #tpu.memory_space<vmem>>, vector<8x324xf32>
    tpu.vector_store %arg25[%c56_264, %c0_265], %193 {strides = array<i32>} : memref<144x324xf32, #tpu.memory_space<vmem>>, vector<8x324xf32>,
    %c0_266 = arith.constant 0 : index
    %c38_267 = arith.constant 38 : index
    %195 = vector.load %arg24[%c0_266, %c38_267] : memref<16x362xf32, #tpu.memory_space<vmem>>, vector<8x324xf32>
    %c64_268 = arith.constant 64 : index
    %c0_269 = arith.constant 0 : index
    %196 = vector.load %arg25[%c64_268, %c0_269] : memref<144x324xf32, #tpu.memory_space<vmem>>, vector<8x324xf32>
    tpu.vector_store %arg25[%c64_268, %c0_269], %195 {strides = array<i32>} : memref<144x324xf32, #tpu.memory_space<vmem>>, vector<8x324xf32>,
    %c0_270 = arith.constant 0 : index
    %c0_271 = arith.constant 0 : index
    %197 = vector.load %arg13[%c0_270, %c0_271] : memref<4x72xf32, #tpu.memory_space<vmem>>, vector<4x72xf32>
    %c0_272 = arith.constant 0 : index
    %c0_273 = arith.constant 0 : index
    %198 = vector.load %arg25[%c0_272, %c0_273] : memref<144x324xf32, #tpu.memory_space<vmem>>, vector<72x324xf32>
    %cst_274 = arith.constant dense<0.000000e+00> : vector<4x324xf32>
    %199 = tpu.matmul %197, %198, %cst_274 {dimension_numbers = #tpu.dot_dimension_numbers<[1], [0], [0], [1], [0, 0, 1, 1], [], []>} : vector<4x72xf32>, vector<72x324xf32>, vector<4x324xf32> -> vector<4x324xf32>
    %c0_275 = arith.constant 0 : index
    %c0_276 = arith.constant 0 : index
    %200 = vector.load %arg14[%c0_275, %c0_276] : memref<4x1xf32, #tpu.memory_space<vmem>>, vector<4x1xf32>
    %201 = vector.broadcast %200 : vector<4x1xf32> to vector<4x324xf32>
    %202 = arith.addf %199, %201 : vector<4x324xf32>
    %cst_277 = arith.constant 0.000000e+00 : f32
    %203 = vector.broadcast %cst_277 : f32 to vector<4x324xf32>
    %204 = arith.maximumf %202, %203 : vector<4x324xf32>
    %205 = vector.broadcast %0 : vector<1x324xf32> to vector<4x324xf32>
    %206 = arith.mulf %204, %205 : vector<4x324xf32>
    %c8_278 = arith.constant 8 : index
    %c19_279 = arith.constant 19 : index
    %207 = vector.load %arg24[%c8_278, %c19_279] : memref<16x362xf32, #tpu.memory_space<vmem>>, vector<4x324xf32>
    tpu.vector_store %arg24[%c8_278, %c19_279], %206 {strides = array<i32>} : memref<16x362xf32, #tpu.memory_space<vmem>>, vector<4x324xf32>,
    %c0_280 = arith.constant 0 : index
    %c0_281 = arith.constant 0 : index
    %208 = vector.load %arg24[%c0_280, %c0_281] : memref<16x362xf32, #tpu.memory_space<vmem>>, vector<12x324xf32>
    %c0_282 = arith.constant 0 : index
    %c0_283 = arith.constant 0 : index
    %209 = vector.load %arg25[%c0_282, %c0_283] : memref<144x324xf32, #tpu.memory_space<vmem>>, vector<12x324xf32>
    tpu.vector_store %arg25[%c0_282, %c0_283], %208 {strides = array<i32>} : memref<144x324xf32, #tpu.memory_space<vmem>>, vector<12x324xf32>,
    %c0_284 = arith.constant 0 : index
    %c1_285 = arith.constant 1 : index
    %210 = vector.load %arg24[%c0_284, %c1_285] : memref<16x362xf32, #tpu.memory_space<vmem>>, vector<12x324xf32>
    %c12_286 = arith.constant 12 : index
    %c0_287 = arith.constant 0 : index
    %211 = vector.load %arg25[%c12_286, %c0_287] : memref<144x324xf32, #tpu.memory_space<vmem>>, vector<12x324xf32>
    tpu.vector_store %arg25[%c12_286, %c0_287], %210 {strides = array<i32>} : memref<144x324xf32, #tpu.memory_space<vmem>>, vector<12x324xf32>,
    %c0_288 = arith.constant 0 : index
    %c2_289 = arith.constant 2 : index
    %212 = vector.load %arg24[%c0_288, %c2_289] : memref<16x362xf32, #tpu.memory_space<vmem>>, vector<12x324xf32>
    %c24_290 = arith.constant 24 : index
    %c0_291 = arith.constant 0 : index
    %213 = vector.load %arg25[%c24_290, %c0_291] : memref<144x324xf32, #tpu.memory_space<vmem>>, vector<12x324xf32>
    tpu.vector_store %arg25[%c24_290, %c0_291], %212 {strides = array<i32>} : memref<144x324xf32, #tpu.memory_space<vmem>>, vector<12x324xf32>,
    %c0_292 = arith.constant 0 : index
    %c18_293 = arith.constant 18 : index
    %214 = vector.load %arg24[%c0_292, %c18_293] : memref<16x362xf32, #tpu.memory_space<vmem>>, vector<12x324xf32>
    %c36_294 = arith.constant 36 : index
    %c0_295 = arith.constant 0 : index
    %215 = vector.load %arg25[%c36_294, %c0_295] : memref<144x324xf32, #tpu.memory_space<vmem>>, vector<12x324xf32>
    tpu.vector_store %arg25[%c36_294, %c0_295], %214 {strides = array<i32>} : memref<144x324xf32, #tpu.memory_space<vmem>>, vector<12x324xf32>,
    %c0_296 = arith.constant 0 : index
    %c19_297 = arith.constant 19 : index
    %216 = vector.load %arg24[%c0_296, %c19_297] : memref<16x362xf32, #tpu.memory_space<vmem>>, vector<12x324xf32>
    %c48_298 = arith.constant 48 : index
    %c0_299 = arith.constant 0 : index
    %217 = vector.load %arg25[%c48_298, %c0_299] : memref<144x324xf32, #tpu.memory_space<vmem>>, vector<12x324xf32>
    tpu.vector_store %arg25[%c48_298, %c0_299], %216 {strides = array<i32>} : memref<144x324xf32, #tpu.memory_space<vmem>>, vector<12x324xf32>,
    %c0_300 = arith.constant 0 : index
    %c20_301 = arith.constant 20 : index
    %218 = vector.load %arg24[%c0_300, %c20_301] : memref<16x362xf32, #tpu.memory_space<vmem>>, vector<12x324xf32>
    %c60_302 = arith.constant 60 : index
    %c0_303 = arith.constant 0 : index
    %219 = vector.load %arg25[%c60_302, %c0_303] : memref<144x324xf32, #tpu.memory_space<vmem>>, vector<12x324xf32>
    tpu.vector_store %arg25[%c60_302, %c0_303], %218 {strides = array<i32>} : memref<144x324xf32, #tpu.memory_space<vmem>>, vector<12x324xf32>,
    %c0_304 = arith.constant 0 : index
    %c36_305 = arith.constant 36 : index
    %220 = vector.load %arg24[%c0_304, %c36_305] : memref<16x362xf32, #tpu.memory_space<vmem>>, vector<12x324xf32>
    %c72_306 = arith.constant 72 : index
    %c0_307 = arith.constant 0 : index
    %221 = vector.load %arg25[%c72_306, %c0_307] : memref<144x324xf32, #tpu.memory_space<vmem>>, vector<12x324xf32>
    tpu.vector_store %arg25[%c72_306, %c0_307], %220 {strides = array<i32>} : memref<144x324xf32, #tpu.memory_space<vmem>>, vector<12x324xf32>,
    %c0_308 = arith.constant 0 : index
    %c37_309 = arith.constant 37 : index
    %222 = vector.load %arg24[%c0_308, %c37_309] : memref<16x362xf32, #tpu.memory_space<vmem>>, vector<12x324xf32>
    %c84_310 = arith.constant 84 : index
    %c0_311 = arith.constant 0 : index
    %223 = vector.load %arg25[%c84_310, %c0_311] : memref<144x324xf32, #tpu.memory_space<vmem>>, vector<12x324xf32>
    tpu.vector_store %arg25[%c84_310, %c0_311], %222 {strides = array<i32>} : memref<144x324xf32, #tpu.memory_space<vmem>>, vector<12x324xf32>,
    %c0_312 = arith.constant 0 : index
    %c38_313 = arith.constant 38 : index
    %224 = vector.load %arg24[%c0_312, %c38_313] : memref<16x362xf32, #tpu.memory_space<vmem>>, vector<12x324xf32>
    %c96_314 = arith.constant 96 : index
    %c0_315 = arith.constant 0 : index
    %225 = vector.load %arg25[%c96_314, %c0_315] : memref<144x324xf32, #tpu.memory_space<vmem>>, vector<12x324xf32>
    tpu.vector_store %arg25[%c96_314, %c0_315], %224 {strides = array<i32>} : memref<144x324xf32, #tpu.memory_space<vmem>>, vector<12x324xf32>,
    %c0_316 = arith.constant 0 : index
    %c0_317 = arith.constant 0 : index
    %226 = vector.load %arg15[%c0_316, %c0_317] : memref<4x108xf32, #tpu.memory_space<vmem>>, vector<4x108xf32>
    %c0_318 = arith.constant 0 : index
    %c0_319 = arith.constant 0 : index
    %227 = vector.load %arg25[%c0_318, %c0_319] : memref<144x324xf32, #tpu.memory_space<vmem>>, vector<108x324xf32>
    %cst_320 = arith.constant dense<0.000000e+00> : vector<4x324xf32>
    %228 = tpu.matmul %226, %227, %cst_320 {dimension_numbers = #tpu.dot_dimension_numbers<[1], [0], [0], [1], [0, 0, 1, 1], [], []>} : vector<4x108xf32>, vector<108x324xf32>, vector<4x324xf32> -> vector<4x324xf32>
    %c0_321 = arith.constant 0 : index
    %c0_322 = arith.constant 0 : index
    %229 = vector.load %arg16[%c0_321, %c0_322] : memref<4x1xf32, #tpu.memory_space<vmem>>, vector<4x1xf32>
    %230 = vector.broadcast %229 : vector<4x1xf32> to vector<4x324xf32>
    %231 = arith.addf %228, %230 : vector<4x324xf32>
    %cst_323 = arith.constant 0.000000e+00 : f32
    %232 = vector.broadcast %cst_323 : f32 to vector<4x324xf32>
    %233 = arith.maximumf %231, %232 : vector<4x324xf32>
    %234 = vector.broadcast %0 : vector<1x324xf32> to vector<4x324xf32>
    %235 = arith.mulf %233, %234 : vector<4x324xf32>
    %c12_324 = arith.constant 12 : index
    %c19_325 = arith.constant 19 : index
    %236 = vector.load %arg24[%c12_324, %c19_325] : memref<16x362xf32, #tpu.memory_space<vmem>>, vector<4x324xf32>
    tpu.vector_store %arg24[%c12_324, %c19_325], %235 {strides = array<i32>} : memref<16x362xf32, #tpu.memory_space<vmem>>, vector<4x324xf32>,
    %c0_326 = arith.constant 0 : index
    %c19_327 = arith.constant 19 : index
    %237 = vector.load %arg24[%c0_326, %c19_327] : memref<16x362xf32, #tpu.memory_space<vmem>>, vector<16x324xf32>
    %c0_328 = arith.constant 0 : index
    %c0_329 = arith.constant 0 : index
    %238 = vector.load %arg17[%c0_328, %c0_329] : memref<4x16xf32, #tpu.memory_space<vmem>>, vector<4x16xf32>
    %cst_330 = arith.constant dense<0.000000e+00> : vector<4x324xf32>
    %239 = tpu.matmul %238, %237, %cst_330 {dimension_numbers = #tpu.dot_dimension_numbers<[1], [0], [0], [1], [0, 0, 1, 1], [], []>} : vector<4x16xf32>, vector<16x324xf32>, vector<4x324xf32> -> vector<4x324xf32>
    %c0_331 = arith.constant 0 : index
    %c0_332 = arith.constant 0 : index
    %240 = vector.load %arg18[%c0_331, %c0_332] : memref<4x1xf32, #tpu.memory_space<vmem>>, vector<4x1xf32>
    %241 = vector.broadcast %240 : vector<4x1xf32> to vector<4x324xf32>
    %242 = arith.addf %239, %241 : vector<4x324xf32>
    %243 = vector.broadcast %0 : vector<1x324xf32> to vector<4x324xf32>
    %244 = arith.mulf %242, %243 : vector<4x324xf32>
    %245 = arith.addf %244, %147 : vector<4x324xf32>
    %c4_333 = arith.constant 4 : index
    %c0_334 = arith.constant 0 : index
    %246 = vector.load %arg26[%c4_333, %c0_334] : memref<8x324xf32, #tpu.memory_space<vmem>>, vector<4x324xf32>
    tpu.vector_store %arg26[%c4_333, %c0_334], %245 {strides = array<i32>} : memref<8x324xf32, #tpu.memory_space<vmem>>, vector<4x324xf32>,
    %c0_335 = arith.constant 0 : index
    %c19_336 = arith.constant 19 : index
    %247 = vector.load %arg24[%c0_335, %c19_336] : memref<16x362xf32, #tpu.memory_space<vmem>>, vector<4x324xf32>
    tpu.vector_store %arg24[%c0_335, %c19_336], %245 {strides = array<i32>} : memref<16x362xf32, #tpu.memory_space<vmem>>, vector<4x324xf32>,
    %c0_337 = arith.constant 0 : index
    %c0_338 = arith.constant 0 : index
    %248 = vector.load %arg19[%c0_337, %c0_338] : memref<4x8xf32, #tpu.memory_space<vmem>>, vector<4x8xf32>
    %c0_339 = arith.constant 0 : index
    %c0_340 = arith.constant 0 : index
    %249 = vector.load %arg26[%c0_339, %c0_340] : memref<8x324xf32, #tpu.memory_space<vmem>>, vector<8x324xf32>
    %cst_341 = arith.constant dense<0.000000e+00> : vector<4x324xf32>
    %250 = tpu.matmul %248, %249, %cst_341 {dimension_numbers = #tpu.dot_dimension_numbers<[1], [0], [0], [1], [0, 0, 1, 1], [], []>} : vector<4x8xf32>, vector<8x324xf32>, vector<4x324xf32> -> vector<4x324xf32>
    %c0_342 = arith.constant 0 : index
    %c0_343 = arith.constant 0 : index
    %251 = vector.load %arg20[%c0_342, %c0_343] : memref<4x1xf32, #tpu.memory_space<vmem>>, vector<4x1xf32>
    %252 = vector.broadcast %251 : vector<4x1xf32> to vector<4x324xf32>
    %253 = arith.addf %250, %252 : vector<4x324xf32>
    %254 = vector.broadcast %0 : vector<1x324xf32> to vector<4x324xf32>
    %255 = arith.mulf %253, %254 : vector<4x324xf32>
    %c0_344 = arith.constant 0 : index
    %c19_345 = arith.constant 19 : index
    %256 = vector.load %arg24[%c0_344, %c19_345] : memref<16x362xf32, #tpu.memory_space<vmem>>, vector<4x324xf32>
    tpu.vector_store %arg24[%c0_344, %c19_345], %255 {strides = array<i32>} : memref<16x362xf32, #tpu.memory_space<vmem>>, vector<4x324xf32>,
    %c0_346 = arith.constant 0 : index
    %c0_347 = arith.constant 0 : index
    %257 = vector.load %arg24[%c0_346, %c0_347] : memref<16x362xf32, #tpu.memory_space<vmem>>, vector<4x324xf32>
    %c0_348 = arith.constant 0 : index
    %c0_349 = arith.constant 0 : index
    %258 = vector.load %arg25[%c0_348, %c0_349] : memref<144x324xf32, #tpu.memory_space<vmem>>, vector<4x324xf32>
    tpu.vector_store %arg25[%c0_348, %c0_349], %257 {strides = array<i32>} : memref<144x324xf32, #tpu.memory_space<vmem>>, vector<4x324xf32>,
    %c0_350 = arith.constant 0 : index
    %c1_351 = arith.constant 1 : index
    %259 = vector.load %arg24[%c0_350, %c1_351] : memref<16x362xf32, #tpu.memory_space<vmem>>, vector<4x324xf32>
    %c4_352 = arith.constant 4 : index
    %c0_353 = arith.constant 0 : index
    %260 = vector.load %arg25[%c4_352, %c0_353] : memref<144x324xf32, #tpu.memory_space<vmem>>, vector<4x324xf32>
    tpu.vector_store %arg25[%c4_352, %c0_353], %259 {strides = array<i32>} : memref<144x324xf32, #tpu.memory_space<vmem>>, vector<4x324xf32>,
    %c0_354 = arith.constant 0 : index
    %c2_355 = arith.constant 2 : index
    %261 = vector.load %arg24[%c0_354, %c2_355] : memref<16x362xf32, #tpu.memory_space<vmem>>, vector<4x324xf32>
    %c8_356 = arith.constant 8 : index
    %c0_357 = arith.constant 0 : index
    %262 = vector.load %arg25[%c8_356, %c0_357] : memref<144x324xf32, #tpu.memory_space<vmem>>, vector<4x324xf32>
    tpu.vector_store %arg25[%c8_356, %c0_357], %261 {strides = array<i32>} : memref<144x324xf32, #tpu.memory_space<vmem>>, vector<4x324xf32>,
    %c0_358 = arith.constant 0 : index
    %c18_359 = arith.constant 18 : index
    %263 = vector.load %arg24[%c0_358, %c18_359] : memref<16x362xf32, #tpu.memory_space<vmem>>, vector<4x324xf32>
    %c12_360 = arith.constant 12 : index
    %c0_361 = arith.constant 0 : index
    %264 = vector.load %arg25[%c12_360, %c0_361] : memref<144x324xf32, #tpu.memory_space<vmem>>, vector<4x324xf32>
    tpu.vector_store %arg25[%c12_360, %c0_361], %263 {strides = array<i32>} : memref<144x324xf32, #tpu.memory_space<vmem>>, vector<4x324xf32>,
    %c0_362 = arith.constant 0 : index
    %c19_363 = arith.constant 19 : index
    %265 = vector.load %arg24[%c0_362, %c19_363] : memref<16x362xf32, #tpu.memory_space<vmem>>, vector<4x324xf32>
    %c16_364 = arith.constant 16 : index
    %c0_365 = arith.constant 0 : index
    %266 = vector.load %arg25[%c16_364, %c0_365] : memref<144x324xf32, #tpu.memory_space<vmem>>, vector<4x324xf32>
    tpu.vector_store %arg25[%c16_364, %c0_365], %265 {strides = array<i32>} : memref<144x324xf32, #tpu.memory_space<vmem>>, vector<4x324xf32>,
    %c0_366 = arith.constant 0 : index
    %c20_367 = arith.constant 20 : index
    %267 = vector.load %arg24[%c0_366, %c20_367] : memref<16x362xf32, #tpu.memory_space<vmem>>, vector<4x324xf32>
    %c20_368 = arith.constant 20 : index
    %c0_369 = arith.constant 0 : index
    %268 = vector.load %arg25[%c20_368, %c0_369] : memref<144x324xf32, #tpu.memory_space<vmem>>, vector<4x324xf32>
    tpu.vector_store %arg25[%c20_368, %c0_369], %267 {strides = array<i32>} : memref<144x324xf32, #tpu.memory_space<vmem>>, vector<4x324xf32>,
    %c0_370 = arith.constant 0 : index
    %c36_371 = arith.constant 36 : index
    %269 = vector.load %arg24[%c0_370, %c36_371] : memref<16x362xf32, #tpu.memory_space<vmem>>, vector<4x324xf32>
    %c24_372 = arith.constant 24 : index
    %c0_373 = arith.constant 0 : index
    %270 = vector.load %arg25[%c24_372, %c0_373] : memref<144x324xf32, #tpu.memory_space<vmem>>, vector<4x324xf32>
    tpu.vector_store %arg25[%c24_372, %c0_373], %269 {strides = array<i32>} : memref<144x324xf32, #tpu.memory_space<vmem>>, vector<4x324xf32>,
    %c0_374 = arith.constant 0 : index
    %c37_375 = arith.constant 37 : index
    %271 = vector.load %arg24[%c0_374, %c37_375] : memref<16x362xf32, #tpu.memory_space<vmem>>, vector<4x324xf32>
    %c28_376 = arith.constant 28 : index
    %c0_377 = arith.constant 0 : index
    %272 = vector.load %arg25[%c28_376, %c0_377] : memref<144x324xf32, #tpu.memory_space<vmem>>, vector<4x324xf32>
    tpu.vector_store %arg25[%c28_376, %c0_377], %271 {strides = array<i32>} : memref<144x324xf32, #tpu.memory_space<vmem>>, vector<4x324xf32>,
    %c0_378 = arith.constant 0 : index
    %c38_379 = arith.constant 38 : index
    %273 = vector.load %arg24[%c0_378, %c38_379] : memref<16x362xf32, #tpu.memory_space<vmem>>, vector<4x324xf32>
    %c32_380 = arith.constant 32 : index
    %c0_381 = arith.constant 0 : index
    %274 = vector.load %arg25[%c32_380, %c0_381] : memref<144x324xf32, #tpu.memory_space<vmem>>, vector<4x324xf32>
    tpu.vector_store %arg25[%c32_380, %c0_381], %273 {strides = array<i32>} : memref<144x324xf32, #tpu.memory_space<vmem>>, vector<4x324xf32>,
    %c0_382 = arith.constant 0 : index
    %c0_383 = arith.constant 0 : index
    %275 = vector.load %arg21[%c0_382, %c0_383] : memref<4x36xf32, #tpu.memory_space<vmem>>, vector<4x36xf32>
    %c0_384 = arith.constant 0 : index
    %c0_385 = arith.constant 0 : index
    %276 = vector.load %arg25[%c0_384, %c0_385] : memref<144x324xf32, #tpu.memory_space<vmem>>, vector<36x324xf32>
    %cst_386 = arith.constant dense<0.000000e+00> : vector<4x324xf32>
    %277 = tpu.matmul %275, %276, %cst_386 {dimension_numbers = #tpu.dot_dimension_numbers<[1], [0], [0], [1], [0, 0, 1, 1], [], []>} : vector<4x36xf32>, vector<36x324xf32>, vector<4x324xf32> -> vector<4x324xf32>
    %c0_387 = arith.constant 0 : index
    %c0_388 = arith.constant 0 : index
    %278 = vector.load %arg22[%c0_387, %c0_388] : memref<4x1xf32, #tpu.memory_space<vmem>>, vector<4x1xf32>
    %279 = vector.broadcast %278 : vector<4x1xf32> to vector<4x324xf32>
    %280 = arith.addf %277, %279 : vector<4x324xf32>
    %281 = vector.broadcast %0 : vector<1x324xf32> to vector<4x324xf32>
    %282 = arith.mulf %280, %281 : vector<4x324xf32>
    %c0_389 = arith.constant 0 : index
    %c19_390 = arith.constant 19 : index
    %283 = vector.load %arg24[%c0_389, %c19_390] : memref<16x362xf32, #tpu.memory_space<vmem>>, vector<4x324xf32>
    tpu.vector_store %arg24[%c0_389, %c19_390], %282 {strides = array<i32>} : memref<16x362xf32, #tpu.memory_space<vmem>>, vector<4x324xf32>,
    %c0_391 = arith.constant 0 : index
    %c38_392 = arith.constant 38 : index
    %284 = vector.load %arg24[%c0_391, %c38_392] : memref<16x362xf32, #tpu.memory_space<vmem>>, vector<4x16xf32>
    %c0_393 = arith.constant 0 : index
    %c0_394 = arith.constant 0 : index
    %c0_395 = arith.constant 0 : index
    %285 = vector.load %arg23[%c0_393, %c0_394, %c0_395] : memref<1x4x256xf32, #tpu.memory_space<vmem>>, vector<1x4x16xf32>
    %286 = vector.shape_cast %285 : vector<1x4x16xf32> to vector<4x16xf32>
    %287 = vector.shape_cast %284 : vector<4x16xf32> to vector<1x4x16xf32>
    tpu.vector_store %arg23[%c0_393, %c0_394, %c0_395], %287 {strides = array<i32>} : memref<1x4x256xf32, #tpu.memory_space<vmem>>, vector<1x4x16xf32>,
    %c0_396 = arith.constant 0 : index
    %c56_397 = arith.constant 56 : index
    %288 = vector.load %arg24[%c0_396, %c56_397] : memref<16x362xf32, #tpu.memory_space<vmem>>, vector<4x16xf32>
    %c0_398 = arith.constant 0 : index
    %c0_399 = arith.constant 0 : index
    %c16_400 = arith.constant 16 : index
    %289 = vector.load %arg23[%c0_398, %c0_399, %c16_400] : memref<1x4x256xf32, #tpu.memory_space<vmem>>, vector<1x4x16xf32>
    %290 = vector.shape_cast %289 : vector<1x4x16xf32> to vector<4x16xf32>
    %291 = vector.shape_cast %288 : vector<4x16xf32> to vector<1x4x16xf32>
    tpu.vector_store %arg23[%c0_398, %c0_399, %c16_400], %291 {strides = array<i32>} : memref<1x4x256xf32, #tpu.memory_space<vmem>>, vector<1x4x16xf32>,
    %c0_401 = arith.constant 0 : index
    %c74_402 = arith.constant 74 : index
    %292 = vector.load %arg24[%c0_401, %c74_402] : memref<16x362xf32, #tpu.memory_space<vmem>>, vector<4x16xf32>
    %c0_403 = arith.constant 0 : index
    %c0_404 = arith.constant 0 : index
    %c32_405 = arith.constant 32 : index
    %293 = vector.load %arg23[%c0_403, %c0_404, %c32_405] : memref<1x4x256xf32, #tpu.memory_space<vmem>>, vector<1x4x16xf32>
    %294 = vector.shape_cast %293 : vector<1x4x16xf32> to vector<4x16xf32>
    %295 = vector.shape_cast %292 : vector<4x16xf32> to vector<1x4x16xf32>
    tpu.vector_store %arg23[%c0_403, %c0_404, %c32_405], %295 {strides = array<i32>} : memref<1x4x256xf32, #tpu.memory_space<vmem>>, vector<1x4x16xf32>,
    %c0_406 = arith.constant 0 : index
    %c92_407 = arith.constant 92 : index
    %296 = vector.load %arg24[%c0_406, %c92_407] : memref<16x362xf32, #tpu.memory_space<vmem>>, vector<4x16xf32>
    %c0_408 = arith.constant 0 : index
    %c0_409 = arith.constant 0 : index
    %c48_410 = arith.constant 48 : index
    %297 = vector.load %arg23[%c0_408, %c0_409, %c48_410] : memref<1x4x256xf32, #tpu.memory_space<vmem>>, vector<1x4x16xf32>
    %298 = vector.shape_cast %297 : vector<1x4x16xf32> to vector<4x16xf32>
    %299 = vector.shape_cast %296 : vector<4x16xf32> to vector<1x4x16xf32>
    tpu.vector_store %arg23[%c0_408, %c0_409, %c48_410], %299 {strides = array<i32>} : memref<1x4x256xf32, #tpu.memory_space<vmem>>, vector<1x4x16xf32>,
    %c0_411 = arith.constant 0 : index
    %c110_412 = arith.constant 110 : index
    %300 = vector.load %arg24[%c0_411, %c110_412] : memref<16x362xf32, #tpu.memory_space<vmem>>, vector<4x16xf32>
    %c0_413 = arith.constant 0 : index
    %c0_414 = arith.constant 0 : index
    %c64_415 = arith.constant 64 : index
    %301 = vector.load %arg23[%c0_413, %c0_414, %c64_415] : memref<1x4x256xf32, #tpu.memory_space<vmem>>, vector<1x4x16xf32>
    %302 = vector.shape_cast %301 : vector<1x4x16xf32> to vector<4x16xf32>
    %303 = vector.shape_cast %300 : vector<4x16xf32> to vector<1x4x16xf32>
    tpu.vector_store %arg23[%c0_413, %c0_414, %c64_415], %303 {strides = array<i32>} : memref<1x4x256xf32, #tpu.memory_space<vmem>>, vector<1x4x16xf32>,
    %c0_416 = arith.constant 0 : index
    %c128_417 = arith.constant 128 : index
    %304 = vector.load %arg24[%c0_416, %c128_417] : memref<16x362xf32, #tpu.memory_space<vmem>>, vector<4x16xf32>
    %c0_418 = arith.constant 0 : index
    %c0_419 = arith.constant 0 : index
    %c80_420 = arith.constant 80 : index
    %305 = vector.load %arg23[%c0_418, %c0_419, %c80_420] : memref<1x4x256xf32, #tpu.memory_space<vmem>>, vector<1x4x16xf32>
    %306 = vector.shape_cast %305 : vector<1x4x16xf32> to vector<4x16xf32>
    %307 = vector.shape_cast %304 : vector<4x16xf32> to vector<1x4x16xf32>
    tpu.vector_store %arg23[%c0_418, %c0_419, %c80_420], %307 {strides = array<i32>} : memref<1x4x256xf32, #tpu.memory_space<vmem>>, vector<1x4x16xf32>,
    %c0_421 = arith.constant 0 : index
    %c146_422 = arith.constant 146 : index
    %308 = vector.load %arg24[%c0_421, %c146_422] : memref<16x362xf32, #tpu.memory_space<vmem>>, vector<4x16xf32>
    %c0_423 = arith.constant 0 : index
    %c0_424 = arith.constant 0 : index
    %c96_425 = arith.constant 96 : index
    %309 = vector.load %arg23[%c0_423, %c0_424, %c96_425] : memref<1x4x256xf32, #tpu.memory_space<vmem>>, vector<1x4x16xf32>
    %310 = vector.shape_cast %309 : vector<1x4x16xf32> to vector<4x16xf32>
    %311 = vector.shape_cast %308 : vector<4x16xf32> to vector<1x4x16xf32>
    tpu.vector_store %arg23[%c0_423, %c0_424, %c96_425], %311 {strides = array<i32>} : memref<1x4x256xf32, #tpu.memory_space<vmem>>, vector<1x4x16xf32>,
    %c0_426 = arith.constant 0 : index
    %c164_427 = arith.constant 164 : index
    %312 = vector.load %arg24[%c0_426, %c164_427] : memref<16x362xf32, #tpu.memory_space<vmem>>, vector<4x16xf32>
    %c0_428 = arith.constant 0 : index
    %c0_429 = arith.constant 0 : index
    %c112_430 = arith.constant 112 : index
    %313 = vector.load %arg23[%c0_428, %c0_429, %c112_430] : memref<1x4x256xf32, #tpu.memory_space<vmem>>, vector<1x4x16xf32>
    %314 = vector.shape_cast %313 : vector<1x4x16xf32> to vector<4x16xf32>
    %315 = vector.shape_cast %312 : vector<4x16xf32> to vector<1x4x16xf32>
    tpu.vector_store %arg23[%c0_428, %c0_429, %c112_430], %315 {strides = array<i32>} : memref<1x4x256xf32, #tpu.memory_space<vmem>>, vector<1x4x16xf32>,
    %c0_431 = arith.constant 0 : index
    %c182_432 = arith.constant 182 : index
    %316 = vector.load %arg24[%c0_431, %c182_432] : memref<16x362xf32, #tpu.memory_space<vmem>>, vector<4x16xf32>
    %c0_433 = arith.constant 0 : index
    %c0_434 = arith.constant 0 : index
    %c128_435 = arith.constant 128 : index
    %317 = vector.load %arg23[%c0_433, %c0_434, %c128_435] : memref<1x4x256xf32, #tpu.memory_space<vmem>>, vector<1x4x16xf32>
    %318 = vector.shape_cast %317 : vector<1x4x16xf32> to vector<4x16xf32>
    %319 = vector.shape_cast %316 : vector<4x16xf32> to vector<1x4x16xf32>
    tpu.vector_store %arg23[%c0_433, %c0_434, %c128_435], %319 {strides = array<i32>} : memref<1x4x256xf32, #tpu.memory_space<vmem>>, vector<1x4x16xf32>,
    %c0_436 = arith.constant 0 : index
    %c200_437 = arith.constant 200 : index
    %320 = vector.load %arg24[%c0_436, %c200_437] : memref<16x362xf32, #tpu.memory_space<vmem>>, vector<4x16xf32>
    %c0_438 = arith.constant 0 : index
    %c0_439 = arith.constant 0 : index
    %c144_440 = arith.constant 144 : index
    %321 = vector.load %arg23[%c0_438, %c0_439, %c144_440] : memref<1x4x256xf32, #tpu.memory_space<vmem>>, vector<1x4x16xf32>
    %322 = vector.shape_cast %321 : vector<1x4x16xf32> to vector<4x16xf32>
    %323 = vector.shape_cast %320 : vector<4x16xf32> to vector<1x4x16xf32>
    tpu.vector_store %arg23[%c0_438, %c0_439, %c144_440], %323 {strides = array<i32>} : memref<1x4x256xf32, #tpu.memory_space<vmem>>, vector<1x4x16xf32>,
    %c0_441 = arith.constant 0 : index
    %c218_442 = arith.constant 218 : index
    %324 = vector.load %arg24[%c0_441, %c218_442] : memref<16x362xf32, #tpu.memory_space<vmem>>, vector<4x16xf32>
    %c0_443 = arith.constant 0 : index
    %c0_444 = arith.constant 0 : index
    %c160_445 = arith.constant 160 : index
    %325 = vector.load %arg23[%c0_443, %c0_444, %c160_445] : memref<1x4x256xf32, #tpu.memory_space<vmem>>, vector<1x4x16xf32>
    %326 = vector.shape_cast %325 : vector<1x4x16xf32> to vector<4x16xf32>
    %327 = vector.shape_cast %324 : vector<4x16xf32> to vector<1x4x16xf32>
    tpu.vector_store %arg23[%c0_443, %c0_444, %c160_445], %327 {strides = array<i32>} : memref<1x4x256xf32, #tpu.memory_space<vmem>>, vector<1x4x16xf32>,
    %c0_446 = arith.constant 0 : index
    %c236_447 = arith.constant 236 : index
    %328 = vector.load %arg24[%c0_446, %c236_447] : memref<16x362xf32, #tpu.memory_space<vmem>>, vector<4x16xf32>
    %c0_448 = arith.constant 0 : index
    %c0_449 = arith.constant 0 : index
    %c176_450 = arith.constant 176 : index
    %329 = vector.load %arg23[%c0_448, %c0_449, %c176_450] : memref<1x4x256xf32, #tpu.memory_space<vmem>>, vector<1x4x16xf32>
    %330 = vector.shape_cast %329 : vector<1x4x16xf32> to vector<4x16xf32>
    %331 = vector.shape_cast %328 : vector<4x16xf32> to vector<1x4x16xf32>
    tpu.vector_store %arg23[%c0_448, %c0_449, %c176_450], %331 {strides = array<i32>} : memref<1x4x256xf32, #tpu.memory_space<vmem>>, vector<1x4x16xf32>,
    %c0_451 = arith.constant 0 : index
    %c254_452 = arith.constant 254 : index
    %332 = vector.load %arg24[%c0_451, %c254_452] : memref<16x362xf32, #tpu.memory_space<vmem>>, vector<4x16xf32>
    %c0_453 = arith.constant 0 : index
    %c0_454 = arith.constant 0 : index
    %c192_455 = arith.constant 192 : index
    %333 = vector.load %arg23[%c0_453, %c0_454, %c192_455] : memref<1x4x256xf32, #tpu.memory_space<vmem>>, vector<1x4x16xf32>
    %334 = vector.shape_cast %333 : vector<1x4x16xf32> to vector<4x16xf32>
    %335 = vector.shape_cast %332 : vector<4x16xf32> to vector<1x4x16xf32>
    tpu.vector_store %arg23[%c0_453, %c0_454, %c192_455], %335 {strides = array<i32>} : memref<1x4x256xf32, #tpu.memory_space<vmem>>, vector<1x4x16xf32>,
    %c0_456 = arith.constant 0 : index
    %c272_457 = arith.constant 272 : index
    %336 = vector.load %arg24[%c0_456, %c272_457] : memref<16x362xf32, #tpu.memory_space<vmem>>, vector<4x16xf32>
    %c0_458 = arith.constant 0 : index
    %c0_459 = arith.constant 0 : index
    %c208_460 = arith.constant 208 : index
    %337 = vector.load %arg23[%c0_458, %c0_459, %c208_460] : memref<1x4x256xf32, #tpu.memory_space<vmem>>, vector<1x4x16xf32>
    %338 = vector.shape_cast %337 : vector<1x4x16xf32> to vector<4x16xf32>
    %339 = vector.shape_cast %336 : vector<4x16xf32> to vector<1x4x16xf32>
    tpu.vector_store %arg23[%c0_458, %c0_459, %c208_460], %339 {strides = array<i32>} : memref<1x4x256xf32, #tpu.memory_space<vmem>>, vector<1x4x16xf32>,
    %c0_461 = arith.constant 0 : index
    %c290_462 = arith.constant 290 : index
    %340 = vector.load %arg24[%c0_461, %c290_462] : memref<16x362xf32, #tpu.memory_space<vmem>>, vector<4x16xf32>
    %c0_463 = arith.constant 0 : index
    %c0_464 = arith.constant 0 : index
    %c224_465 = arith.constant 224 : index
    %341 = vector.load %arg23[%c0_463, %c0_464, %c224_465] : memref<1x4x256xf32, #tpu.memory_space<vmem>>, vector<1x4x16xf32>
    %342 = vector.shape_cast %341 : vector<1x4x16xf32> to vector<4x16xf32>
    %343 = vector.shape_cast %340 : vector<4x16xf32> to vector<1x4x16xf32>
    tpu.vector_store %arg23[%c0_463, %c0_464, %c224_465], %343 {strides = array<i32>} : memref<1x4x256xf32, #tpu.memory_space<vmem>>, vector<1x4x16xf32>,
    %c0_466 = arith.constant 0 : index
    %c308_467 = arith.constant 308 : index
    %344 = vector.load %arg24[%c0_466, %c308_467] : memref<16x362xf32, #tpu.memory_space<vmem>>, vector<4x16xf32>
    %c0_468 = arith.constant 0 : index
    %c0_469 = arith.constant 0 : index
    %c240_470 = arith.constant 240 : index
    %345 = vector.load %arg23[%c0_468, %c0_469, %c240_470] : memref<1x4x256xf32, #tpu.memory_space<vmem>>, vector<1x4x16xf32>
    %346 = vector.shape_cast %345 : vector<1x4x16xf32> to vector<4x16xf32>
    %347 = vector.shape_cast %344 : vector<4x16xf32> to vector<1x4x16xf32>
    tpu.vector_store %arg23[%c0_468, %c0_469, %c240_470], %347 {strides = array<i32>} : memref<1x4x256xf32, #tpu.memory_space<vmem>>, vector<1x4x16xf32>,
    return
  }
  func.func @transform_0(%arg0: i32) -> (i32, i32, i32) {
    %c0_i32 = arith.constant 0 : i32
    %c0_i32_0 = arith.constant 0 : i32
    %c0_i32_1 = arith.constant 0 : i32
    return %arg0, %c0_i32, %c0_i32_0 : i32, i32, i32
  }
  func.func @transform_1(%arg0: i32) -> (i32, i32) {
    %c0_i32 = arith.constant 0 : i32
    %c0_i32_0 = arith.constant 0 : i32
    %c0_i32_1 = arith.constant 0 : i32
    return %c0_i32, %c0_i32_0 : i32, i32
  }
  func.func @transform_2(%arg0: i32) -> (i32, i32) {
    %c0_i32 = arith.constant 0 : i32
    %c0_i32_0 = arith.constant 0 : i32
    %c0_i32_1 = arith.constant 0 : i32
    return %c0_i32, %c0_i32_0 : i32, i32
  }
  func.func @transform_3(%arg0: i32) -> (i32, i32) {
    %c0_i32 = arith.constant 0 : i32
    %c0_i32_0 = arith.constant 0 : i32
    %c0_i32_1 = arith.constant 0 : i32
    return %c0_i32, %c0_i32_0 : i32, i32
  }
  func.func @transform_4(%arg0: i32) -> (i32, i32) {
    %c0_i32 = arith.constant 0 : i32
    %c0_i32_0 = arith.constant 0 : i32
    %c0_i32_1 = arith.constant 0 : i32
    return %c0_i32, %c0_i32_0 : i32, i32
  }
  func.func @transform_5(%arg0: i32) -> (i32, i32) {
    %c0_i32 = arith.constant 0 : i32
    %c0_i32_0 = arith.constant 0 : i32
    %c0_i32_1 = arith.constant 0 : i32
    return %c0_i32, %c0_i32_0 : i32, i32
  }
  func.func @transform_6(%arg0: i32) -> (i32, i32) {
    %c0_i32 = arith.constant 0 : i32
    %c0_i32_0 = arith.constant 0 : i32
    %c0_i32_1 = arith.constant 0 : i32
    return %c0_i32, %c0_i32_0 : i32, i32
  }
  func.func @transform_7(%arg0: i32) -> (i32, i32) {
    %c0_i32 = arith.constant 0 : i32
    %c0_i32_0 = arith.constant 0 : i32
    %c0_i32_1 = arith.constant 0 : i32
    return %c0_i32, %c0_i32_0 : i32, i32
  }
  func.func @transform_8(%arg0: i32) -> (i32, i32) {
    %c0_i32 = arith.constant 0 : i32
    %c0_i32_0 = arith.constant 0 : i32
    %c0_i32_1 = arith.constant 0 : i32
    return %c0_i32, %c0_i32_0 : i32, i32
  }
  func.func @transform_9(%arg0: i32) -> (i32, i32) {
    %c0_i32 = arith.constant 0 : i32
    %c0_i32_0 = arith.constant 0 : i32
    %c0_i32_1 = arith.constant 0 : i32
    return %c0_i32, %c0_i32_0 : i32, i32
  }
  func.func @transform_10(%arg0: i32) -> (i32, i32) {
    %c0_i32 = arith.constant 0 : i32
    %c0_i32_0 = arith.constant 0 : i32
    %c0_i32_1 = arith.constant 0 : i32
    return %c0_i32, %c0_i32_0 : i32, i32
  }
  func.func @transform_11(%arg0: i32) -> (i32, i32) {
    %c0_i32 = arith.constant 0 : i32
    %c0_i32_0 = arith.constant 0 : i32
    %c0_i32_1 = arith.constant 0 : i32
    return %c0_i32, %c0_i32_0 : i32, i32
  }
  func.func @transform_12(%arg0: i32) -> (i32, i32) {
    %c0_i32 = arith.constant 0 : i32
    %c0_i32_0 = arith.constant 0 : i32
    %c0_i32_1 = arith.constant 0 : i32
    return %c0_i32, %c0_i32_0 : i32, i32
  }
  func.func @transform_13(%arg0: i32) -> (i32, i32) {
    %c0_i32 = arith.constant 0 : i32
    %c0_i32_0 = arith.constant 0 : i32
    %c0_i32_1 = arith.constant 0 : i32
    return %c0_i32, %c0_i32_0 : i32, i32
  }
  func.func @transform_14(%arg0: i32) -> (i32, i32) {
    %c0_i32 = arith.constant 0 : i32
    %c0_i32_0 = arith.constant 0 : i32
    %c0_i32_1 = arith.constant 0 : i32
    return %c0_i32, %c0_i32_0 : i32, i32
  }
  func.func @transform_15(%arg0: i32) -> (i32, i32) {
    %c0_i32 = arith.constant 0 : i32
    %c0_i32_0 = arith.constant 0 : i32
    %c0_i32_1 = arith.constant 0 : i32
    return %c0_i32, %c0_i32_0 : i32, i32
  }
  func.func @transform_16(%arg0: i32) -> (i32, i32) {
    %c0_i32 = arith.constant 0 : i32
    %c0_i32_0 = arith.constant 0 : i32
    %c0_i32_1 = arith.constant 0 : i32
    return %c0_i32, %c0_i32_0 : i32, i32
  }
  func.func @transform_17(%arg0: i32) -> (i32, i32) {
    %c0_i32 = arith.constant 0 : i32
    %c0_i32_0 = arith.constant 0 : i32
    %c0_i32_1 = arith.constant 0 : i32
    return %c0_i32, %c0_i32_0 : i32, i32
  }
  func.func @transform_18(%arg0: i32) -> (i32, i32) {
    %c0_i32 = arith.constant 0 : i32
    %c0_i32_0 = arith.constant 0 : i32
    %c0_i32_1 = arith.constant 0 : i32
    return %c0_i32, %c0_i32_0 : i32, i32
  }
  func.func @transform_19(%arg0: i32) -> (i32, i32) {
    %c0_i32 = arith.constant 0 : i32
    %c0_i32_0 = arith.constant 0 : i32
    %c0_i32_1 = arith.constant 0 : i32
    return %c0_i32, %c0_i32_0 : i32, i32
  }
  func.func @transform_20(%arg0: i32) -> (i32, i32) {
    %c0_i32 = arith.constant 0 : i32
    %c0_i32_0 = arith.constant 0 : i32
    %c0_i32_1 = arith.constant 0 : i32
    return %c0_i32, %c0_i32_0 : i32, i32
  }
  func.func @transform_21(%arg0: i32) -> (i32, i32) {
    %c0_i32 = arith.constant 0 : i32
    %c0_i32_0 = arith.constant 0 : i32
    %c0_i32_1 = arith.constant 0 : i32
    return %c0_i32, %c0_i32_0 : i32, i32
  }
  func.func @transform_22(%arg0: i32) -> (i32, i32, i32) {
    %c0_i32 = arith.constant 0 : i32
    %c0_i32_0 = arith.constant 0 : i32
    %c0_i32_1 = arith.constant 0 : i32
    return %arg0, %c0_i32, %c0_i32_0 : i32, i32, i32
  }
}

</mosaic_0001>

<llo_original>
// kernel: rdbs_forward.1
$region0: #{rdbs_forward.1}
  #allocation0 [shape = 'u32[]', space=smem, size = 0x4, offset = 0x4, fixed_abs, tag = 'smem constant byte address 0x4 - core index']
  #allocation1 [shape = 'u32[144,128]{1,0:T(1,128)}', space=vmem, size = 0x12000, scoped, tag = 'internal scratch']
  #allocation2 [shape = 'f32[16,362]{1,0:T(8,128)}', space=vmem, size = 0x6000, scoped, tag = 'scratch operand']
  #allocation3 [shape = 'f32[144,324]{1,0:T(8,128)}', space=vmem, size = 0x36000, scoped, tag = 'scratch operand']
  #allocation4 [shape = 'f32[8,324]{1,0:T(8,128)}', space=vmem, size = 0x3000, scoped, tag = 'scratch operand']
  %s0 = inlined_call_operand.vmem [shape: f32[2,4,256], index: 0, kind: input, shape index: {}]
  %s1 = inlined_call_operand.vmem [shape: f32[1,324], index: 1, kind: input, shape index: {}]
  %s2 = inlined_call_operand.vmem [shape: f32[4,36], index: 2, kind: input, shape index: {}]
  %s3 = inlined_call_operand.vmem [shape: f32[4,1], index: 3, kind: input, shape index: {}]
  %s4 = inlined_call_operand.vmem [shape: f32[4,72], index: 4, kind: input, shape index: {}]
  %s5 = inlined_call_operand.vmem [shape: f32[4,1], index: 5, kind: input, shape index: {}]
  %s6 = inlined_call_operand.vmem [shape: f32[4,108], index: 6, kind: input, shape index: {}]
  %s7 = inlined_call_operand.vmem [shape: f32[4,1], index: 7, kind: input, shape index: {}]
  %s8 = inlined_call_operand.vmem [shape: f32[4,16], index: 8, kind: input, shape index: {}]
  %s9 = inlined_call_operand.vmem [shape: f32[4,1], index: 9, kind: input, shape index: {}]
  %s10 = inlined_call_operand.vmem [shape: f32[4,36], index: 10, kind: input, shape index: {}]
  %s11 = inlined_call_operand.vmem [shape: f32[4,1], index: 11, kind: input, shape index: {}]
  %s12 = inlined_call_operand.vmem [shape: f32[4,72], index: 12, kind: input, shape index: {}]
  %s13 = inlined_call_operand.vmem [shape: f32[4,1], index: 13, kind: input, shape index: {}]
  %s14 = inlined_call_operand.vmem [shape: f32[4,108], index: 14, kind: input, shape index: {}]
  %s15 = inlined_call_operand.vmem [shape: f32[4,1], index: 15, kind: input, shape index: {}]
  %s16 = inlined_call_operand.vmem [shape: f32[4,16], index: 16, kind: input, shape index: {}]
  %s17 = inlined_call_operand.vmem [shape: f32[4,1], index: 17, kind: input, shape index: {}]
  %s18 = inlined_call_operand.vmem [shape: f32[4,8], index: 18, kind: input, shape index: {}]
  %s19 = inlined_call_operand.vmem [shape: f32[4,1], index: 19, kind: input, shape index: {}]
  %s20 = inlined_call_operand.vmem [shape: f32[4,36], index: 20, kind: input, shape index: {}]
  %s21 = inlined_call_operand.vmem [shape: f32[4,1], index: 21, kind: input, shape index: {}]
  %s22 = inlined_call_operand.vmem [shape: f32[2,4,256], index: 22, kind: output, shape index: {}]
  %s23 = sld [smem:[#allocation0]]
  $region121: #{rdbs_forward.1} parent=0
    _
  %s25 = ssub.s32 1, %s23
  %s26 = scalar_select 0, %s25, %s23
  loop: start=0, step=1, limit=4
  $region2: #{rdbs_forward.1} parent=0 // loop_pre_header
    _
  $region3: #{rdbs_forward.1} parent=0 // loop_header
    %s28 = sphi 0, %s32
    %p29 = scmp.ge.s32.totalorder %s28, 4
    %s38 = sphi 0, %s40
    %s41 = sphi 0, %s38
    %s42 = sphi 0, %s41
    %s58 = sphi 0, %s42
    %s62 = sphi 0, %s62
    %s64 = sphi 0, %s62
    %s65 = sphi 0, %s64
    %s79 = sphi 0, %s65
    %s83 = sphi 0, %s83
    %s85 = sphi 0, %s83
    %s86 = sphi 0, %s85
    %s100 = sphi 0, %s86
    %s104 = sphi 0, %s104
    %s106 = sphi 0, %s104
    %s107 = sphi 0, %s106
    %s121 = sphi 0, %s107
    %s125 = sphi 0, %s125
    %s127 = sphi 0, %s125
    %s128 = sphi 0, %s127
    %s142 = sphi 0, %s128
    %s146 = sphi 0, %s146
    %s148 = sphi 0, %s146
    %s149 = sphi 0, %s148
    %s163 = sphi 0, %s149
    %s167 = sphi 0, %s167
    %s169 = sphi 0, %s167
    %s170 = sphi 0, %s169
    %s184 = sphi 0, %s170
    %s188 = sphi 0, %s188
    %s190 = sphi 0, %s188
    %s191 = sphi 0, %s190
    %s205 = sphi 0, %s191
    %s209 = sphi 0, %s209
    %s211 = sphi 0, %s209
    %s212 = sphi 0, %s211
    %s226 = sphi 0, %s212
    %s230 = sphi 0, %s230
    %s232 = sphi 0, %s230
    %s233 = sphi 0, %s232
    %s247 = sphi 0, %s233
    %s251 = sphi 0, %s251
    %s253 = sphi 0, %s251
    %s254 = sphi 0, %s253
    %s268 = sphi 0, %s254
    %s272 = sphi 0, %s272
    %s274 = sphi 0, %s272
    %s275 = sphi 0, %s274
    %s289 = sphi 0, %s275
    %s293 = sphi 0, %s293
    %s295 = sphi 0, %s293
    %s296 = sphi 0, %s295
    %s310 = sphi 0, %s296
    %s314 = sphi 0, %s314
    %s316 = sphi 0, %s314
    %s317 = sphi 0, %s316
    %s331 = sphi 0, %s317
    %s335 = sphi 0, %s335
    %s337 = sphi 0, %s335
    %s338 = sphi 0, %s337
    %s352 = sphi 0, %s338
    %s356 = sphi 0, %s356
    %s358 = sphi 0, %s356
    %s359 = sphi 0, %s358
    %s373 = sphi 0, %s359
    %s377 = sphi 0, %s377
    %s379 = sphi 0, %s377
    %s380 = sphi 0, %s379
    %s394 = sphi 0, %s380
    %s398 = sphi 0, %s398
    %s400 = sphi 0, %s398
    %s401 = sphi 0, %s400
    %s415 = sphi 0, %s401
    %s419 = sphi 0, %s419
    %s421 = sphi 0, %s419
    %s422 = sphi 0, %s421
    %s436 = sphi 0, %s422
    %s440 = sphi 0, %s440
    %s442 = sphi 0, %s440
    %s443 = sphi 0, %s442
    %s457 = sphi 0, %s443
    %s461 = sphi 0, %s461
    %s463 = sphi 0, %s461
    %s464 = sphi 0, %s463
    %s478 = sphi 0, %s464
    %s482 = sphi 0, %s482
    %s484 = sphi 0, %s482
    %s485 = sphi 0, %s484
    %s499 = sphi 0, %s485
    %s505 = sphi 0, %s507
    %s508 = sphi 0, %s505
    %s509 = sphi 0, %s508
    %s525 = sphi 0, %s509
  $region4: #{rdbs_forward.1} parent=0 // loop_header_branch
    %31 = sbr.rel (%p29) target = $region8
  $region5: #{rdbs_forward.1} parent=0 // loop_body
    %s33 = ssub.s32 %s28, 1
    %s34 = ssub.s32 %s28, 2
    %s35 = sadd.s32 %s28, 1
    %s36 = ssub.s32 %s28, %s35
    %p37 = scmp.eq.s32.totalorder %s36, 0
    %s39 = sadd.s32 %s38, 1
    %s40 = scalar_select %p37, %s38, %s39
    %p43 = pneg %p37
    %p44 = scmp.eq.s32.totalorder %s28, 1
    %p45 = por %p43, %p44
    %p46 = scmp.ne.s32.totalorder %s38, %s41
    %p47 = scmp.eq.s32.totalorder %s28, 0
    %p48 = por %p46, %p47
    %p49 = scmp.ne.s32.totalorder %s38, %s41
    %p50 = scmp.eq.s32.totalorder %s33, 1
    %p51 = por %p49, %p50
    %p52 = scmp.ne.s32.totalorder %s41, %s42
    %p53 = scmp.eq.s32.totalorder %s33, 0
    %p54 = por %p52, %p53
    %p55 = scmp.ne.s32.totalorder %s41, %s42
    %p56 = scmp.eq.s32.totalorder %s34, 1
    %p57 = por %p55, %p56
    %p59 = scmp.ne.s32.totalorder %s42, %s58
    %p60 = scmp.eq.s32.totalorder %s34, 0
    %p61 = por %p59, %p60
    %s63 = sadd.s32 %s62, 1
    %p66 = scmp.eq.s32.totalorder %s28, 1
    %p67 = scmp.ne.s32.totalorder %s62, %s64
    %p68 = scmp.eq.s32.totalorder %s28, 0
    %p69 = por %p67, %p68
    %p70 = scmp.ne.s32.totalorder %s62, %s64
    %p71 = scmp.eq.s32.totalorder %s33, 1
    %p72 = por %p70, %p71
    %p73 = scmp.ne.s32.totalorder %s64, %s65
    %p74 = scmp.eq.s32.totalorder %s33, 0
    %p75 = por %p73, %p74
    %p76 = scmp.ne.s32.totalorder %s64, %s65
    %p77 = scmp.eq.s32.totalorder %s34, 1
    %p78 = por %p76, %p77
    %p80 = scmp.ne.s32.totalorder %s65, %s79
    %p81 = scmp.eq.s32.totalorder %s34, 0
    %p82 = por %p80, %p81
    %s84 = sadd.s32 %s83, 1
    %p87 = scmp.eq.s32.totalorder %s28, 1
    %p88 = scmp.ne.s32.totalorder %s83, %s85
    %p89 = scmp.eq.s32.totalorder %s28, 0
    %p90 = por %p88, %p89
    %p91 = scmp.ne.s32.totalorder %s83, %s85
    %p92 = scmp.eq.s32.totalorder %s33, 1
    %p93 = por %p91, %p92
    %p94 = scmp.ne.s32.totalorder %s85, %s86
    %p95 = scmp.eq.s32.totalorder %s33, 0
    %p96 = por %p94, %p95
    %p97 = scmp.ne.s32.totalorder %s85, %s86
    %p98 = scmp.eq.s32.totalorder %s34, 1
    %p99 = por %p97, %p98
    %p101 = scmp.ne.s32.totalorder %s86, %s100
    %p102 = scmp.eq.s32.totalorder %s34, 0
    %p103 = por %p101, %p102
    %s105 = sadd.s32 %s104, 1
    %p108 = scmp.eq.s32.totalorder %s28, 1
    %p109 = scmp.ne.s32.totalorder %s104, %s106
    %p110 = scmp.eq.s32.totalorder %s28, 0
    %p111 = por %p109, %p110
    %p112 = scmp.ne.s32.totalorder %s104, %s106
    %p113 = scmp.eq.s32.totalorder %s33, 1
    %p114 = por %p112, %p113
    %p115 = scmp.ne.s32.totalorder %s106, %s107
    %p116 = scmp.eq.s32.totalorder %s33, 0
    %p117 = por %p115, %p116
    %p118 = scmp.ne.s32.totalorder %s106, %s107
    %p119 = scmp.eq.s32.totalorder %s34, 1
    %p120 = por %p118, %p119
    %p122 = scmp.ne.s32.totalorder %s107, %s121
    %p123 = scmp.eq.s32.totalorder %s34, 0
    %p124 = por %p122, %p123
    %s126 = sadd.s32 %s125, 1
    %p129 = scmp.eq.s32.totalorder %s28, 1
    %p130 = scmp.ne.s32.totalorder %s125, %s127
    %p131 = scmp.eq.s32.totalorder %s28, 0
    %p132 = por %p130, %p131
    %p133 = scmp.ne.s32.totalorder %s125, %s127
    %p134 = scmp.eq.s32.totalorder %s33, 1
    %p135 = por %p133, %p134
    %p136 = scmp.ne.s32.totalorder %s127, %s128
    %p137 = scmp.eq.s32.totalorder %s33, 0
    %p138 = por %p136, %p137
    %p139 = scmp.ne.s32.totalorder %s127, %s128
    %p140 = scmp.eq.s32.totalorder %s34, 1
    %p141 = por %p139, %p140
    %p143 = scmp.ne.s32.totalorder %s128, %s142
    %p144 = scmp.eq.s32.totalorder %s34, 0
    %p145 = por %p143, %p144
    %s147 = sadd.s32 %s146, 1
    %p150 = scmp.eq.s32.totalorder %s28, 1
    %p151 = scmp.ne.s32.totalorder %s146, %s148
    %p152 = scmp.eq.s32.totalorder %s28, 0
    %p153 = por %p151, %p152
    %p154 = scmp.ne.s32.totalorder %s146, %s148
    %p155 = scmp.eq.s32.totalorder %s33, 1
    %p156 = por %p154, %p155
    %p157 = scmp.ne.s32.totalorder %s148, %s149
    %p158 = scmp.eq.s32.totalorder %s33, 0
    %p159 = por %p157, %p158
    %p160 = scmp.ne.s32.totalorder %s148, %s149
    %p161 = scmp.eq.s32.totalorder %s34, 1
    %p162 = por %p160, %p161
    %p164 = scmp.ne.s32.totalorder %s149, %s163
    %p165 = scmp.eq.s32.totalorder %s34, 0
    %p166 = por %p164, %p165
    %s168 = sadd.s32 %s167, 1
    %p171 = scmp.eq.s32.totalorder %s28, 1
    %p172 = scmp.ne.s32.totalorder %s167, %s169
    %p173 = scmp.eq.s32.totalorder %s28, 0
    %p174 = por %p172, %p173
    %p175 = scmp.ne.s32.totalorder %s167, %s169
    %p176 = scmp.eq.s32.totalorder %s33, 1
    %p177 = por %p175, %p176
    %p178 = scmp.ne.s32.totalorder %s169, %s170
    %p179 = scmp.eq.s32.totalorder %s33, 0
    %p180 = por %p178, %p179
    %p181 = scmp.ne.s32.totalorder %s169, %s170
    %p182 = scmp.eq.s32.totalorder %s34, 1
    %p183 = por %p181, %p182
    %p185 = scmp.ne.s32.totalorder %s170, %s184
    %p186 = scmp.eq.s32.totalorder %s34, 0
    %p187 = por %p185, %p186
    %s189 = sadd.s32 %s188, 1
    %p192 = scmp.eq.s32.totalorder %s28, 1
    %p193 = scmp.ne.s32.totalorder %s188, %s190
    %p194 = scmp.eq.s32.totalorder %s28, 0
    %p195 = por %p193, %p194
    %p196 = scmp.ne.s32.totalorder %s188, %s190
    %p197 = scmp.eq.s32.totalorder %s33, 1
    %p198 = por %p196, %p197
    %p199 = scmp.ne.s32.totalorder %s190, %s191
    %p200 = scmp.eq.s32.totalorder %s33, 0
    %p201 = por %p199, %p200
    %p202 = scmp.ne.s32.totalorder %s190, %s191
    %p203 = scmp.eq.s32.totalorder %s34, 1
    %p204 = por %p202, %p203
    %p206 = scmp.ne.s32.totalorder %s191, %s205
    %p207 = scmp.eq.s32.totalorder %s34, 0
    %p208 = por %p206, %p207
    %s210 = sadd.s32 %s209, 1
    %p213 = scmp.eq.s32.totalorder %s28, 1
    %p214 = scmp.ne.s32.totalorder %s209, %s211
    %p215 = scmp.eq.s32.totalorder %s28, 0
    %p216 = por %p214, %p215
    %p217 = scmp.ne.s32.totalorder %s209, %s211
    %p218 = scmp.eq.s32.totalorder %s33, 1
    %p219 = por %p217, %p218
    %p220 = scmp.ne.s32.totalorder %s211, %s212
    %p221 = scmp.eq.s32.totalorder %s33, 0
    %p222 = por %p220, %p221
    %p223 = scmp.ne.s32.totalorder %s211, %s212
    %p224 = scmp.eq.s32.totalorder %s34, 1
    %p225 = por %p223, %p224
    %p227 = scmp.ne.s32.totalorder %s212, %s226
    %p228 = scmp.eq.s32.totalorder %s34, 0
    %p229 = por %p227, %p228
    %s231 = sadd.s32 %s230, 1
    %p234 = scmp.eq.s32.totalorder %s28, 1
    %p235 = scmp.ne.s32.totalorder %s230, %s232
    %p236 = scmp.eq.s32.totalorder %s28, 0
    %p237 = por %p235, %p236
    %p238 = scmp.ne.s32.totalorder %s230, %s232
    %p239 = scmp.eq.s32.totalorder %s33, 1
    %p240 = por %p238, %p239
    %p241 = scmp.ne.s32.totalorder %s232, %s233
    %p242 = scmp.eq.s32.totalorder %s33, 0
    %p243 = por %p241, %p242
    %p244 = scmp.ne.s32.totalorder %s232, %s233
    %p245 = scmp.eq.s32.totalorder %s34, 1
    %p246 = por %p244, %p245
    %p248 = scmp.ne.s32.totalorder %s233, %s247
    %p249 = scmp.eq.s32.totalorder %s34, 0
    %p250 = por %p248, %p249
    %s252 = sadd.s32 %s251, 1
    %p255 = scmp.eq.s32.totalorder %s28, 1
    %p256 = scmp.ne.s32.totalorder %s251, %s253
    %p257 = scmp.eq.s32.totalorder %s28, 0
    %p258 = por %p256, %p257
    %p259 = scmp.ne.s32.totalorder %s251, %s253
    %p260 = scmp.eq.s32.totalorder %s33, 1
    %p261 = por %p259, %p260
    %p262 = scmp.ne.s32.totalorder %s253, %s254
    %p263 = scmp.eq.s32.totalorder %s33, 0
    %p264 = por %p262, %p263
    %p265 = scmp.ne.s32.totalorder %s253, %s254
    %p266 = scmp.eq.s32.totalorder %s34, 1
    %p267 = por %p265, %p266
    %p269 = scmp.ne.s32.totalorder %s254, %s268
    %p270 = scmp.eq.s32.totalorder %s34, 0
    %p271 = por %p269, %p270
    %s273 = sadd.s32 %s272, 1
    %p276 = scmp.eq.s32.totalorder %s28, 1
    %p277 = scmp.ne.s32.totalorder %s272, %s274
    %p278 = scmp.eq.s32.totalorder %s28, 0
    %p279 = por %p277, %p278
    %p280 = scmp.ne.s32.totalorder %s272, %s274
    %p281 = scmp.eq.s32.totalorder %s33, 1
    %p282 = por %p280, %p281
    %p283 = scmp.ne.s32.totalorder %s274, %s275
    %p284 = scmp.eq.s32.totalorder %s33, 0
    %p285 = por %p283, %p284
    %p286 = scmp.ne.s32.totalorder %s274, %s275
    %p287 = scmp.eq.s32.totalorder %s34, 1
    %p288 = por %p286, %p287
    %p290 = scmp.ne.s32.totalorder %s275, %s289
    %p291 = scmp.eq.s32.totalorder %s34, 0
    %p292 = por %p290, %p291
    %s294 = sadd.s32 %s293, 1
    %p297 = scmp.eq.s32.totalorder %s28, 1
    %p298 = scmp.ne.s32.totalorder %s293, %s295
    %p299 = scmp.eq.s32.totalorder %s28, 0
    %p300 = por %p298, %p299
    %p301 = scmp.ne.s32.totalorder %s293, %s295
    %p302 = scmp.eq.s32.totalorder %s33, 1
    %p303 = por %p301, %p302
    %p304 = scmp.ne.s32.totalorder %s295, %s296
    %p305 = scmp.eq.s32.totalorder %s33, 0
    %p306 = por %p304, %p305
    %p307 = scmp.ne.s32.totalorder %s295, %s296
    %p308 = scmp.eq.s32.totalorder %s34, 1
    %p309 = por %p307, %p308
    %p311 = scmp.ne.s32.totalorder %s296, %s310
    %p312 = scmp.eq.s32.totalorder %s34, 0
    %p313 = por %p311, %p312
    %s315 = sadd.s32 %s314, 1
    %p318 = scmp.eq.s32.totalorder %s28, 1
    %p319 = scmp.ne.s32.totalorder %s314, %s316
    %p320 = scmp.eq.s32.totalorder %s28, 0
    %p321 = por %p319, %p320
    %p322 = scmp.ne.s32.totalorder %s314, %s316
    %p323 = scmp.eq.s32.totalorder %s33, 1
    %p324 = por %p322, %p323
    %p325 = scmp.ne.s32.totalorder %s316, %s317
    %p326 = scmp.eq.s32.totalorder %s33, 0
    %p327 = por %p325, %p326
    %p328 = scmp.ne.s32.totalorder %s316, %s317
    %p329 = scmp.eq.s32.totalorder %s34, 1
    %p330 = por %p328, %p329
    %p332 = scmp.ne.s32.totalorder %s317, %s331
    %p333 = scmp.eq.s32.totalorder %s34, 0
    %p334 = por %p332, %p333
    %s336 = sadd.s32 %s335, 1
    %p339 = scmp.eq.s32.totalorder %s28, 1
    %p340 = scmp.ne.s32.totalorder %s335, %s337
    %p341 = scmp.eq.s32.totalorder %s28, 0
    %p342 = por %p340, %p341
    %p343 = scmp.ne.s32.totalorder %s335, %s337
    %p344 = scmp.eq.s32.totalorder %s33, 1
    %p345 = por %p343, %p344
    %p346 = scmp.ne.s32.totalorder %s337, %s338
    %p347 = scmp.eq.s32.totalorder %s33, 0
    %p348 = por %p346, %p347
    %p349 = scmp.ne.s32.totalorder %s337, %s338
    %p350 = scmp.eq.s32.totalorder %s34, 1
    %p351 = por %p349, %p350
    %p353 = scmp.ne.s32.totalorder %s338, %s352
    %p354 = scmp.eq.s32.totalorder %s34, 0
    %p355 = por %p353, %p354
    %s357 = sadd.s32 %s356, 1
    %p360 = scmp.eq.s32.totalorder %s28, 1
    %p361 = scmp.ne.s32.totalorder %s356, %s358
    %p362 = scmp.eq.s32.totalorder %s28, 0
    %p363 = por %p361, %p362
    %p364 = scmp.ne.s32.totalorder %s356, %s358
    %p365 = scmp.eq.s32.totalorder %s33, 1
    %p366 = por %p364, %p365
    %p367 = scmp.ne.s32.totalorder %s358, %s359
    %p368 = scmp.eq.s32.totalorder %s33, 0
    %p369 = por %p367, %p368
    %p370 = scmp.ne.s32.totalorder %s358, %s359
    %p371 = scmp.eq.s32.totalorder %s34, 1
    %p372 = por %p370, %p371
    %p374 = scmp.ne.s32.totalorder %s359, %s373
    %p375 = scmp.eq.s32.totalorder %s34, 0
    %p376 = por %p374, %p375
    %s378 = sadd.s32 %s377, 1
    %p381 = scmp.eq.s32.totalorder %s28, 1
    %p382 = scmp.ne.s32.totalorder %s377, %s379
    %p383 = scmp.eq.s32.totalorder %s28, 0
    %p384 = por %p382, %p383
    %p385 = scmp.ne.s32.totalorder %s377, %s379
    %p386 = scmp.eq.s32.totalorder %s33, 1
    %p387 = por %p385, %p386
    %p388 = scmp.ne.s32.totalorder %s379, %s380
    %p389 = scmp.eq.s32.totalorder %s33, 0
    %p390 = por %p388, %p389
    %p391 = scmp.ne.s32.totalorder %s379, %s380
    %p392 = scmp.eq.s32.totalorder %s34, 1
    %p393 = por %p391, %p392
    %p395 = scmp.ne.s32.totalorder %s380, %s394
    %p396 = scmp.eq.s32.totalorder %s34, 0
    %p397 = por %p395, %p396
    %s399 = sadd.s32 %s398, 1
    %p402 = scmp.eq.s32.totalorder %s28, 1
    %p403 = scmp.ne.s32.totalorder %s398, %s400
    %p404 = scmp.eq.s32.totalorder %s28, 0
    %p405 = por %p403, %p404
    %p406 = scmp.ne.s32.totalorder %s398, %s400
    %p407 = scmp.eq.s32.totalorder %s33, 1
    %p408 = por %p406, %p407
    %p409 = scmp.ne.s32.totalorder %s400, %s401
    %p410 = scmp.eq.s32.totalorder %s33, 0
    %p411 = por %p409, %p410
    %p412 = scmp.ne.s32.totalorder %s400, %s401
    %p413 = scmp.eq.s32.totalorder %s34, 1
    %p414 = por %p412, %p413
    %p416 = scmp.ne.s32.totalorder %s401, %s415
    %p417 = scmp.eq.s32.totalorder %s34, 0
    %p418 = por %p416, %p417
    %s420 = sadd.s32 %s419, 1
    %p423 = scmp.eq.s32.totalorder %s28, 1
    %p424 = scmp.ne.s32.totalorder %s419, %s421
    %p425 = scmp.eq.s32.totalorder %s28, 0
    %p426 = por %p424, %p425
    %p427 = scmp.ne.s32.totalorder %s419, %s421
    %p428 = scmp.eq.s32.totalorder %s33, 1
    %p429 = por %p427, %p428
    %p430 = scmp.ne.s32.totalorder %s421, %s422
    %p431 = scmp.eq.s32.totalorder %s33, 0
    %p432 = por %p430, %p431
    %p433 = scmp.ne.s32.totalorder %s421, %s422
    %p434 = scmp.eq.s32.totalorder %s34, 1
    %p435 = por %p433, %p434
    %p437 = scmp.ne.s32.totalorder %s422, %s436
    %p438 = scmp.eq.s32.totalorder %s34, 0
    %p439 = por %p437, %p438
    %s441 = sadd.s32 %s440, 1
    %p444 = scmp.eq.s32.totalorder %s28, 1
    %p445 = scmp.ne.s32.totalorder %s440, %s442
    %p446 = scmp.eq.s32.totalorder %s28, 0
    %p447 = por %p445, %p446
    %p448 = scmp.ne.s32.totalorder %s440, %s442
    %p449 = scmp.eq.s32.totalorder %s33, 1
    %p450 = por %p448, %p449
    %p451 = scmp.ne.s32.totalorder %s442, %s443
    %p452 = scmp.eq.s32.totalorder %s33, 0
    %p453 = por %p451, %p452
    %p454 = scmp.ne.s32.totalorder %s442, %s443
    %p455 = scmp.eq.s32.totalorder %s34, 1
    %p456 = por %p454, %p455
    %p458 = scmp.ne.s32.totalorder %s443, %s457
    %p459 = scmp.eq.s32.totalorder %s34, 0
    %p460 = por %p458, %p459
    %s462 = sadd.s32 %s461, 1
    %p465 = scmp.eq.s32.totalorder %s28, 1
    %p466 = scmp.ne.s32.totalorder %s461, %s463
    %p467 = scmp.eq.s32.totalorder %s28, 0
    %p468 = por %p466, %p467
    %p469 = scmp.ne.s32.totalorder %s461, %s463
    %p470 = scmp.eq.s32.totalorder %s33, 1
    %p471 = por %p469, %p470
    %p472 = scmp.ne.s32.totalorder %s463, %s464
    %p473 = scmp.eq.s32.totalorder %s33, 0
    %p474 = por %p472, %p473
    %p475 = scmp.ne.s32.totalorder %s463, %s464
    %p476 = scmp.eq.s32.totalorder %s34, 1
    %p477 = por %p475, %p476
    %p479 = scmp.ne.s32.totalorder %s464, %s478
    %p480 = scmp.eq.s32.totalorder %s34, 0
    %p481 = por %p479, %p480
    %s483 = sadd.s32 %s482, 1
    %p486 = scmp.eq.s32.totalorder %s28, 1
    %p487 = scmp.ne.s32.totalorder %s482, %s484
    %p488 = scmp.eq.s32.totalorder %s28, 0
    %p489 = por %p487, %p488
    %p490 = scmp.ne.s32.totalorder %s482, %s484
    %p491 = scmp.eq.s32.totalorder %s33, 1
    %p492 = por %p490, %p491
    %p493 = scmp.ne.s32.totalorder %s484, %s485
    %p494 = scmp.eq.s32.totalorder %s33, 0
    %p495 = por %p493, %p494
    %p496 = scmp.ne.s32.totalorder %s484, %s485
    %p497 = scmp.eq.s32.totalorder %s34, 1
    %p498 = por %p496, %p497
    %p500 = scmp.ne.s32.totalorder %s485, %s499
    %p501 = scmp.eq.s32.totalorder %s34, 0
    %p502 = por %p500, %p501
    %s503 = ssub.s32 %s28, %s35
    %p504 = scmp.eq.s32.totalorder %s503, 0
    %s506 = sadd.s32 %s505, 1
    %s507 = scalar_select %p504, %s505, %s506
    %p510 = pneg %p504
    %p511 = scmp.eq.s32.totalorder %s28, 1
    %p512 = por %p510, %p511
    %p513 = scmp.ne.s32.totalorder %s505, %s508
    %p514 = scmp.eq.s32.totalorder %s28, 0
    %p515 = por %p513, %p514
    %p516 = scmp.ne.s32.totalorder %s505, %s508
    %p517 = scmp.eq.s32.totalorder %s33, 1
    %p518 = por %p516, %p517
    %p519 = scmp.ne.s32.totalorder %s508, %s509
    %p520 = scmp.eq.s32.totalorder %s33, 0
    %p521 = por %p519, %p520
    %p522 = scmp.ne.s32.totalorder %s508, %s509
    %p523 = scmp.eq.s32.totalorder %s34, 1
    %p524 = por %p522, %p523
    %p526 = scmp.ne.s32.totalorder %s509, %s525
    %p527 = scmp.eq.s32.totalorder %s34, 0
    %p528 = por %p526, %p527
    %p529 = scmp.le.s32.totalorder 1, %s28
    %p530 = scmp.lt.s32.totalorder %s28, 3
    %p531 = pnand %p529, %p530
    %p532 = pneg %p531
    // Predicated region
    $region9: #{rdbs_forward.1} parent=5 // pred_check
      _
    $region10: #{rdbs_forward.1} parent=5 // pred_check_branch
      %534 = sbr.rel (%p531) target = $region12
    $region11: #{rdbs_forward.1} parent=5 // pred_region
      %s535 = ssub.s32 %s28, 1
      // Predicated region
      $region13: #{rdbs_forward.1} parent=11 // pred_check
        %p536 = pneg %p75
      $region14: #{rdbs_forward.1} parent=11 // pred_check_branch
        %538 = sbr.rel (%p536) target = $region16
      $region15: #{rdbs_forward.1} parent=11 // pred_region
        _
      $region16: #{rdbs_forward.1} parent=11 // pred_fallthru
        _
      // Predicated region
      $region17: #{rdbs_forward.1} parent=11 // pred_check
        %p539 = pneg %p96
      $region18: #{rdbs_forward.1} parent=11 // pred_check_branch
        %541 = sbr.rel (%p539) target = $region20
      $region19: #{rdbs_forward.1} parent=11 // pred_region
        _
      $region20: #{rdbs_forward.1} parent=11 // pred_fallthru
        _
      // Predicated region
      $region21: #{rdbs_forward.1} parent=11 // pred_check
        %p542 = pneg %p117
      $region22: #{rdbs_forward.1} parent=11 // pred_check_branch
        %544 = sbr.rel (%p542) target = $region24
      $region23: #{rdbs_forward.1} parent=11 // pred_region
        _
      $region24: #{rdbs_forward.1} parent=11 // pred_fallthru
        _
      // Predicated region
      $region25: #{rdbs_forward.1} parent=11 // pred_check
        %p545 = pneg %p138
      $region26: #{rdbs_forward.1} parent=11 // pred_check_branch
        %547 = sbr.rel (%p545) target = $region28
      $region27: #{rdbs_forward.1} parent=11 // pred_region
        _
      $region28: #{rdbs_forward.1} parent=11 // pred_fallthru
        _
      // Predicated region
      $region29: #{rdbs_forward.1} parent=11 // pred_check
        %p548 = pneg %p159
      $region30: #{rdbs_forward.1} parent=11 // pred_check_branch
        %550 = sbr.rel (%p548) target = $region32
      $region31: #{rdbs_forward.1} parent=11 // pred_region
        _
      $region32: #{rdbs_forward.1} parent=11 // pred_fallthru
        _
      // Predicated region
      $region33: #{rdbs_forward.1} parent=11 // pred_check
        %p551 = pneg %p180
      $region34: #{rdbs_forward.1} parent=11 // pred_check_branch
        %553 = sbr.rel (%p551) target = $region36
      $region35: #{rdbs_forward.1} parent=11 // pred_region
        _
      $region36: #{rdbs_forward.1} parent=11 // pred_fallthru
        _
      // Predicated region
      $region37: #{rdbs_forward.1} parent=11 // pred_check
        %p554 = pneg %p201
      $region38: #{rdbs_forward.1} parent=11 // pred_check_branch
        %556 = sbr.rel (%p554) target = $region40
      $region39: #{rdbs_forward.1} parent=11 // pred_region
        _
      $region40: #{rdbs_forward.1} parent=11 // pred_fallthru
        _
      // Predicated region
      $region41: #{rdbs_forward.1} parent=11 // pred_check
        %p557 = pneg %p222
      $region42: #{rdbs_forward.1} parent=11 // pred_check_branch
        %559 = sbr.rel (%p557) target = $region44
      $region43: #{rdbs_forward.1} parent=11 // pred_region
        _
      $region44: #{rdbs_forward.1} parent=11 // pred_fallthru
        _
      // Predicated region
      $region45: #{rdbs_forward.1} parent=11 // pred_check
        %p560 = pneg %p243
      $region46: #{rdbs_forward.1} parent=11 // pred_check_branch
        %562 = sbr.rel (%p560) target = $region48
      $region47: #{rdbs_forward.1} parent=11 // pred_region
        _
      $region48: #{rdbs_forward.1} parent=11 // pred_fallthru
        _
      // Predicated region
      $region49: #{rdbs_forward.1} parent=11 // pred_check
        %p563 = pneg %p264
      $region50: #{rdbs_forward.1} parent=11 // pred_check_branch
        %565 = sbr.rel (%p563) target = $region52
      $region51: #{rdbs_forward.1} parent=11 // pred_region
        _
      $region52: #{rdbs_forward.1} parent=11 // pred_fallthru
        _
      // Predicated region
      $region53: #{rdbs_forward.1} parent=11 // pred_check
        %p566 = pneg %p285
      $region54: #{rdbs_forward.1} parent=11 // pred_check_branch
        %568 = sbr.rel (%p566) target = $region56
      $region55: #{rdbs_forward.1} parent=11 // pred_region
        _
      $region56: #{rdbs_forward.1} parent=11 // pred_fallthru
        _
      // Predicated region
      $region57: #{rdbs_forward.1} parent=11 // pred_check
        %p569 = pneg %p306
      $region58: #{rdbs_forward.1} parent=11 // pred_check_branch
        %571 = sbr.rel (%p569) target = $region60
      $region59: #{rdbs_forward.1} parent=11 // pred_region
        _
      $region60: #{rdbs_forward.1} parent=11 // pred_fallthru
        _
      // Predicated region
      $region61: #{rdbs_forward.1} parent=11 // pred_check
        %p572 = pneg %p327
      $region62: #{rdbs_forward.1} parent=11 // pred_check_branch
        %574 = sbr.rel (%p572) target = $region64
      $region63: #{rdbs_forward.1} parent=11 // pred_region
        _
      $region64: #{rdbs_forward.1} parent=11 // pred_fallthru
        _
      // Predicated region
      $region65: #{rdbs_forward.1} parent=11 // pred_check
        %p575 = pneg %p348
      $region66: #{rdbs_forward.1} parent=11 // pred_check_branch
        %577 = sbr.rel (%p575) target = $region68
      $region67: #{rdbs_forward.1} parent=11 // pred_region
        _
      $region68: #{rdbs_forward.1} parent=11 // pred_fallthru
        _
      // Predicated region
      $region69: #{rdbs_forward.1} parent=11 // pred_check
        %p578 = pneg %p369
      $region70: #{rdbs_forward.1} parent=11 // pred_check_branch
        %580 = sbr.rel (%p578) target = $region72
      $region71: #{rdbs_forward.1} parent=11 // pred_region
        _
      $region72: #{rdbs_forward.1} parent=11 // pred_fallthru
        _
      // Predicated region
      $region73: #{rdbs_forward.1} parent=11 // pred_check
        %p581 = pneg %p390
      $region74: #{rdbs_forward.1} parent=11 // pred_check_branch
        %583 = sbr.rel (%p581) target = $region76
      $region75: #{rdbs_forward.1} parent=11 // pred_region
        _
      $region76: #{rdbs_forward.1} parent=11 // pred_fallthru
        _
      // Predicated region
      $region77: #{rdbs_forward.1} parent=11 // pred_check
        %p584 = pneg %p411
      $region78: #{rdbs_forward.1} parent=11 // pred_check_branch
        %586 = sbr.rel (%p584) target = $region80
      $region79: #{rdbs_forward.1} parent=11 // pred_region
        _
      $region80: #{rdbs_forward.1} parent=11 // pred_fallthru
        _
      // Predicated region
      $region81: #{rdbs_forward.1} parent=11 // pred_check
        %p587 = pneg %p432
      $region82: #{rdbs_forward.1} parent=11 // pred_check_branch
        %589 = sbr.rel (%p587) target = $region84
      $region83: #{rdbs_forward.1} parent=11 // pred_region
        _
      $region84: #{rdbs_forward.1} parent=11 // pred_fallthru
        _
      // Predicated region
      $region85: #{rdbs_forward.1} parent=11 // pred_check
        %p590 = pneg %p453
      $region86: #{rdbs_forward.1} parent=11 // pred_check_branch
        %592 = sbr.rel (%p590) target = $region88
      $region87: #{rdbs_forward.1} parent=11 // pred_region
        _
      $region88: #{rdbs_forward.1} parent=11 // pred_fallthru
        _
      // Predicated region
      $region89: #{rdbs_forward.1} parent=11 // pred_check
        %p593 = pneg %p474
      $region90: #{rdbs_forward.1} parent=11 // pred_check_branch
        %595 = sbr.rel (%p593) target = $region92
      $region91: #{rdbs_forward.1} parent=11 // pred_region
        _
      $region92: #{rdbs_forward.1} parent=11 // pred_fallthru
        _
      // Predicated region
      $region93: #{rdbs_forward.1} parent=11 // pred_check
        %p596 = pneg %p495
      $region94: #{rdbs_forward.1} parent=11 // pred_check_branch
        %598 = sbr.rel (%p596) target = $region96
      $region95: #{rdbs_forward.1} parent=11 // pred_region
        _
      $region96: #{rdbs_forward.1} parent=11 // pred_fallthru
        _
    $region12: #{rdbs_forward.1} parent=5 // pred_fallthru
      _
    %p599 = scmp.lt.s32.totalorder %s28, 2
    // Predicated region
    $region97: #{rdbs_forward.1} parent=5 // pred_check
      %p600 = pneg %p599
    $region98: #{rdbs_forward.1} parent=5 // pred_check_branch
      %602 = sbr.rel (%p600) target = $region100
    $region99: #{rdbs_forward.1} parent=5 // pred_region
      // Predicated region
      $region101: #{rdbs_forward.1} parent=99 // pred_check
        %p603 = pneg %p48
      $region102: #{rdbs_forward.1} parent=99 // pred_check_branch
        %605 = sbr.rel (%p603) target = $region104
      $region103: #{rdbs_forward.1} parent=99 // pred_region
        %p606 = scmp.lt.s32.totalorder %s28, 1
        %s607 = scalar_select %p606, %s28, 1
        %s608 = smul.addr %s607, 2
        %s609 = smul.addr %s608, 4
        %s610 = scalar_lea.vmem %s0, %s609
      $region104: #{rdbs_forward.1} parent=99 // pred_fallthru
        _
    $region100: #{rdbs_forward.1} parent=5 // pred_fallthru
      _
    %p611 = scmp.le.s32.totalorder 1, %s28
    %p612 = scmp.lt.s32.totalorder %s28, 3
    %p613 = pnand %p611, %p612
    %p614 = pneg %p613
    // Predicated region
    $region105: #{rdbs_forward.1} parent=5 // pred_check
      _
    $region106: #{rdbs_forward.1} parent=5 // pred_check_branch
      %616 = sbr.rel (%p613) target = $region108
    $region107: #{rdbs_forward.1} parent=5 // pred_region
      %s617 = ssub.s32 %s28, 1
      %p618 = scmp.lt.s32.totalorder %s33, 1
      %s619 = scalar_select %p618, %s33, 1
      %s620 = smul.addr %s619, 2
      %s621 = smul.addr %s620, 4
      %s622 = scalar_lea.vmem %s0, %s621
      %p623 = pneg %p54
      %p624 = pneg %p51
      %p625 = pneg %p75
      %p626 = pneg %p72
      %p627 = pneg %p96
      %p628 = pneg %p93
      %p629 = pneg %p117
      %p630 = pneg %p114
      %p631 = pneg %p138
      %p632 = pneg %p135
      %p633 = pneg %p159
      %p634 = pneg %p156
      %p635 = pneg %p180
      %p636 = pneg %p177
      %p637 = pneg %p201
      %p638 = pneg %p198
      %p639 = pneg %p222
      %p640 = pneg %p219
      %p641 = pneg %p243
      %p642 = pneg %p240
      %p643 = pneg %p264
      %p644 = pneg %p261
      %p645 = pneg %p285
      %p646 = pneg %p282
      %p647 = pneg %p306
      %p648 = pneg %p303
      %p649 = pneg %p327
      %p650 = pneg %p324
      %p651 = pneg %p348
      %p652 = pneg %p345
      %p653 = pneg %p369
      %p654 = pneg %p366
      %p655 = pneg %p390
      %p656 = pneg %p387
      %p657 = pneg %p411
      %p658 = pneg %p408
      %p659 = pneg %p432
      %p660 = pneg %p429
      %p661 = pneg %p453
      %p662 = pneg %p450
      %p663 = pneg %p474
      %p664 = pneg %p471
      %p665 = pneg %p495
      %p666 = pneg %p492
      %p667 = pneg %p521
      %p668 = pneg %p518
      %p669 = scmp.lt.s32.totalorder %s33, 1
      %s670 = scalar_select %p669, %s33, 1
      %s671 = smul.addr %s670, 2
      %s672 = smul.addr %s671, 4
      %s673 = scalar_lea.vmem %s22, %s672
      %p674 = scmp.lt.s32.totalorder %s33, 1
      %s675 = scalar_select %p674, %s33, 1
      %s676 = smul.addr %s675, 2
      %s677 = smul.addr %s676, 4
      %s678 = scalar_lea.vmem %s0, %s677
      %p679 = scmp.lt.s32.totalorder %s33, 1
      %s680 = scalar_select %p679, %s33, 1
      %s681 = smul.addr %s680, 2
      %s682 = smul.addr %s681, 4
      %s683 = scalar_lea.vmem %s22, %s682
      %v684 = vld [vmem:[%s1] sm:$0x7]
      %685 = vst [vmem:[#allocation2] sm:$0xff] 0.0
      %686 = vst [vmem:[#allocation2 + $0x8] sm:$0xff] 0.0
      %vm687 = vcmask 867328
      %688 = vst.msk [vmem:[#allocation2 + $0x10] sm:$0xff] %vm687, 0.0
      %689 = vst [vmem:[#allocation2 + $0x18] sm:$0xff] 0.0
      %690 = vst [vmem:[#allocation2 + $0x20] sm:$0xff] 0.0
      %691 = vst.msk [vmem:[#allocation2 + $0x28] sm:$0xff] %vm687, 0.0
      %v692 = vld [vmem:[%s678] sm:$0xf]
      %694 = vrot.lane.b32.xlu0 %v692, 38
      %v695 = vpop.permute.xlu0 %694
      %vm697 = vcmask 437552
      %698 = vst.msk [vmem:[#allocation2] sm:$0xf] %vm697, %v695
      %v699 = vld [vmem:[%s678] sm:$0xf]
      %701 = vrot.lane.b32.xlu0 %v699, 40
      %v702 = vpop.permute.xlu0 %701
      %vm704 = vcmask 585152
      %705 = vst.msk [vmem:[#allocation2] sm:$0xf] %vm704, %v702
      %v706 = vld [vmem:[%s678] sm:$0xf]
      %708 = vrot.lane.b32.xlu0 %v706, 42
      %v709 = vpop.permute.xlu0 %708
      %vm711 = vcmask 732752
      %712 = vst.msk [vmem:[#allocation2] sm:$0xf] %vm711, %v709
      %v713 = vld [vmem:[%s678] sm:$0xf]
      %715 = vrot.lane.b32.xlu0 %v713, 44
      %v716 = vpop.permute.xlu0 %715
      %vm718 = vcmask 880352
      %719 = vst.msk [vmem:[#allocation2] sm:$0xf] %vm718, %v716
      %v720 = vld [vmem:[%s678] sm:$0xf]
      %722 = vrot.lane.b32.xlu0 %v720, 46
      %v723 = vpop.permute.xlu0 %722
      %vm725 = vcmask 1027952
      %726 = vst.msk [vmem:[#allocation2] sm:$0xf] %vm725, %v723
      %v727 = vld [vmem:[%s678] sm:$0xf]
      %729 = vrot.lane.b32.xlu0 %v727, 48
      %v730 = vpop.permute.xlu0 %729
      %vm732 = vcmask 125952
      %733 = vst.msk [vmem:[#allocation2 + $0x8] sm:$0xf] %vm732, %v730
      %v734 = vld [vmem:[%s678] sm:$0xf]
      %736 = vrot.lane.b32.xlu0 %v734, 50
      %v737 = vpop.permute.xlu0 %736
      %vm739 = vcmask 273552
      %740 = vst.msk [vmem:[#allocation2 + $0x8] sm:$0xf] %vm739, %v737
      %v741 = vld [vmem:[%s678] sm:$0xf]
      %743 = vrot.lane.b32.xlu0 %v741, 52
      %v744 = vpop.permute.xlu0 %743
      %vm746 = vcmask 421152
      %747 = vst.msk [vmem:[#allocation2 + $0x8] sm:$0xf] %vm746, %v744
      %v748 = vld [vmem:[%s678 + $0x4] sm:$0xf]
      %750 = vrot.lane.b32.xlu0 %v748, 54
      %v751 = vpop.permute.xlu0 %750
      %vm753 = vcmask 568752
      %754 = vst.msk [vmem:[#allocation2 + $0x8] sm:$0xf] %vm753, %v751
      %v755 = vld [vmem:[%s678 + $0x4] sm:$0xf]
      %757 = vrot.lane.b32.xlu0 %v755, 56
      %v758 = vpop.permute.xlu0 %757
      %vm760 = vcmask 716352
      %761 = vst.msk [vmem:[#allocation2 + $0x8] sm:$0xf] %vm760, %v758
      %v762 = vld [vmem:[%s678 + $0x4] sm:$0xf]
      %764 = vrot.lane.b32.xlu0 %v762, 58
      %v765 = vpop.permute.xlu0 %764
      %vm767 = vcmask 863952
      %768 = vst.msk [vmem:[#allocation2 + $0x8] sm:$0xf] %vm767, %v765
      %v769 = vld [vmem:[%s678 + $0x4] sm:$0xf]
      %771 = vrot.lane.b32.xlu0 %v769, 60
      %v772 = vpop.permute.xlu0 %771
      %vm774 = vcmask 1011552
      %775 = vst.msk [vmem:[#allocation2 + $0x8] sm:$0xf] %vm774, %v772
      %v776 = vld [vmem:[%s678 + $0x4] sm:$0xf]
      %778 = vrot.lane.b32.xlu0 %v776, 62
      %v779 = vpop.permute.xlu0 %778
      %vm781 = vcmask 1044464
      %782 = vst.msk [vmem:[#allocation2 + $0x8] sm:$0xf] %vm781, %v779
      %vm783 = vcmask 109568
      %784 = vst.msk [vmem:[#allocation2 + $0x10] sm:$0xf] %vm783, %v779
      %v785 = vld [vmem:[%s678 + $0x4] sm:$0xf]
      %787 = vrot.lane.b32.xlu0 %v785, 64
      %v788 = vpop.permute.xlu0 %787
      %vm790 = vcmask 257152
      %791 = vst.msk [vmem:[#allocation2 + $0x10] sm:$0xf] %vm790, %v788
      %v792 = vld [vmem:[%s678 + $0x4] sm:$0xf]
      %794 = vrot.lane.b32.xlu0 %v792, 66
      %v795 = vpop.permute.xlu0 %794
      %vm797 = vcmask 404752
      %798 = vst.msk [vmem:[#allocation2 + $0x10] sm:$0xf] %vm797, %v795
      %v799 = vld [vmem:[%s678 + $0x4] sm:$0xf]
      %801 = vrot.lane.b32.xlu0 %v799, 68
      %v802 = vpop.permute.xlu0 %801
      %vm804 = vcmask 552352
      %805 = vst.msk [vmem:[#allocation2 + $0x10] sm:$0xf] %vm804, %v802
      %v806 = vld [vmem:[#allocation2] sm:$0xf]
      %v807 = vld [vmem:[#allocation2 + $0x8] sm:$0xf]
      %v808 = vld [vmem:[#allocation2 + $0x10] sm:$0xf]
      %809 = vst [vmem:[#allocation3] sm:$0xf] %v806
      %810 = vst [vmem:[#allocation3 + $0x8] sm:$0xf] %v807
      %vm811 = vcmask 551936
      %812 = vst.msk [vmem:[#allocation3 + $0x10] sm:$0xf] %vm811, %v808
      %v813 = vld [vmem:[#allocation2] sm:$0xf]
      %v814 = vld [vmem:[#allocation2 + $0x8] sm:$0xf]
      %v815 = vld [vmem:[#allocation2 + $0x10] sm:$0xf]
      %v819 = vrot.slane %v813, 4
      %v820 = vrot.slane %v814, 4
      %v821 = vrot.slane %v815, 4
      %822 = vrot.lane.b32.xlu0 %v819, 127
      %v823 = vpop.permute.xlu0 %822
      %824 = vrot.lane.b32.xlu0 %v820, 127
      %v825 = vpop.permute.xlu0 %824
      %826 = vrot.lane.b32.xlu0 %v821, 127
      %v827 = vpop.permute.xlu0 %826
      %vm828 = vcmask 1039360
      %v829 = vsel %vm828, %v823, %v825
      %v830 = vsel %vm828, %v825, %v827
      %834 = vst [vmem:[#allocation3] sm:$0xf0] %v829
      %835 = vst [vmem:[#allocation3 + $0x8] sm:$0xf0] %v830
      %vm836 = vcmask 556036
      %837 = vst.msk [vmem:[#allocation3 + $0x10] sm:$0xf0] %vm836, %v827
      %v838 = vld [vmem:[#allocation2] sm:$0xf]
      %v839 = vld [vmem:[#allocation2 + $0x8] sm:$0xf]
      %v840 = vld [vmem:[#allocation2 + $0x10] sm:$0xf]
      %844 = vrot.lane.b32.xlu0 %v838, 126
      %v845 = vpop.permute.xlu0 %844
      %846 = vrot.lane.b32.xlu0 %v839, 126
      %v847 = vpop.permute.xlu0 %846
      %848 = vrot.lane.b32.xlu0 %v840, 126
      %v849 = vpop.permute.xlu0 %848
      %vm850 = vcmask 1031168
      %v851 = vsel %vm850, %v845, %v847
      %v852 = vsel %vm850, %v847, %v849
      %856 = vst [vmem:[#allocation3 + $0x18] sm:$0xf] %v851
      %857 = vst [vmem:[#allocation3 + $0x20] sm:$0xf] %v852
      %858 = vst.msk [vmem:[#allocation3 + $0x28] sm:$0xf] %vm811, %v849
      %v859 = vld [vmem:[#allocation2] sm:$0xf]
      %v860 = vld [vmem:[#allocation2 + $0x8] sm:$0xf]
      %v861 = vld [vmem:[#allocation2 + $0x10] sm:$0xf]
      %v865 = vrot.slane %v859, 4
      %v866 = vrot.slane %v860, 4
      %v867 = vrot.slane %v861, 4
      %868 = vrot.lane.b32.xlu0 %v865, 110
      %v869 = vpop.permute.xlu0 %868
      %870 = vrot.lane.b32.xlu0 %v866, 110
      %v871 = vpop.permute.xlu0 %870
      %872 = vrot.lane.b32.xlu0 %v867, 110
      %v873 = vpop.permute.xlu0 %872
      %vm874 = vcmask 900096
      %v875 = vsel %vm874, %v869, %v871
      %v876 = vsel %vm874, %v871, %v873
      %880 = vst [vmem:[#allocation3 + $0x18] sm:$0xf0] %v875
      %881 = vst [vmem:[#allocation3 + $0x20] sm:$0xf0] %v876
      %882 = vst.msk [vmem:[#allocation3 + $0x28] sm:$0xf0] %vm836, %v873
      %v883 = vld [vmem:[#allocation2] sm:$0xf]
      %v884 = vld [vmem:[#allocation2 + $0x8] sm:$0xf]
      %v885 = vld [vmem:[#allocation2 + $0x10] sm:$0xf]
      %889 = vrot.lane.b32.xlu0 %v883, 109
      %v890 = vpop.permute.xlu0 %889
      %891 = vrot.lane.b32.xlu0 %v884, 109
      %v892 = vpop.permute.xlu0 %891
      %893 = vrot.lane.b32.xlu0 %v885, 109
      %v894 = vpop.permute.xlu0 %893
      %vm895 = vcmask 891904
      %v896 = vsel %vm895, %v890, %v892
      %v897 = vsel %vm895, %v892, %v894
      %901 = vst [vmem:[#allocation3 + $0x30] sm:$0xf] %v896
      %902 = vst [vmem:[#allocation3 + $0x38] sm:$0xf] %v897
      %903 = vst.msk [vmem:[#allocation3 + $0x40] sm:$0xf] %vm811, %v894
      %v904 = vld [vmem:[#allocation2] sm:$0xf]
      %v905 = vld [vmem:[#allocation2 + $0x8] sm:$0xf]
      %v906 = vld [vmem:[#allocation2 + $0x10] sm:$0xf]
      %v910 = vrot.slane %v904, 4
      %v911 = vrot.slane %v905, 4
      %v912 = vrot.slane %v906, 4
      %913 = vrot.lane.b32.xlu0 %v910, 108
      %v914 = vpop.permute.xlu0 %913
      %915 = vrot.lane.b32.xlu0 %v911, 108
      %v916 = vpop.permute.xlu0 %915
      %917 = vrot.lane.b32.xlu0 %v912, 108
      %v918 = vpop.permute.xlu0 %917
      %vm919 = vcmask 883712
      %v920 = vsel %vm919, %v914, %v916
      %v921 = vsel %vm919, %v916, %v918
      %925 = vst [vmem:[#allocation3 + $0x30] sm:$0xf0] %v920
      %926 = vst [vmem:[#allocation3 + $0x38] sm:$0xf0] %v921
      %927 = vst.msk [vmem:[#allocation3 + $0x40] sm:$0xf0] %vm836, %v918
      %v928 = vld [vmem:[#allocation2] sm:$0xf]
      %v929 = vld [vmem:[#allocation2 + $0x8] sm:$0xf]
      %v930 = vld [vmem:[#allocation2 + $0x10] sm:$0xf]
      %934 = vrot.lane.b32.xlu0 %v928, 92
      %v935 = vpop.permute.xlu0 %934
      %936 = vrot.lane.b32.xlu0 %v929, 92
      %v937 = vpop.permute.xlu0 %936
      %938 = vrot.lane.b32.xlu0 %v930, 92
      %v939 = vpop.permute.xlu0 %938
      %vm940 = vcmask 752640
      %v941 = vsel %vm940, %v935, %v937
      %v942 = vsel %vm940, %v937, %v939
      %946 = vst [vmem:[#allocation3 + $0x48] sm:$0xf] %v941
      %947 = vst [vmem:[#allocation3 + $0x50] sm:$0xf] %v942
      %948 = vst.msk [vmem:[#allocation3 + $0x58] sm:$0xf] %vm811, %v939
      %v949 = vld [vmem:[#allocation2] sm:$0xf]
      %v950 = vld [vmem:[#allocation2 + $0x8] sm:$0xf]
      %v951 = vld [vmem:[#allocation2 + $0x10] sm:$0xf]
      %v955 = vrot.slane %v949, 4
      %v956 = vrot.slane %v950, 4
      %v957 = vrot.slane %v951, 4
      %958 = vrot.lane.b32.xlu0 %v955, 91
      %v959 = vpop.permute.xlu0 %958
      %960 = vrot.lane.b32.xlu0 %v956, 91
      %v961 = vpop.permute.xlu0 %960
      %962 = vrot.lane.b32.xlu0 %v957, 91
      %v963 = vpop.permute.xlu0 %962
      %vm964 = vcmask 744448
      %v965 = vsel %vm964, %v959, %v961
      %v966 = vsel %vm964, %v961, %v963
      %970 = vst [vmem:[#allocation3 + $0x48] sm:$0xf0] %v965
      %971 = vst [vmem:[#allocation3 + $0x50] sm:$0xf0] %v966
      %972 = vst.msk [vmem:[#allocation3 + $0x58] sm:$0xf0] %vm836, %v963
      %v973 = vld [vmem:[#allocation2] sm:$0xf]
      %v974 = vld [vmem:[#allocation2 + $0x8] sm:$0xf]
      %v975 = vld [vmem:[#allocation2 + $0x10] sm:$0xf]
      %979 = vrot.lane.b32.xlu0 %v973, 90
      %v980 = vpop.permute.xlu0 %979
      %981 = vrot.lane.b32.xlu0 %v974, 90
      %v982 = vpop.permute.xlu0 %981
      %983 = vrot.lane.b32.xlu0 %v975, 90
      %v984 = vpop.permute.xlu0 %983
      %vm985 = vcmask 736256
      %v986 = vsel %vm985, %v980, %v982
      %v987 = vsel %vm985, %v982, %v984
      %991 = vst [vmem:[#allocation3 + $0x60] sm:$0xf] %v986
      %992 = vst [vmem:[#allocation3 + $0x68] sm:$0xf] %v987
      %993 = vst.msk [vmem:[#allocation3 + $0x70] sm:$0xf] %vm811, %v984
      %v994 = vld [vmem:[%s2] sm:$0xf]
      %v995 = vld [vmem:[#allocation3] sm:$0xff]
      %v996 = vld [vmem:[#allocation3 + $0x8] sm:$0xff]
      %v997 = vld [vmem:[#allocation3 + $0x10] sm:$0xff]
      %v998 = vld [vmem:[#allocation3 + $0x18] sm:$0xff]
      %v999 = vld [vmem:[#allocation3 + $0x20] sm:$0xff]
      %v1000 = vld [vmem:[#allocation3 + $0x28] sm:$0xff]
      %v1001 = vld [vmem:[#allocation3 + $0x30] sm:$0xff]
      %v1002 = vld [vmem:[#allocation3 + $0x38] sm:$0xff]
      %v1003 = vld [vmem:[#allocation3 + $0x40] sm:$0xff]
      %v1004 = vld [vmem:[#allocation3 + $0x48] sm:$0xff]
      %v1005 = vld [vmem:[#allocation3 + $0x50] sm:$0xff]
      %v1006 = vld [vmem:[#allocation3 + $0x58] sm:$0xff]
      %v1007 = vld [vmem:[#allocation3 + $0x60] sm:$0xf]
      %v1008 = vld [vmem:[#allocation3 + $0x68] sm:$0xf]
      %v1009 = vld [vmem:[#allocation3 + $0x70] sm:$0xf]
      %v1010 = vld [vmem:[%s3] sm:$0xf]
      %1012 = vset.pattern.permute.xlu0 0
      %1013 = vperm.xlu0 %1012, %v1010
      %v1014 = vpop.permute.xlu0 %1013
      %vm1016 = vcmask 293888
      %v1018 = vsel %vm1016, %v994, 0
      %vm1020 = vcmask 1043456
      %v1022 = vsel %vm1020, %v1007, 0
      %v1025 = vsel %vm1020, %v1008, 0
      %v1028 = vsel %vm1020, %v1009, 0
      %1030 = vmatprep.subr.mxu0 0.0
      %1031 = vmatpush1.msra.mxu0 0.0
      %1032 = vmatprep.subr.mxu0 0.0
      %1033 = vmatpush1.msra.mxu0 0.0
      %1034 = vmatprep.subr.mxu0 0.0
      %1035 = vmatpush1.msra.mxu0 0.0
      %1036 = vmatprep.subr.mxu0 0.0
      %1037 = vmatpush1.msra.mxu0 0.0
      %1038 = vmatprep.subr.mxu0 0.0
      %1039 = vmatpush1.msra.mxu0 0.0
      %1040 = vmatprep.subr.mxu0 0.0
      %1041 = vmatpush1.msra.mxu0 0.0
      %1042 = vmatprep.subr.mxu0 0.0
      %1043 = vmatpush1.msra.mxu0 0.0
      %1044 = vmatprep.subr.mxu0 0.0
      %1045 = vmatpush1.msra.mxu0 0.0
      %1046 = vmatprep.subr.mxu0 0.0
      %1047 = vmatpush1.msra.mxu0 0.0
      %1048 = vmatprep.subr.mxu0 0.0
      %1049 = vmatpush1.msra.mxu0 0.0
      %1050 = vmatprep.subr.mxu0 0.0
      %1051 = vmatpush1.msra.mxu0 0.0
      %1052 = vmatprep.subr.mxu0 %v1025
      %1053 = vmatpush1.msra.mxu0 %v1022
      %1054 = vmatprep.subr.mxu0 %v1005
      %1055 = vmatpush1.msra.mxu0 %v1004
      %1056 = vmatprep.subr.mxu0 %v1002
      %1057 = vmatpush1.msra.mxu0 %v1001
      %1058 = vmatprep.subr.mxu0 %v999
      %1059 = vmatpush1.msra.mxu0 %v998
      %1060 = vmatprep.subr.mxu0 %v996
      %1061 = vmatpush1.msra.mxu0 %v995
      %1062 = vmatprep.subr.mxu0 0.0
      %1063 = vmatpush2.msra.mxu0 0.0
      %1064 = vmatprep.subr.mxu0 0.0
      %1065 = vmatpush2.msra.mxu0 0.0
      %1066 = vmatprep.subr.mxu0 0.0
      %1067 = vmatpush2.msra.mxu0 0.0
      %1068 = vmatprep.subr.mxu0 0.0
      %1069 = vmatpush2.msra.mxu0 0.0
      %1070 = vmatprep.subr.mxu0 0.0
      %1071 = vmatpush2.msra.mxu0 0.0
      %1072 = vmatprep.subr.mxu0 0.0
      %1073 = vmatpush2.msra.mxu0 0.0
      %1074 = vmatprep.subr.mxu0 0.0
      %1075 = vmatpush2.msra.mxu0 0.0
      %1076 = vmatprep.subr.mxu0 0.0
      %1077 = vmatpush2.msra.mxu0 0.0
      %1078 = vmatprep.subr.mxu0 0.0
      %1079 = vmatpush2.msra.mxu0 0.0
      %1080 = vmatprep.subr.mxu0 0.0
      %1081 = vmatpush2.msra.mxu0 0.0
      %1082 = vmatprep.subr.mxu0 0.0
      %1083 = vmatpush2.msra.mxu0 0.0
      %1084 = vmatprep.subr.mxu0 0.0
      %1085 = vmatpush2.msra.mxu0 0.0
      %1086 = vmatprep.subr.mxu0 0.0
      %1087 = vmatpush2.msra.mxu0 0.0
      %1088 = vmatprep.subr.mxu0 0.0
      %1089 = vmatpush2.msra.mxu0 0.0
      %1090 = vmatprep.subr.mxu0 0.0
      %1091 = vmatpush2.msra.mxu0 0.0
      %1092 = vmatprep.subr.mxu0 0.0
      %1093 = vmatpush2.msra.mxu0 0.0
      %1094 = vmatprep.mubr.f32.mxu0 0.0
      %1095 = vmatmul.mubr.f32.gmra.mxu0 %v1018
      %v1096 = vpop.f32.mrf.mxu0
      %v1097 = vadd.f32 %v1014, %v1096
      %v1098 = vpop.f32.mrf.mxu0
      %v1099 = vadd.f32 %v1014, %v1098
      %1100 = vdwg.mxu0
      %1101 = vmatprep.subr.mxu0 0.0
      %1102 = vmatpush1.msra.mxu0 0.0
      %1103 = vmatprep.subr.mxu0 0.0
      %1104 = vmatpush1.msra.mxu0 0.0
      %1105 = vmatprep.subr.mxu0 0.0
      %1106 = vmatpush1.msra.mxu0 0.0
      %1107 = vmatprep.subr.mxu0 0.0
      %1108 = vmatpush1.msra.mxu0 0.0
      %1109 = vmatprep.subr.mxu0 0.0
      %1110 = vmatpush1.msra.mxu0 0.0
      %1111 = vmatprep.subr.mxu0 0.0
      %1112 = vmatpush1.msra.mxu0 0.0
      %1113 = vmatprep.subr.mxu0 0.0
      %1114 = vmatpush1.msra.mxu0 0.0
      %1115 = vmatprep.subr.mxu0 0.0
      %1116 = vmatpush1.msra.mxu0 0.0
      %1117 = vmatprep.subr.mxu0 0.0
      %1118 = vmatpush1.msra.mxu0 0.0
      %1119 = vmatprep.subr.mxu0 0.0
      %1120 = vmatpush1.msra.mxu0 0.0
      %1121 = vmatprep.subr.mxu0 0.0
      %1122 = vmatpush1.msra.mxu0 0.0
      %1123 = vmatprep.subr.mxu0 0.0
      %1124 = vmatpush1.msra.mxu0 %v1028
      %1125 = vmatprep.subr.mxu0 0.0
      %1126 = vmatpush1.msra.mxu0 %v1006
      %1127 = vmatprep.subr.mxu0 0.0
      %1128 = vmatpush1.msra.mxu0 %v1003
      %1129 = vmatprep.subr.mxu0 0.0
      %1130 = vmatpush1.msra.mxu0 %v1000
      %1131 = vmatprep.subr.mxu0 0.0
      %1132 = vmatpush1.msra.mxu0 %v997
      %1133 = vmatprep.subr.mxu0 0.0
      %1134 = vmatpush2.msra.mxu0 0.0
      %1135 = vmatprep.subr.mxu0 0.0
      %1136 = vmatpush2.msra.mxu0 0.0
      %1137 = vmatprep.subr.mxu0 0.0
      %1138 = vmatpush2.msra.mxu0 0.0
      %1139 = vmatprep.subr.mxu0 0.0
      %1140 = vmatpush2.msra.mxu0 0.0
      %1141 = vmatprep.subr.mxu0 0.0
      %1142 = vmatpush2.msra.mxu0 0.0
      %1143 = vmatprep.subr.mxu0 0.0
      %1144 = vmatpush2.msra.mxu0 0.0
      %1145 = vmatprep.subr.mxu0 0.0
      %1146 = vmatpush2.msra.mxu0 0.0
      %1147 = vmatprep.subr.mxu0 0.0
      %1148 = vmatpush2.msra.mxu0 0.0
      %1149 = vmatprep.subr.mxu0 0.0
      %1150 = vmatpush2.msra.mxu0 0.0
      %1151 = vmatprep.subr.mxu0 0.0
      %1152 = vmatpush2.msra.mxu0 0.0
      %1153 = vmatprep.subr.mxu0 0.0
      %1154 = vmatpush2.msra.mxu0 0.0
      %1155 = vmatprep.subr.mxu0 0.0
      %1156 = vmatpush2.msra.mxu0 0.0
      %1157 = vmatprep.subr.mxu0 0.0
      %1158 = vmatpush2.msra.mxu0 0.0
      %1159 = vmatprep.subr.mxu0 0.0
      %1160 = vmatpush2.msra.mxu0 0.0
      %1161 = vmatprep.subr.mxu0 0.0
      %1162 = vmatpush2.msra.mxu0 0.0
      %1163 = vmatprep.subr.mxu0 0.0
      %1164 = vmatpush2.msra.mxu0 0.0
      %1165 = vmatprep.mubr.f32.mxu0 0.0
      %1166 = vmatmul.mubr.f32.gmra.mxu0 %v1018
      %v1167 = vpop.f32.mrf.mxu0
      %v1168 = vadd.f32 %v1014, %v1167
      %v1169 = vpop.f32.mrf.mxu0
      %1170 = vdwg.mxu0
      %v1171 = vmax.f32 %v1097, 0.0
      %v1172 = vmax.f32 %v1099, 0.0
      %v1173 = vmax.f32 %v1168, 0.0
      %v1175 = vlaneseq
      %v1176 = vshrl.u32 %v1175, 7
      %v1177 = vsub.s32 0, %v1176
      %v1178 = vrot.slane %v684, %v1177
      %v1179 = vlaneseq
      %v1180 = vshrl.u32 %v1179, 7
      %v1181 = vsub.s32 1, %v1180
      %v1182 = vrot.slane %v684, %v1181
      %v1183 = vlaneseq
      %v1184 = vshrl.u32 %v1183, 7
      %v1185 = vsub.s32 2, %v1184
      %v1186 = vrot.slane %v684, %v1185
      %v1190 = vmul.f32 %v1171, %v1178
      %v1191 = vmul.f32 %v1172, %v1182
      %v1192 = vmul.f32 %v1173, %v1186
      %v1196 = vrot.slane %v1190, 4
      %v1197 = vrot.slane %v1191, 4
      %v1198 = vrot.slane %v1192, 4
      %1199 = vrot.lane.b32.xlu0 %v1196, 19
      %v1200 = vpop.permute.xlu0 %1199
      %1201 = vrot.lane.b32.xlu0 %v1197, 19
      %v1202 = vpop.permute.xlu0 %1201
      %1203 = vrot.lane.b32.xlu0 %v1198, 19
      %v1204 = vpop.permute.xlu0 %1203
      %vm1205 = vcmask 154624
      %v1206 = vsel %vm1205, %v1200, %v1202
      %v1207 = vsel %vm1205, %v1202, %v1204
      %vm1211 = vcmask 1047708
      %1212 = vst.msk [vmem:[#allocation2] sm:$0xf0] %vm1211, %v1200
      %1213 = vst [vmem:[#allocation2 + $0x8] sm:$0xf0] %v1206
      %vm1214 = vcmask 711684
      %1215 = vst.msk [vmem:[#allocation2 + $0x10] sm:$0xf0] %vm1214, %v1207
      %v1216 = vld [vmem:[#allocation2] sm:$0xff]
      %v1217 = vld [vmem:[#allocation2 + $0x8] sm:$0xff]
      %v1218 = vld [vmem:[#allocation2 + $0x10] sm:$0xff]
      %1219 = vst [vmem:[#allocation3] sm:$0xff] %v1216
      %1220 = vst [vmem:[#allocation3 + $0x8] sm:$0xff] %v1217
      %vm1221 = vcmask 556032
      %1222 = vst.msk [vmem:[#allocation3 + $0x10] sm:$0xff] %vm1221, %v1218
      %v1223 = vld [vmem:[#allocation2] sm:$0xff]
      %v1224 = vld [vmem:[#allocation2 + $0x8] sm:$0xff]
      %v1225 = vld [vmem:[#allocation2 + $0x10] sm:$0xff]
      %1229 = vrot.lane.b32.xlu0 %v1223, 127
      %v1230 = vpop.permute.xlu0 %1229
      %1231 = vrot.lane.b32.xlu0 %v1224, 127
      %v1232 = vpop.permute.xlu0 %1231
      %1233 = vrot.lane.b32.xlu0 %v1225, 127
      %v1234 = vpop.permute.xlu0 %1233
      %v1235 = vsel %vm828, %v1230, %v1232
      %v1236 = vsel %vm828, %v1232, %v1234
      %1240 = vst [vmem:[#allocation3 + $0x18] sm:$0xff] %v1235
      %1241 = vst [vmem:[#allocation3 + $0x20] sm:$0xff] %v1236
      %1242 = vst.msk [vmem:[#allocation3 + $0x28] sm:$0xff] %vm1221, %v1234
      %v1243 = vld [vmem:[#allocation2] sm:$0xff]
      %v1244 = vld [vmem:[#allocation2 + $0x8] sm:$0xff]
      %v1245 = vld [vmem:[#allocation2 + $0x10] sm:$0xff]
      %1249 = vrot.lane.b32.xlu0 %v1243, 126
      %v1250 = vpop.permute.xlu0 %1249
      %1251 = vrot.lane.b32.xlu0 %v1244, 126
      %v1252 = vpop.permute.xlu0 %1251
      %1253 = vrot.lane.b32.xlu0 %v1245, 126
      %v1254 = vpop.permute.xlu0 %1253
      %v1255 = vsel %vm850, %v1250, %v1252
      %v1256 = vsel %vm850, %v1252, %v1254
      %1260 = vst [vmem:[#allocation3 + $0x30] sm:$0xff] %v1255
      %1261 = vst [vmem:[#allocation3 + $0x38] sm:$0xff] %v1256
      %1262 = vst.msk [vmem:[#allocation3 + $0x40] sm:$0xff] %vm1221, %v1254
      %v1263 = vld [vmem:[#allocation2] sm:$0xff]
      %v1264 = vld [vmem:[#allocation2 + $0x8] sm:$0xff]
      %v1265 = vld [vmem:[#allocation2 + $0x10] sm:$0xff]
      %1269 = vrot.lane.b32.xlu0 %v1263, 110
      %v1270 = vpop.permute.xlu0 %1269
      %1271 = vrot.lane.b32.xlu0 %v1264, 110
      %v1272 = vpop.permute.xlu0 %1271
      %1273 = vrot.lane.b32.xlu0 %v1265, 110
      %v1274 = vpop.permute.xlu0 %1273
      %v1275 = vsel %vm874, %v1270, %v1272
      %v1276 = vsel %vm874, %v1272, %v1274
      %1280 = vst [vmem:[#allocation3 + $0x48] sm:$0xff] %v1275
      %1281 = vst [vmem:[#allocation3 + $0x50] sm:$0xff] %v1276
      %1282 = vst.msk [vmem:[#allocation3 + $0x58] sm:$0xff] %vm1221, %v1274
      %v1283 = vld [vmem:[#allocation2] sm:$0xff]
      %v1284 = vld [vmem:[#allocation2 + $0x8] sm:$0xff]
      %v1285 = vld [vmem:[#allocation2 + $0x10] sm:$0xff]
      %1289 = vrot.lane.b32.xlu0 %v1283, 109
      %v1290 = vpop.permute.xlu0 %1289
      %1291 = vrot.lane.b32.xlu0 %v1284, 109
      %v1292 = vpop.permute.xlu0 %1291
      %1293 = vrot.lane.b32.xlu0 %v1285, 109
      %v1294 = vpop.permute.xlu0 %1293
      %v1295 = vsel %vm895, %v1290, %v1292
      %v1296 = vsel %vm895, %v1292, %v1294
      %1300 = vst [vmem:[#allocation3 + $0x60] sm:$0xff] %v1295
      %1301 = vst [vmem:[#allocation3 + $0x68] sm:$0xff] %v1296
      %1302 = vst.msk [vmem:[#allocation3 + $0x70] sm:$0xff] %vm1221, %v1294
      %v1303 = vld [vmem:[#allocation2] sm:$0xff]
      %v1304 = vld [vmem:[#allocation2 + $0x8] sm:$0xff]
      %v1305 = vld [vmem:[#allocation2 + $0x10] sm:$0xff]
      %1309 = vrot.lane.b32.xlu0 %v1303, 108
      %v1310 = vpop.permute.xlu0 %1309
      %1311 = vrot.lane.b32.xlu0 %v1304, 108
      %v1312 = vpop.permute.xlu0 %1311
      %1313 = vrot.lane.b32.xlu0 %v1305, 108
      %v1314 = vpop.permute.xlu0 %1313
      %v1315 = vsel %vm919, %v1310, %v1312
      %v1316 = vsel %vm919, %v1312, %v1314
      %1320 = vst [vmem:[#allocation3 + $0x78] sm:$0xff] %v1315
      %1321 = vst [vmem:[#allocation3 + $0x80] sm:$0xff] %v1316
      %1322 = vst.msk [vmem:[#allocation3 + $0x88] sm:$0xff] %vm1221, %v1314
      %v1323 = vld [vmem:[#allocation2] sm:$0xff]
      %v1324 = vld [vmem:[#allocation2 + $0x8] sm:$0xff]
      %v1325 = vld [vmem:[#allocation2 + $0x10] sm:$0xff]
      %1329 = vrot.lane.b32.xlu0 %v1323, 92
      %v1330 = vpop.permute.xlu0 %1329
      %1331 = vrot.lane.b32.xlu0 %v1324, 92
      %v1332 = vpop.permute.xlu0 %1331
      %1333 = vrot.lane.b32.xlu0 %v1325, 92
      %v1334 = vpop.permute.xlu0 %1333
      %v1335 = vsel %vm940, %v1330, %v1332
      %v1336 = vsel %vm940, %v1332, %v1334
      %1340 = vst [vmem:[#allocation3 + $0x90] sm:$0xff] %v1335
      %1341 = vst [vmem:[#allocation3 + $0x98] sm:$0xff] %v1336
      %1342 = vst.msk [vmem:[#allocation3 + $0xa0] sm:$0xff] %vm1221, %v1334
      %v1343 = vld [vmem:[#allocation2] sm:$0xff]
      %v1344 = vld [vmem:[#allocation2 + $0x8] sm:$0xff]
      %v1345 = vld [vmem:[#allocation2 + $0x10] sm:$0xff]
      %1349 = vrot.lane.b32.xlu0 %v1343, 91
      %v1350 = vpop.permute.xlu0 %1349
      %1351 = vrot.lane.b32.xlu0 %v1344, 91
      %v1352 = vpop.permute.xlu0 %1351
      %1353 = vrot.lane.b32.xlu0 %v1345, 91
      %v1354 = vpop.permute.xlu0 %1353
      %v1355 = vsel %vm964, %v1350, %v1352
      %v1356 = vsel %vm964, %v1352, %v1354
      %1360 = vst [vmem:[#allocation3 + $0xa8] sm:$0xff] %v1355
      %1361 = vst [vmem:[#allocation3 + $0xb0] sm:$0xff] %v1356
      %1362 = vst.msk [vmem:[#allocation3 + $0xb8] sm:$0xff] %vm1221, %v1354
      %v1363 = vld [vmem:[#allocation2] sm:$0xff]
      %v1364 = vld [vmem:[#allocation2 + $0x8] sm:$0xff]
      %v1365 = vld [vmem:[#allocation2 + $0x10] sm:$0xff]
      %1369 = vrot.lane.b32.xlu0 %v1363, 90
      %v1370 = vpop.permute.xlu0 %1369
      %1371 = vrot.lane.b32.xlu0 %v1364, 90
      %v1372 = vpop.permute.xlu0 %1371
      %1373 = vrot.lane.b32.xlu0 %v1365, 90
      %v1374 = vpop.permute.xlu0 %1373
      %v1375 = vsel %vm985, %v1370, %v1372
      %v1376 = vsel %vm985, %v1372, %v1374
      %1380 = vst [vmem:[#allocation3 + $0xc0] sm:$0xff] %v1375
      %1381 = vst [vmem:[#allocation3 + $0xc8] sm:$0xff] %v1376
      %1382 = vst.msk [vmem:[#allocation3 + $0xd0] sm:$0xff] %vm1221, %v1374
      %v1383 = vld [vmem:[%s4] sm:$0xf]
      %v1384 = vld [vmem:[#allocation3] sm:$0xff]
      %v1385 = vld [vmem:[#allocation3 + $0x8] sm:$0xff]
      %v1386 = vld [vmem:[#allocation3 + $0x10] sm:$0xff]
      %v1387 = vld [vmem:[#allocation3 + $0x18] sm:$0xff]
      %v1388 = vld [vmem:[#allocation3 + $0x20] sm:$0xff]
      %v1389 = vld [vmem:[#allocation3 + $0x28] sm:$0xff]
      %v1390 = vld [vmem:[#allocation3 + $0x30] sm:$0xff]
      %v1391 = vld [vmem:[#allocation3 + $0x38] sm:$0xff]
      %v1392 = vld [vmem:[#allocation3 + $0x40] sm:$0xff]
      %v1393 = vld [vmem:[#allocation3 + $0x48] sm:$0xff]
      %v1394 = vld [vmem:[#allocation3 + $0x50] sm:$0xff]
      %v1395 = vld [vmem:[#allocation3 + $0x58] sm:$0xff]
      %v1396 = vld [vmem:[#allocation3 + $0x60] sm:$0xff]
      %v1397 = vld [vmem:[#allocation3 + $0x68] sm:$0xff]
      %v1398 = vld [vmem:[#allocation3 + $0x70] sm:$0xff]
      %v1399 = vld [vmem:[#allocation3 + $0x78] sm:$0xff]
      %v1400 = vld [vmem:[#allocation3 + $0x80] sm:$0xff]
      %v1401 = vld [vmem:[#allocation3 + $0x88] sm:$0xff]
      %v1402 = vld [vmem:[#allocation3 + $0x90] sm:$0xff]
      %v1403 = vld [vmem:[#allocation3 + $0x98] sm:$0xff]
      %v1404 = vld [vmem:[#allocation3 + $0xa0] sm:$0xff]
      %v1405 = vld [vmem:[#allocation3 + $0xa8] sm:$0xff]
      %v1406 = vld [vmem:[#allocation3 + $0xb0] sm:$0xff]
      %v1407 = vld [vmem:[#allocation3 + $0xb8] sm:$0xff]
      %v1408 = vld [vmem:[#allocation3 + $0xc0] sm:$0xff]
      %v1409 = vld [vmem:[#allocation3 + $0xc8] sm:$0xff]
      %v1410 = vld [vmem:[#allocation3 + $0xd0] sm:$0xff]
      %v1411 = vld [vmem:[%s5] sm:$0xf]
      %1413 = vset.pattern.permute.xlu0 0
      %1414 = vperm.xlu0 %1413, %v1411
      %v1415 = vpop.permute.xlu0 %1414
      %vm1417 = vcmask 588800
      %v1419 = vsel %vm1417, %v1383, 0
      %1421 = vmatprep.subr.mxu0 0.0
      %1422 = vmatpush1.msra.mxu0 0.0
      %1423 = vmatprep.subr.mxu0 0.0
      %1424 = vmatpush1.msra.mxu0 0.0
      %1425 = vmatprep.subr.mxu0 0.0
      %1426 = vmatpush1.msra.mxu0 0.0
      %1427 = vmatprep.subr.mxu0 0.0
      %1428 = vmatpush1.msra.mxu0 0.0
      %1429 = vmatprep.subr.mxu0 0.0
      %1430 = vmatpush1.msra.mxu0 0.0
      %1431 = vmatprep.subr.mxu0 0.0
      %1432 = vmatpush1.msra.mxu0 0.0
      %1433 = vmatprep.subr.mxu0 0.0
      %1434 = vmatpush1.msra.mxu0 0.0
      %1435 = vmatprep.subr.mxu0 %v1409
      %1436 = vmatpush1.msra.mxu0 %v1408
      %1437 = vmatprep.subr.mxu0 %v1406
      %1438 = vmatpush1.msra.mxu0 %v1405
      %1439 = vmatprep.subr.mxu0 %v1403
      %1440 = vmatpush1.msra.mxu0 %v1402
      %1441 = vmatprep.subr.mxu0 %v1400
      %1442 = vmatpush1.msra.mxu0 %v1399
      %1443 = vmatprep.subr.mxu0 %v1397
      %1444 = vmatpush1.msra.mxu0 %v1396
      %1445 = vmatprep.subr.mxu0 %v1394
      %1446 = vmatpush1.msra.mxu0 %v1393
      %1447 = vmatprep.subr.mxu0 %v1391
      %1448 = vmatpush1.msra.mxu0 %v1390
      %1449 = vmatprep.subr.mxu0 %v1388
      %1450 = vmatpush1.msra.mxu0 %v1387
      %1451 = vmatprep.subr.mxu0 %v1385
      %1452 = vmatpush1.msra.mxu0 %v1384
      %1453 = vmatprep.subr.mxu0 0.0
      %1454 = vmatpush2.msra.mxu0 0.0
      %1455 = vmatprep.subr.mxu0 0.0
      %1456 = vmatpush2.msra.mxu0 0.0
      %1457 = vmatprep.subr.mxu0 0.0
      %1458 = vmatpush2.msra.mxu0 0.0
      %1459 = vmatprep.subr.mxu0 0.0
      %1460 = vmatpush2.msra.mxu0 0.0
      %1461 = vmatprep.subr.mxu0 0.0
      %1462 = vmatpush2.msra.mxu0 0.0
      %1463 = vmatprep.subr.mxu0 0.0
      %1464 = vmatpush2.msra.mxu0 0.0
      %1465 = vmatprep.subr.mxu0 0.0
      %1466 = vmatpush2.msra.mxu0 0.0
      %1467 = vmatprep.subr.mxu0 0.0
      %1468 = vmatpush2.msra.mxu0 0.0
      %1469 = vmatprep.subr.mxu0 0.0
      %1470 = vmatpush2.msra.mxu0 0.0
      %1471 = vmatprep.subr.mxu0 0.0
      %1472 = vmatpush2.msra.mxu0 0.0
      %1473 = vmatprep.subr.mxu0 0.0
      %1474 = vmatpush2.msra.mxu0 0.0
      %1475 = vmatprep.subr.mxu0 0.0
      %1476 = vmatpush2.msra.mxu0 0.0
      %1477 = vmatprep.subr.mxu0 0.0
      %1478 = vmatpush2.msra.mxu0 0.0
      %1479 = vmatprep.subr.mxu0 0.0
      %1480 = vmatpush2.msra.mxu0 0.0
      %1481 = vmatprep.subr.mxu0 0.0
      %1482 = vmatpush2.msra.mxu0 0.0
      %1483 = vmatprep.subr.mxu0 0.0
      %1484 = vmatpush2.msra.mxu0 0.0
      %1485 = vmatprep.mubr.f32.mxu0 0.0
      %1486 = vmatmul.mubr.f32.gmra.mxu0 %v1419
      %v1487 = vpop.f32.mrf.mxu0
      %v1488 = vadd.f32 %v1415, %v1487
      %v1489 = vpop.f32.mrf.mxu0
      %v1490 = vadd.f32 %v1415, %v1489
      %1491 = vdwg.mxu0
      %1492 = vmatprep.subr.mxu0 0.0
      %1493 = vmatpush1.msra.mxu0 0.0
      %1494 = vmatprep.subr.mxu0 0.0
      %1495 = vmatpush1.msra.mxu0 0.0
      %1496 = vmatprep.subr.mxu0 0.0
      %1497 = vmatpush1.msra.mxu0 0.0
      %1498 = vmatprep.subr.mxu0 0.0
      %1499 = vmatpush1.msra.mxu0 0.0
      %1500 = vmatprep.subr.mxu0 0.0
      %1501 = vmatpush1.msra.mxu0 0.0
      %1502 = vmatprep.subr.mxu0 0.0
      %1503 = vmatpush1.msra.mxu0 0.0
      %1504 = vmatprep.subr.mxu0 0.0
      %1505 = vmatpush1.msra.mxu0 0.0
      %1506 = vmatprep.subr.mxu0 0.0
      %1507 = vmatpush1.msra.mxu0 %v1410
      %1508 = vmatprep.subr.mxu0 0.0
      %1509 = vmatpush1.msra.mxu0 %v1407
      %1510 = vmatprep.subr.mxu0 0.0
      %1511 = vmatpush1.msra.mxu0 %v1404
      %1512 = vmatprep.subr.mxu0 0.0
      %1513 = vmatpush1.msra.mxu0 %v1401
      %1514 = vmatprep.subr.mxu0 0.0
      %1515 = vmatpush1.msra.mxu0 %v1398
      %1516 = vmatprep.subr.mxu0 0.0
      %1517 = vmatpush1.msra.mxu0 %v1395
      %1518 = vmatprep.subr.mxu0 0.0
      %1519 = vmatpush1.msra.mxu0 %v1392
      %1520 = vmatprep.subr.mxu0 0.0
      %1521 = vmatpush1.msra.mxu0 %v1389
      %1522 = vmatprep.subr.mxu0 0.0
      %1523 = vmatpush1.msra.mxu0 %v1386
      %1524 = vmatprep.subr.mxu0 0.0
      %1525 = vmatpush2.msra.mxu0 0.0
      %1526 = vmatprep.subr.mxu0 0.0
      %1527 = vmatpush2.msra.mxu0 0.0
      %1528 = vmatprep.subr.mxu0 0.0
      %1529 = vmatpush2.msra.mxu0 0.0
      %1530 = vmatprep.subr.mxu0 0.0
      %1531 = vmatpush2.msra.mxu0 0.0
      %1532 = vmatprep.subr.mxu0 0.0
      %1533 = vmatpush2.msra.mxu0 0.0
      %1534 = vmatprep.subr.mxu0 0.0
      %1535 = vmatpush2.msra.mxu0 0.0
      %1536 = vmatprep.subr.mxu0 0.0
      %1537 = vmatpush2.msra.mxu0 0.0
      %1538 = vmatprep.subr.mxu0 0.0
      %1539 = vmatpush2.msra.mxu0 0.0
      %1540 = vmatprep.subr.mxu0 0.0
      %1541 = vmatpush2.msra.mxu0 0.0
      %1542 = vmatprep.subr.mxu0 0.0
      %1543 = vmatpush2.msra.mxu0 0.0
      %1544 = vmatprep.subr.mxu0 0.0
      %1545 = vmatpush2.msra.mxu0 0.0
      %1546 = vmatprep.subr.mxu0 0.0
      %1547 = vmatpush2.msra.mxu0 0.0
      %1548 = vmatprep.subr.mxu0 0.0
      %1549 = vmatpush2.msra.mxu0 0.0
      %1550 = vmatprep.subr.mxu0 0.0
      %1551 = vmatpush2.msra.mxu0 0.0
      %1552 = vmatprep.subr.mxu0 0.0
      %1553 = vmatpush2.msra.mxu0 0.0
      %1554 = vmatprep.subr.mxu0 0.0
      %1555 = vmatpush2.msra.mxu0 0.0
      %1556 = vmatprep.mubr.f32.mxu0 0.0
      %1557 = vmatmul.mubr.f32.gmra.mxu0 %v1419
      %v1558 = vpop.f32.mrf.mxu0
      %v1559 = vadd.f32 %v1415, %v1558
      %v1560 = vpop.f32.mrf.mxu0
      %1561 = vdwg.mxu0
      %v1562 = vmax.f32 %v1488, 0.0
      %v1563 = vmax.f32 %v1490, 0.0
      %v1564 = vmax.f32 %v1559, 0.0
      %v1565 = vmul.f32 %v1562, %v1178
      %v1566 = vmul.f32 %v1563, %v1182
      %v1567 = vmul.f32 %v1564, %v1186
      %1571 = vrot.lane.b32.xlu0 %v1565, 19
      %v1572 = vpop.permute.xlu0 %1571
      %1573 = vrot.lane.b32.xlu0 %v1566, 19
      %v1574 = vpop.permute.xlu0 %1573
      %1575 = vrot.lane.b32.xlu0 %v1567, 19
      %v1576 = vpop.permute.xlu0 %1575
      %v1577 = vsel %vm1205, %v1572, %v1574
      %v1578 = vsel %vm1205, %v1574, %v1576
      %vm1582 = vcmask 1043608
      %1583 = vst.msk [vmem:[#allocation2 + $0x18] sm:$0xf] %vm1582, %v1572
      %1584 = vst [vmem:[#allocation2 + $0x20] sm:$0xf] %v1577
      %vm1585 = vcmask 707584
      %1586 = vst.msk [vmem:[#allocation2 + $0x28] sm:$0xf] %vm1585, %v1578
      %v1587 = vld [vmem:[#allocation2] sm:$0xff]
      %v1588 = vld [vmem:[#allocation2 + $0x8] sm:$0xff]
      %v1589 = vld [vmem:[#allocation2 + $0x10] sm:$0xff]
      %v1590 = vld [vmem:[#allocation2 + $0x18] sm:$0xf]
      %v1591 = vld [vmem:[#allocation2 + $0x20] sm:$0xf]
      %v1592 = vld [vmem:[#allocation2 + $0x28] sm:$0xf]
      %1593 = vst [vmem:[#allocation3] sm:$0xff] %v1587
      %1594 = vst [vmem:[#allocation3 + $0x8] sm:$0xff] %v1588
      %1595 = vst.msk [vmem:[#allocation3 + $0x10] sm:$0xff] %vm1221, %v1589
      %1596 = vst [vmem:[#allocation3 + $0x18] sm:$0xf] %v1590
      %1597 = vst [vmem:[#allocation3 + $0x20] sm:$0xf] %v1591
      %1598 = vst.msk [vmem:[#allocation3 + $0x28] sm:$0xf] %vm811, %v1592
      %v1599 = vld [vmem:[#allocation2] sm:$0xff]
      %v1600 = vld [vmem:[#allocation2 + $0x8] sm:$0xff]
      %v1601 = vld [vmem:[#allocation2 + $0x10] sm:$0xff]
      %v1602 = vld [vmem:[#allocation2 + $0x18] sm:$0xf]
      %v1603 = vld [vmem:[#allocation2 + $0x20] sm:$0xf]
      %v1604 = vld [vmem:[#allocation2 + $0x28] sm:$0xf]
      %v1611 = vrot.slane %v1599, 4
      %v1612 = vrot.slane %v1600, 4
      %v1613 = vrot.slane %v1601, 4
      %v1614 = vrot.slane %v1602, 4
      %v1615 = vsel %vm1020, %v1611, %v1614
      %v1616 = vrot.slane %v1603, 4
      %v1617 = vsel %vm1020, %v1612, %v1616
      %v1618 = vrot.slane %v1604, 4
      %v1619 = vsel %vm1020, %v1613, %v1618
      %1620 = vrot.lane.b32.xlu0 %v1611, 127
      %v1621 = vpop.permute.xlu0 %1620
      %1622 = vrot.lane.b32.xlu0 %v1612, 127
      %v1623 = vpop.permute.xlu0 %1622
      %1624 = vrot.lane.b32.xlu0 %v1613, 127
      %v1625 = vpop.permute.xlu0 %1624
      %1626 = vrot.lane.b32.xlu0 %v1615, 127
      %v1627 = vpop.permute.xlu0 %1626
      %1628 = vrot.lane.b32.xlu0 %v1617, 127
      %v1629 = vpop.permute.xlu0 %1628
      %1630 = vrot.lane.b32.xlu0 %v1619, 127
      %v1631 = vpop.permute.xlu0 %1630
      %v1632 = vsel %vm828, %v1621, %v1623
      %v1633 = vsel %vm828, %v1623, %v1625
      %v1634 = vsel %vm828, %v1627, %v1629
      %v1635 = vsel %vm828, %v1629, %v1631
      %1642 = vst [vmem:[#allocation3 + $0x18] sm:$0xf0] %v1632
      %1643 = vst [vmem:[#allocation3 + $0x20] sm:$0xf0] %v1633
      %1644 = vst.msk [vmem:[#allocation3 + $0x28] sm:$0xf0] %vm836, %v1625
      %1645 = vst [vmem:[#allocation3 + $0x30] sm:$0xff] %v1634
      %1646 = vst [vmem:[#allocation3 + $0x38] sm:$0xff] %v1635
      %1647 = vst.msk [vmem:[#allocation3 + $0x40] sm:$0xff] %vm1221, %v1631
      %v1648 = vld [vmem:[#allocation2] sm:$0xff]
      %v1649 = vld [vmem:[#allocation2 + $0x8] sm:$0xff]
      %v1650 = vld [vmem:[#allocation2 + $0x10] sm:$0xff]
      %v1651 = vld [vmem:[#allocation2 + $0x18] sm:$0xf]
      %v1652 = vld [vmem:[#allocation2 + $0x20] sm:$0xf]
      %v1653 = vld [vmem:[#allocation2 + $0x28] sm:$0xf]
      %1660 = vrot.lane.b32.xlu0 %v1648, 126
      %v1661 = vpop.permute.xlu0 %1660
      %1662 = vrot.lane.b32.xlu0 %v1649, 126
      %v1663 = vpop.permute.xlu0 %1662
      %1664 = vrot.lane.b32.xlu0 %v1650, 126
      %v1665 = vpop.permute.xlu0 %1664
      %1666 = vrot.lane.b32.xlu0 %v1651, 126
      %v1667 = vpop.permute.xlu0 %1666
      %1668 = vrot.lane.b32.xlu0 %v1652, 126
      %v1669 = vpop.permute.xlu0 %1668
      %1670 = vrot.lane.b32.xlu0 %v1653, 126
      %v1671 = vpop.permute.xlu0 %1670
      %v1672 = vsel %vm850, %v1661, %v1663
      %v1673 = vsel %vm850, %v1663, %v1665
      %v1674 = vsel %vm850, %v1667, %v1669
      %v1675 = vsel %vm850, %v1669, %v1671
      %1682 = vst [vmem:[#allocation3 + $0x48] sm:$0xff] %v1672
      %1683 = vst [vmem:[#allocation3 + $0x50] sm:$0xff] %v1673
      %1684 = vst.msk [vmem:[#allocation3 + $0x58] sm:$0xff] %vm1221, %v1665
      %1685 = vst [vmem:[#allocation3 + $0x60] sm:$0xf] %v1674
      %1686 = vst [vmem:[#allocation3 + $0x68] sm:$0xf] %v1675
      %1687 = vst.msk [vmem:[#allocation3 + $0x70] sm:$0xf] %vm811, %v1671
      %v1688 = vld [vmem:[#allocation2] sm:$0xff]
      %v1689 = vld [vmem:[#allocation2 + $0x8] sm:$0xff]
      %v1690 = vld [vmem:[#allocation2 + $0x10] sm:$0xff]
      %v1691 = vld [vmem:[#allocation2 + $0x18] sm:$0xf]
      %v1692 = vld [vmem:[#allocation2 + $0x20] sm:$0xf]
      %v1693 = vld [vmem:[#allocation2 + $0x28] sm:$0xf]
      %v1700 = vrot.slane %v1688, 4
      %v1701 = vrot.slane %v1689, 4
      %v1702 = vrot.slane %v1690, 4
      %v1703 = vrot.slane %v1691, 4
      %v1704 = vsel %vm1020, %v1700, %v1703
      %v1705 = vrot.slane %v1692, 4
      %v1706 = vsel %vm1020, %v1701, %v1705
      %v1707 = vrot.slane %v1693, 4
      %v1708 = vsel %vm1020, %v1702, %v1707
      %1709 = vrot.lane.b32.xlu0 %v1700, 110
      %v1710 = vpop.permute.xlu0 %1709
      %1711 = vrot.lane.b32.xlu0 %v1701, 110
      %v1712 = vpop.permute.xlu0 %1711
      %1713 = vrot.lane.b32.xlu0 %v1702, 110
      %v1714 = vpop.permute.xlu0 %1713
      %1715 = vrot.lane.b32.xlu0 %v1704, 110
      %v1716 = vpop.permute.xlu0 %1715
      %1717 = vrot.lane.b32.xlu0 %v1706, 110
      %v1718 = vpop.permute.xlu0 %1717
      %1719 = vrot.lane.b32.xlu0 %v1708, 110
      %v1720 = vpop.permute.xlu0 %1719
      %v1721 = vsel %vm874, %v1710, %v1712
      %v1722 = vsel %vm874, %v1712, %v1714
      %v1723 = vsel %vm874, %v1716, %v1718
      %v1724 = vsel %vm874, %v1718, %v1720
      %1731 = vst [vmem:[#allocation3 + $0x60] sm:$0xf0] %v1721
      %1732 = vst [vmem:[#allocation3 + $0x68] sm:$0xf0] %v1722
      %1733 = vst.msk [vmem:[#allocation3 + $0x70] sm:$0xf0] %vm836, %v1714
      %1734 = vst [vmem:[#allocation3 + $0x78] sm:$0xff] %v1723
      %1735 = vst [vmem:[#allocation3 + $0x80] sm:$0xff] %v1724
      %1736 = vst.msk [vmem:[#allocation3 + $0x88] sm:$0xff] %vm1221, %v1720
      %v1737 = vld [vmem:[#allocation2] sm:$0xff]
      %v1738 = vld [vmem:[#allocation2 + $0x8] sm:$0xff]
      %v1739 = vld [vmem:[#allocation2 + $0x10] sm:$0xff]
      %v1740 = vld [vmem:[#allocation2 + $0x18] sm:$0xf]
      %v1741 = vld [vmem:[#allocation2 + $0x20] sm:$0xf]
      %v1742 = vld [vmem:[#allocation2 + $0x28] sm:$0xf]
      %1749 = vrot.lane.b32.xlu0 %v1737, 109
      %v1750 = vpop.permute.xlu0 %1749
      %1751 = vrot.lane.b32.xlu0 %v1738, 109
      %v1752 = vpop.permute.xlu0 %1751
      %1753 = vrot.lane.b32.xlu0 %v1739, 109
      %v1754 = vpop.permute.xlu0 %1753
      %1755 = vrot.lane.b32.xlu0 %v1740, 109
      %v1756 = vpop.permute.xlu0 %1755
      %1757 = vrot.lane.b32.xlu0 %v1741, 109
      %v1758 = vpop.permute.xlu0 %1757
      %1759 = vrot.lane.b32.xlu0 %v1742, 109
      %v1760 = vpop.permute.xlu0 %1759
      %v1761 = vsel %vm895, %v1750, %v1752
      %v1762 = vsel %vm895, %v1752, %v1754
      %v1763 = vsel %vm895, %v1756, %v1758
      %v1764 = vsel %vm895, %v1758, %v1760
      %1771 = vst [vmem:[#allocation3 + $0x90] sm:$0xff] %v1761
      %1772 = vst [vmem:[#allocation3 + $0x98] sm:$0xff] %v1762
      %1773 = vst.msk [vmem:[#allocation3 + $0xa0] sm:$0xff] %vm1221, %v1754
      %1774 = vst [vmem:[#allocation3 + $0xa8] sm:$0xf] %v1763
      %1775 = vst [vmem:[#allocation3 + $0xb0] sm:$0xf] %v1764
      %1776 = vst.msk [vmem:[#allocation3 + $0xb8] sm:$0xf] %vm811, %v1760
      %v1777 = vld [vmem:[#allocation2] sm:$0xff]
      %v1778 = vld [vmem:[#allocation2 + $0x8] sm:$0xff]
      %v1779 = vld [vmem:[#allocation2 + $0x10] sm:$0xff]
      %v1780 = vld [vmem:[#allocation2 + $0x18] sm:$0xf]
      %v1781 = vld [vmem:[#allocation2 + $0x20] sm:$0xf]
      %v1782 = vld [vmem:[#allocation2 + $0x28] sm:$0xf]
      %v1789 = vrot.slane %v1777, 4
      %v1790 = vrot.slane %v1778, 4
      %v1791 = vrot.slane %v1779, 4
      %v1792 = vrot.slane %v1780, 4
      %v1793 = vsel %vm1020, %v1789, %v1792
      %v1794 = vrot.slane %v1781, 4
      %v1795 = vsel %vm1020, %v1790, %v1794
      %v1796 = vrot.slane %v1782, 4
      %v1797 = vsel %vm1020, %v1791, %v1796
      %1798 = vrot.lane.b32.xlu0 %v1789, 108
      %v1799 = vpop.permute.xlu0 %1798
      %1800 = vrot.lane.b32.xlu0 %v1790, 108
      %v1801 = vpop.permute.xlu0 %1800
      %1802 = vrot.lane.b32.xlu0 %v1791, 108
      %v1803 = vpop.permute.xlu0 %1802
      %1804 = vrot.lane.b32.xlu0 %v1793, 108
      %v1805 = vpop.permute.xlu0 %1804
      %1806 = vrot.lane.b32.xlu0 %v1795, 108
      %v1807 = vpop.permute.xlu0 %1806
      %1808 = vrot.lane.b32.xlu0 %v1797, 108
      %v1809 = vpop.permute.xlu0 %1808
      %v1810 = vsel %vm919, %v1799, %v1801
      %v1811 = vsel %vm919, %v1801, %v1803
      %v1812 = vsel %vm919, %v1805, %v1807
      %v1813 = vsel %vm919, %v1807, %v1809
      %1820 = vst [vmem:[#allocation3 + $0xa8] sm:$0xf0] %v1810
      %1821 = vst [vmem:[#allocation3 + $0xb0] sm:$0xf0] %v1811
      %1822 = vst.msk [vmem:[#allocation3 + $0xb8] sm:$0xf0] %vm836, %v1803
      %1823 = vst [vmem:[#allocation3 + $0xc0] sm:$0xff] %v1812
      %1824 = vst [vmem:[#allocation3 + $0xc8] sm:$0xff] %v1813
      %1825 = vst.msk [vmem:[#allocation3 + $0xd0] sm:$0xff] %vm1221, %v1809
      %v1826 = vld [vmem:[#allocation2] sm:$0xff]
      %v1827 = vld [vmem:[#allocation2 + $0x8] sm:$0xff]
      %v1828 = vld [vmem:[#allocation2 + $0x10] sm:$0xff]
      %v1829 = vld [vmem:[#allocation2 + $0x18] sm:$0xf]
      %v1830 = vld [vmem:[#allocation2 + $0x20] sm:$0xf]
      %v1831 = vld [vmem:[#allocation2 + $0x28] sm:$0xf]
      %1838 = vrot.lane.b32.xlu0 %v1826, 92
      %v1839 = vpop.permute.xlu0 %1838
      %1840 = vrot.lane.b32.xlu0 %v1827, 92
      %v1841 = vpop.permute.xlu0 %1840
      %1842 = vrot.lane.b32.xlu0 %v1828, 92
      %v1843 = vpop.permute.xlu0 %1842
      %1844 = vrot.lane.b32.xlu0 %v1829, 92
      %v1845 = vpop.permute.xlu0 %1844
      %1846 = vrot.lane.b32.xlu0 %v1830, 92
      %v1847 = vpop.permute.xlu0 %1846
      %1848 = vrot.lane.b32.xlu0 %v1831, 92
      %v1849 = vpop.permute.xlu0 %1848
      %v1850 = vsel %vm940, %v1839, %v1841
      %v1851 = vsel %vm940, %v1841, %v1843
      %v1852 = vsel %vm940, %v1845, %v1847
      %v1853 = vsel %vm940, %v1847, %v1849
      %1860 = vst [vmem:[#allocation3 + $0xd8] sm:$0xff] %v1850
      %1861 = vst [vmem:[#allocation3 + $0xe0] sm:$0xff] %v1851
      %1862 = vst.msk [vmem:[#allocation3 + $0xe8] sm:$0xff] %vm1221, %v1843
      %1863 = vst [vmem:[#allocation3 + $0xf0] sm:$0xf] %v1852
      %1864 = vst [vmem:[#allocation3 + $0xf8] sm:$0xf] %v1853
      %1865 = vst.msk [vmem:[#allocation3 + $0x100] sm:$0xf] %vm811, %v1849
      %v1866 = vld [vmem:[#allocation2] sm:$0xff]
      %v1867 = vld [vmem:[#allocation2 + $0x8] sm:$0xff]
      %v1868 = vld [vmem:[#allocation2 + $0x10] sm:$0xff]
      %v1869 = vld [vmem:[#allocation2 + $0x18] sm:$0xf]
      %v1870 = vld [vmem:[#allocation2 + $0x20] sm:$0xf]
      %v1871 = vld [vmem:[#allocation2 + $0x28] sm:$0xf]
      %v1878 = vrot.slane %v1866, 4
      %v1879 = vrot.slane %v1867, 4
      %v1880 = vrot.slane %v1868, 4
      %v1881 = vrot.slane %v1869, 4
      %v1882 = vsel %vm1020, %v1878, %v1881
      %v1883 = vrot.slane %v1870, 4
      %v1884 = vsel %vm1020, %v1879, %v1883
      %v1885 = vrot.slane %v1871, 4
      %v1886 = vsel %vm1020, %v1880, %v1885
      %1887 = vrot.lane.b32.xlu0 %v1878, 91
      %v1888 = vpop.permute.xlu0 %1887
      %1889 = vrot.lane.b32.xlu0 %v1879, 91
      %v1890 = vpop.permute.xlu0 %1889
      %1891 = vrot.lane.b32.xlu0 %v1880, 91
      %v1892 = vpop.permute.xlu0 %1891
      %1893 = vrot.lane.b32.xlu0 %v1882, 91
      %v1894 = vpop.permute.xlu0 %1893
      %1895 = vrot.lane.b32.xlu0 %v1884, 91
      %v1896 = vpop.permute.xlu0 %1895
      %1897 = vrot.lane.b32.xlu0 %v1886, 91
      %v1898 = vpop.permute.xlu0 %1897
      %v1899 = vsel %vm964, %v1888, %v1890
      %v1900 = vsel %vm964, %v1890, %v1892
      %v1901 = vsel %vm964, %v1894, %v1896
      %v1902 = vsel %vm964, %v1896, %v1898
      %1909 = vst [vmem:[#allocation3 + $0xf0] sm:$0xf0] %v1899
      %1910 = vst [vmem:[#allocation3 + $0xf8] sm:$0xf0] %v1900
      %1911 = vst.msk [vmem:[#allocation3 + $0x100] sm:$0xf0] %vm836, %v1892
      %1912 = vst [vmem:[#allocation3 + $0x108] sm:$0xff] %v1901
      %1913 = vst [vmem:[#allocation3 + $0x110] sm:$0xff] %v1902
      %1914 = vst.msk [vmem:[#allocation3 + $0x118] sm:$0xff] %vm1221, %v1898
      %v1915 = vld [vmem:[#allocation2] sm:$0xff]
      %v1916 = vld [vmem:[#allocation2 + $0x8] sm:$0xff]
      %v1917 = vld [vmem:[#allocation2 + $0x10] sm:$0xff]
      %v1918 = vld [vmem:[#allocation2 + $0x18] sm:$0xf]
      %v1919 = vld [vmem:[#allocation2 + $0x20] sm:$0xf]
      %v1920 = vld [vmem:[#allocation2 + $0x28] sm:$0xf]
      %1927 = vrot.lane.b32.xlu0 %v1915, 90
      %v1928 = vpop.permute.xlu0 %1927
      %1929 = vrot.lane.b32.xlu0 %v1916, 90
      %v1930 = vpop.permute.xlu0 %1929
      %1931 = vrot.lane.b32.xlu0 %v1917, 90
      %v1932 = vpop.permute.xlu0 %1931
      %1933 = vrot.lane.b32.xlu0 %v1918, 90
      %v1934 = vpop.permute.xlu0 %1933
      %1935 = vrot.lane.b32.xlu0 %v1919, 90
      %v1936 = vpop.permute.xlu0 %1935
      %1937 = vrot.lane.b32.xlu0 %v1920, 90
      %v1938 = vpop.permute.xlu0 %1937
      %v1939 = vsel %vm985, %v1928, %v1930
      %v1940 = vsel %vm985, %v1930, %v1932
      %v1941 = vsel %vm985, %v1934, %v1936
      %v1942 = vsel %vm985, %v1936, %v1938
      %1949 = vst [vmem:[#allocation3 + $0x120] sm:$0xff] %v1939
      %1950 = vst [vmem:[#allocation3 + $0x128] sm:$0xff] %v1940
      %1951 = vst.msk [vmem:[#allocation3 + $0x130] sm:$0xff] %vm1221, %v1932
      %1952 = vst [vmem:[#allocation3 + $0x138] sm:$0xf] %v1941
      %1953 = vst [vmem:[#allocation3 + $0x140] sm:$0xf] %v1942
      %1954 = vst.msk [vmem:[#allocation3 + $0x148] sm:$0xf] %vm811, %v1938
      %v1955 = vld [vmem:[%s6] sm:$0xf]
      %v1956 = vld [vmem:[#allocation3] sm:$0xff]
      %v1957 = vld [vmem:[#allocation3 + $0x8] sm:$0xff]
      %v1958 = vld [vmem:[#allocation3 + $0x10] sm:$0xff]
      %v1959 = vld [vmem:[#allocation3 + $0x18] sm:$0xff]
      %v1960 = vld [vmem:[#allocation3 + $0x20] sm:$0xff]
      %v1961 = vld [vmem:[#allocation3 + $0x28] sm:$0xff]
      %v1962 = vld [vmem:[#allocation3 + $0x30] sm:$0xff]
      %v1963 = vld [vmem:[#allocation3 + $0x38] sm:$0xff]
      %v1964 = vld [vmem:[#allocation3 + $0x40] sm:$0xff]
      %v1965 = vld [vmem:[#allocation3 + $0x48] sm:$0xff]
      %v1966 = vld [vmem:[#allocation3 + $0x50] sm:$0xff]
      %v1967 = vld [vmem:[#allocation3 + $0x58] sm:$0xff]
      %v1968 = vld [vmem:[#allocation3 + $0x60] sm:$0xff]
      %v1969 = vld [vmem:[#allocation3 + $0x68] sm:$0xff]
      %v1970 = vld [vmem:[#allocation3 + $0x70] sm:$0xff]
      %v1971 = vld [vmem:[#allocation3 + $0x78] sm:$0xff]
      %v1972 = vld [vmem:[#allocation3 + $0x80] sm:$0xff]
      %v1973 = vld [vmem:[#allocation3 + $0x88] sm:$0xff]
      %v1974 = vld [vmem:[#allocation3 + $0x90] sm:$0xff]
      %v1975 = vld [vmem:[#allocation3 + $0x98] sm:$0xff]
      %v1976 = vld [vmem:[#allocation3 + $0xa0] sm:$0xff]
      %v1977 = vld [vmem:[#allocation3 + $0xa8] sm:$0xff]
      %v1978 = vld [vmem:[#allocation3 + $0xb0] sm:$0xff]
      %v1979 = vld [vmem:[#allocation3 + $0xb8] sm:$0xff]
      %v1980 = vld [vmem:[#allocation3 + $0xc0] sm:$0xff]
      %v1981 = vld [vmem:[#allocation3 + $0xc8] sm:$0xff]
      %v1982 = vld [vmem:[#allocation3 + $0xd0] sm:$0xff]
      %v1983 = vld [vmem:[#allocation3 + $0xd8] sm:$0xff]
      %v1984 = vld [vmem:[#allocation3 + $0xe0] sm:$0xff]
      %v1985 = vld [vmem:[#allocation3 + $0xe8] sm:$0xff]
      %v1986 = vld [vmem:[#allocation3 + $0xf0] sm:$0xff]
      %v1987 = vld [vmem:[#allocation3 + $0xf8] sm:$0xff]
      %v1988 = vld [vmem:[#allocation3 + $0x100] sm:$0xff]
      %v1989 = vld [vmem:[#allocation3 + $0x108] sm:$0xff]
      %v1990 = vld [vmem:[#allocation3 + $0x110] sm:$0xff]
      %v1991 = vld [vmem:[#allocation3 + $0x118] sm:$0xff]
      %v1992 = vld [vmem:[#allocation3 + $0x120] sm:$0xff]
      %v1993 = vld [vmem:[#allocation3 + $0x128] sm:$0xff]
      %v1994 = vld [vmem:[#allocation3 + $0x130] sm:$0xff]
      %v1995 = vld [vmem:[#allocation3 + $0x138] sm:$0xf]
      %v1996 = vld [vmem:[#allocation3 + $0x140] sm:$0xf]
      %v1997 = vld [vmem:[#allocation3 + $0x148] sm:$0xf]
      %v1998 = vld [vmem:[%s7] sm:$0xf]
      %2000 = vset.pattern.permute.xlu0 0
      %2001 = vperm.xlu0 %2000, %v1998
      %v2002 = vpop.permute.xlu0 %2001
      %v2005 = vsel %vm919, %v1955, 0
      %v2008 = vsel %vm1020, %v1995, 0
      %v2011 = vsel %vm1020, %v1996, 0
      %v2014 = vsel %vm1020, %v1997, 0
      %2016 = vmatprep.subr.mxu0 0.0
      %2017 = vmatpush1.msra.mxu0 0.0
      %2018 = vmatprep.subr.mxu0 0.0
      %2019 = vmatpush1.msra.mxu0 0.0
      %2020 = vmatprep.subr.mxu0 %v2011
      %2021 = vmatpush1.msra.mxu0 %v2008
      %2022 = vmatprep.subr.mxu0 %v1993
      %2023 = vmatpush1.msra.mxu0 %v1992
      %2024 = vmatprep.subr.mxu0 %v1990
      %2025 = vmatpush1.msra.mxu0 %v1989
      %2026 = vmatprep.subr.mxu0 %v1987
      %2027 = vmatpush1.msra.mxu0 %v1986
      %2028 = vmatprep.subr.mxu0 %v1984
      %2029 = vmatpush1.msra.mxu0 %v1983
      %2030 = vmatprep.subr.mxu0 %v1981
      %2031 = vmatpush1.msra.mxu0 %v1980
      %2032 = vmatprep.subr.mxu0 %v1978
      %2033 = vmatpush1.msra.mxu0 %v1977
      %2034 = vmatprep.subr.mxu0 %v1975
      %2035 = vmatpush1.msra.mxu0 %v1974
      %2036 = vmatprep.subr.mxu0 %v1972
      %2037 = vmatpush1.msra.mxu0 %v1971
      %2038 = vmatprep.subr.mxu0 %v1969
      %2039 = vmatpush1.msra.mxu0 %v1968
      %2040 = vmatprep.subr.mxu0 %v1966
      %2041 = vmatpush1.msra.mxu0 %v1965
      %2042 = vmatprep.subr.mxu0 %v1963
      %2043 = vmatpush1.msra.mxu0 %v1962
      %2044 = vmatprep.subr.mxu0 %v1960
      %2045 = vmatpush1.msra.mxu0 %v1959
      %2046 = vmatprep.subr.mxu0 %v1957
      %2047 = vmatpush1.msra.mxu0 %v1956
      %2048 = vmatprep.subr.mxu0 0.0
      %2049 = vmatpush2.msra.mxu0 0.0
      %2050 = vmatprep.subr.mxu0 0.0
      %2051 = vmatpush2.msra.mxu0 0.0
      %2052 = vmatprep.subr.mxu0 0.0
      %2053 = vmatpush2.msra.mxu0 0.0
      %2054 = vmatprep.subr.mxu0 0.0
      %2055 = vmatpush2.msra.mxu0 0.0
      %2056 = vmatprep.subr.mxu0 0.0
      %2057 = vmatpush2.msra.mxu0 0.0
      %2058 = vmatprep.subr.mxu0 0.0
      %2059 = vmatpush2.msra.mxu0 0.0
      %2060 = vmatprep.subr.mxu0 0.0
      %2061 = vmatpush2.msra.mxu0 0.0
      %2062 = vmatprep.subr.mxu0 0.0
      %2063 = vmatpush2.msra.mxu0 0.0
      %2064 = vmatprep.subr.mxu0 0.0
      %2065 = vmatpush2.msra.mxu0 0.0
      %2066 = vmatprep.subr.mxu0 0.0
      %2067 = vmatpush2.msra.mxu0 0.0
      %2068 = vmatprep.subr.mxu0 0.0
      %2069 = vmatpush2.msra.mxu0 0.0
      %2070 = vmatprep.subr.mxu0 0.0
      %2071 = vmatpush2.msra.mxu0 0.0
      %2072 = vmatprep.subr.mxu0 0.0
      %2073 = vmatpush2.msra.mxu0 0.0
      %2074 = vmatprep.subr.mxu0 0.0
      %2075 = vmatpush2.msra.mxu0 0.0
      %2076 = vmatprep.subr.mxu0 0.0
      %2077 = vmatpush2.msra.mxu0 0.0
      %2078 = vmatprep.subr.mxu0 0.0
      %2079 = vmatpush2.msra.mxu0 0.0
      %2080 = vmatprep.mubr.f32.mxu0 0.0
      %2081 = vmatmul.mubr.f32.gmra.mxu0 %v2005
      %v2082 = vpop.f32.mrf.mxu0
      %v2083 = vadd.f32 %v2002, %v2082
      %v2084 = vpop.f32.mrf.mxu0
      %v2085 = vadd.f32 %v2002, %v2084
      %2086 = vdwg.mxu0
      %2087 = vmatprep.subr.mxu0 0.0
      %2088 = vmatpush1.msra.mxu0 0.0
      %2089 = vmatprep.subr.mxu0 0.0
      %2090 = vmatpush1.msra.mxu0 0.0
      %2091 = vmatprep.subr.mxu0 0.0
      %2092 = vmatpush1.msra.mxu0 %v2014
      %2093 = vmatprep.subr.mxu0 0.0
      %2094 = vmatpush1.msra.mxu0 %v1994
      %2095 = vmatprep.subr.mxu0 0.0
      %2096 = vmatpush1.msra.mxu0 %v1991
      %2097 = vmatprep.subr.mxu0 0.0
      %2098 = vmatpush1.msra.mxu0 %v1988
      %2099 = vmatprep.subr.mxu0 0.0
      %2100 = vmatpush1.msra.mxu0 %v1985
      %2101 = vmatprep.subr.mxu0 0.0
      %2102 = vmatpush1.msra.mxu0 %v1982
      %2103 = vmatprep.subr.mxu0 0.0
      %2104 = vmatpush1.msra.mxu0 %v1979
      %2105 = vmatprep.subr.mxu0 0.0
      %2106 = vmatpush1.msra.mxu0 %v1976
      %2107 = vmatprep.subr.mxu0 0.0
      %2108 = vmatpush1.msra.mxu0 %v1973
      %2109 = vmatprep.subr.mxu0 0.0
      %2110 = vmatpush1.msra.mxu0 %v1970
      %2111 = vmatprep.subr.mxu0 0.0
      %2112 = vmatpush1.msra.mxu0 %v1967
      %2113 = vmatprep.subr.mxu0 0.0
      %2114 = vmatpush1.msra.mxu0 %v1964
      %2115 = vmatprep.subr.mxu0 0.0
      %2116 = vmatpush1.msra.mxu0 %v1961
      %2117 = vmatprep.subr.mxu0 0.0
      %2118 = vmatpush1.msra.mxu0 %v1958
      %2119 = vmatprep.subr.mxu0 0.0
      %2120 = vmatpush2.msra.mxu0 0.0
      %2121 = vmatprep.subr.mxu0 0.0
      %2122 = vmatpush2.msra.mxu0 0.0
      %2123 = vmatprep.subr.mxu0 0.0
      %2124 = vmatpush2.msra.mxu0 0.0
      %2125 = vmatprep.subr.mxu0 0.0
      %2126 = vmatpush2.msra.mxu0 0.0
      %2127 = vmatprep.subr.mxu0 0.0
      %2128 = vmatpush2.msra.mxu0 0.0
      %2129 = vmatprep.subr.mxu0 0.0
      %2130 = vmatpush2.msra.mxu0 0.0
      %2131 = vmatprep.subr.mxu0 0.0
      %2132 = vmatpush2.msra.mxu0 0.0
      %2133 = vmatprep.subr.mxu0 0.0
      %2134 = vmatpush2.msra.mxu0 0.0
      %2135 = vmatprep.subr.mxu0 0.0
      %2136 = vmatpush2.msra.mxu0 0.0
      %2137 = vmatprep.subr.mxu0 0.0
      %2138 = vmatpush2.msra.mxu0 0.0
      %2139 = vmatprep.subr.mxu0 0.0
      %2140 = vmatpush2.msra.mxu0 0.0
      %2141 = vmatprep.subr.mxu0 0.0
      %2142 = vmatpush2.msra.mxu0 0.0
      %2143 = vmatprep.subr.mxu0 0.0
      %2144 = vmatpush2.msra.mxu0 0.0
      %2145 = vmatprep.subr.mxu0 0.0
      %2146 = vmatpush2.msra.mxu0 0.0
      %2147 = vmatprep.subr.mxu0 0.0
      %2148 = vmatpush2.msra.mxu0 0.0
      %2149 = vmatprep.subr.mxu0 0.0
      %2150 = vmatpush2.msra.mxu0 0.0
      %2151 = vmatprep.mubr.f32.mxu0 0.0
      %2152 = vmatmul.mubr.f32.gmra.mxu0 %v2005
      %v2153 = vpop.f32.mrf.mxu0
      %v2154 = vadd.f32 %v2002, %v2153
      %v2155 = vpop.f32.mrf.mxu0
      %2156 = vdwg.mxu0
      %v2157 = vmax.f32 %v2083, 0.0
      %v2158 = vmax.f32 %v2085, 0.0
      %v2159 = vmax.f32 %v2154, 0.0
      %v2160 = vmul.f32 %v2157, %v1178
      %v2161 = vmul.f32 %v2158, %v1182
      %v2162 = vmul.f32 %v2159, %v1186
      %v2166 = vrot.slane %v2160, 4
      %v2167 = vrot.slane %v2161, 4
      %v2168 = vrot.slane %v2162, 4
      %2169 = vrot.lane.b32.xlu0 %v2166, 19
      %v2170 = vpop.permute.xlu0 %2169
      %2171 = vrot.lane.b32.xlu0 %v2167, 19
      %v2172 = vpop.permute.xlu0 %2171
      %2173 = vrot.lane.b32.xlu0 %v2168, 19
      %v2174 = vpop.permute.xlu0 %2173
      %v2175 = vsel %vm1205, %v2170, %v2172
      %v2176 = vsel %vm1205, %v2172, %v2174
      %2180 = vst.msk [vmem:[#allocation2 + $0x18] sm:$0xf0] %vm1211, %v2170
      %2181 = vst [vmem:[#allocation2 + $0x20] sm:$0xf0] %v2175
      %2182 = vst.msk [vmem:[#allocation2 + $0x28] sm:$0xf0] %vm1214, %v2176
      %v2183 = vld [vmem:[#allocation2] sm:$0xff]
      %v2184 = vld [vmem:[#allocation2 + $0x8] sm:$0xff]
      %v2185 = vld [vmem:[#allocation2 + $0x10] sm:$0xff]
      %v2186 = vld [vmem:[#allocation2 + $0x18] sm:$0xff]
      %v2187 = vld [vmem:[#allocation2 + $0x20] sm:$0xff]
      %v2188 = vld [vmem:[#allocation2 + $0x28] sm:$0xff]
      %v2189 = vld [vmem:[%s8] sm:$0xf]
      %v2190 = vld [vmem:[%s9] sm:$0xf]
      %2192 = vset.pattern.permute.xlu0 0
      %2193 = vperm.xlu0 %2192, %v2190
      %v2194 = vpop.permute.xlu0 %2193
      %2202 = vrot.lane.b32.xlu0 %v2183, 109
      %v2203 = vpop.permute.xlu0 %2202
      %2204 = vrot.lane.b32.xlu0 %v2184, 109
      %v2205 = vpop.permute.xlu0 %2204
      %2206 = vrot.lane.b32.xlu0 %v2185, 109
      %v2207 = vpop.permute.xlu0 %2206
      %2208 = vrot.lane.b32.xlu0 %v2186, 109
      %v2209 = vpop.permute.xlu0 %2208
      %2210 = vrot.lane.b32.xlu0 %v2187, 109
      %v2211 = vpop.permute.xlu0 %2210
      %2212 = vrot.lane.b32.xlu0 %v2188, 109
      %v2213 = vpop.permute.xlu0 %2212
      %v2214 = vsel %vm895, %v2203, %v2205
      %v2215 = vsel %vm895, %v2205, %v2207
      %v2216 = vsel %vm895, %v2209, %v2211
      %v2217 = vsel %vm895, %v2211, %v2213
      %vm2224 = vcmask 130048
      %v2226 = vsel %vm2224, %v2189, 0
      %2228 = vmatprep.subr.mxu0 0.0
      %2229 = vmatpush1.msra.mxu0 0.0
      %2230 = vmatprep.subr.mxu0 0.0
      %2231 = vmatpush1.msra.mxu0 0.0
      %2232 = vmatprep.subr.mxu0 0.0
      %2233 = vmatpush1.msra.mxu0 0.0
      %2234 = vmatprep.subr.mxu0 0.0
      %2235 = vmatpush1.msra.mxu0 0.0
      %2236 = vmatprep.subr.mxu0 0.0
      %2237 = vmatpush1.msra.mxu0 0.0
      %2238 = vmatprep.subr.mxu0 0.0
      %2239 = vmatpush1.msra.mxu0 0.0
      %2240 = vmatprep.subr.mxu0 0.0
      %2241 = vmatpush1.msra.mxu0 0.0
      %2242 = vmatprep.subr.mxu0 0.0
      %2243 = vmatpush1.msra.mxu0 0.0
      %2244 = vmatprep.subr.mxu0 0.0
      %2245 = vmatpush1.msra.mxu0 0.0
      %2246 = vmatprep.subr.mxu0 0.0
      %2247 = vmatpush1.msra.mxu0 0.0
      %2248 = vmatprep.subr.mxu0 0.0
      %2249 = vmatpush1.msra.mxu0 0.0
      %2250 = vmatprep.subr.mxu0 0.0
      %2251 = vmatpush1.msra.mxu0 0.0
      %2252 = vmatprep.subr.mxu0 0.0
      %2253 = vmatpush1.msra.mxu0 0.0
      %2254 = vmatprep.subr.mxu0 0.0
      %2255 = vmatpush1.msra.mxu0 0.0
      %2256 = vmatprep.subr.mxu0 %v2217
      %2257 = vmatpush1.msra.mxu0 %v2216
      %2258 = vmatprep.subr.mxu0 %v2215
      %2259 = vmatpush1.msra.mxu0 %v2214
      %2260 = vmatprep.subr.mxu0 0.0
      %2261 = vmatpush2.msra.mxu0 0.0
      %2262 = vmatprep.subr.mxu0 0.0
      %2263 = vmatpush2.msra.mxu0 0.0
      %2264 = vmatprep.subr.mxu0 0.0
      %2265 = vmatpush2.msra.mxu0 0.0
      %2266 = vmatprep.subr.mxu0 0.0
      %2267 = vmatpush2.msra.mxu0 0.0
      %2268 = vmatprep.subr.mxu0 0.0
      %2269 = vmatpush2.msra.mxu0 0.0
      %2270 = vmatprep.subr.mxu0 0.0
      %2271 = vmatpush2.msra.mxu0 0.0
      %2272 = vmatprep.subr.mxu0 0.0
      %2273 = vmatpush2.msra.mxu0 0.0
      %2274 = vmatprep.subr.mxu0 0.0
      %2275 = vmatpush2.msra.mxu0 0.0
      %2276 = vmatprep.subr.mxu0 0.0
      %2277 = vmatpush2.msra.mxu0 0.0
      %2278 = vmatprep.subr.mxu0 0.0
      %2279 = vmatpush2.msra.mxu0 0.0
      %2280 = vmatprep.subr.mxu0 0.0
      %2281 = vmatpush2.msra.mxu0 0.0
      %2282 = vmatprep.subr.mxu0 0.0
      %2283 = vmatpush2.msra.mxu0 0.0
      %2284 = vmatprep.subr.mxu0 0.0
      %2285 = vmatpush2.msra.mxu0 0.0
      %2286 = vmatprep.subr.mxu0 0.0
      %2287 = vmatpush2.msra.mxu0 0.0
      %2288 = vmatprep.subr.mxu0 0.0
      %2289 = vmatpush2.msra.mxu0 0.0
      %2290 = vmatprep.subr.mxu0 0.0
      %2291 = vmatpush2.msra.mxu0 0.0
      %2292 = vmatprep.mubr.f32.mxu0 0.0
      %2293 = vmatmul.mubr.f32.gmra.mxu0 %v2226
      %v2294 = vpop.f32.mrf.mxu0
      %v2295 = vadd.f32 %v2194, %v2294
      %v2296 = vpop.f32.mrf.mxu0
      %v2297 = vadd.f32 %v2194, %v2296
      %2298 = vdwg.mxu0
      %2299 = vmatprep.subr.mxu0 0.0
      %2300 = vmatpush1.msra.mxu0 0.0
      %2301 = vmatprep.subr.mxu0 0.0
      %2302 = vmatpush1.msra.mxu0 0.0
      %2303 = vmatprep.subr.mxu0 0.0
      %2304 = vmatpush1.msra.mxu0 0.0
      %2305 = vmatprep.subr.mxu0 0.0
      %2306 = vmatpush1.msra.mxu0 0.0
      %2307 = vmatprep.subr.mxu0 0.0
      %2308 = vmatpush1.msra.mxu0 0.0
      %2309 = vmatprep.subr.mxu0 0.0
      %2310 = vmatpush1.msra.mxu0 0.0
      %2311 = vmatprep.subr.mxu0 0.0
      %2312 = vmatpush1.msra.mxu0 0.0
      %2313 = vmatprep.subr.mxu0 0.0
      %2314 = vmatpush1.msra.mxu0 0.0
      %2315 = vmatprep.subr.mxu0 0.0
      %2316 = vmatpush1.msra.mxu0 0.0
      %2317 = vmatprep.subr.mxu0 0.0
      %2318 = vmatpush1.msra.mxu0 0.0
      %2319 = vmatprep.subr.mxu0 0.0
      %2320 = vmatpush1.msra.mxu0 0.0
      %2321 = vmatprep.subr.mxu0 0.0
      %2322 = vmatpush1.msra.mxu0 0.0
      %2323 = vmatprep.subr.mxu0 0.0
      %2324 = vmatpush1.msra.mxu0 0.0
      %2325 = vmatprep.subr.mxu0 0.0
      %2326 = vmatpush1.msra.mxu0 0.0
      %2327 = vmatprep.subr.mxu0 0.0
      %2328 = vmatpush1.msra.mxu0 %v2213
      %2329 = vmatprep.subr.mxu0 0.0
      %2330 = vmatpush1.msra.mxu0 %v2207
      %2331 = vmatprep.subr.mxu0 0.0
      %2332 = vmatpush2.msra.mxu0 0.0
      %2333 = vmatprep.subr.mxu0 0.0
      %2334 = vmatpush2.msra.mxu0 0.0
      %2335 = vmatprep.subr.mxu0 0.0
      %2336 = vmatpush2.msra.mxu0 0.0
      %2337 = vmatprep.subr.mxu0 0.0
      %2338 = vmatpush2.msra.mxu0 0.0
      %2339 = vmatprep.subr.mxu0 0.0
      %2340 = vmatpush2.msra.mxu0 0.0
      %2341 = vmatprep.subr.mxu0 0.0
      %2342 = vmatpush2.msra.mxu0 0.0
      %2343 = vmatprep.subr.mxu0 0.0
      %2344 = vmatpush2.msra.mxu0 0.0
      %2345 = vmatprep.subr.mxu0 0.0
      %2346 = vmatpush2.msra.mxu0 0.0
      %2347 = vmatprep.subr.mxu0 0.0
      %2348 = vmatpush2.msra.mxu0 0.0
      %2349 = vmatprep.subr.mxu0 0.0
      %2350 = vmatpush2.msra.mxu0 0.0
      %2351 = vmatprep.subr.mxu0 0.0
      %2352 = vmatpush2.msra.mxu0 0.0
      %2353 = vmatprep.subr.mxu0 0.0
      %2354 = vmatpush2.msra.mxu0 0.0
      %2355 = vmatprep.subr.mxu0 0.0
      %2356 = vmatpush2.msra.mxu0 0.0
      %2357 = vmatprep.subr.mxu0 0.0
      %2358 = vmatpush2.msra.mxu0 0.0
      %2359 = vmatprep.subr.mxu0 0.0
      %2360 = vmatpush2.msra.mxu0 0.0
      %2361 = vmatprep.subr.mxu0 0.0
      %2362 = vmatpush2.msra.mxu0 0.0
      %2363 = vmatprep.mubr.f32.mxu0 0.0
      %2364 = vmatmul.mubr.f32.gmra.mxu0 %v2226
      %v2365 = vpop.f32.mrf.mxu0
      %v2366 = vadd.f32 %v2194, %v2365
      %v2367 = vpop.f32.mrf.mxu0
      %2368 = vdwg.mxu0
      %v2369 = vmul.f32 %v2295, %v1178
      %v2370 = vmul.f32 %v2297, %v1182
      %v2371 = vmul.f32 %v2366, %v1186
      %2375 = vrot.lane.b32.xlu0 %v806, 109
      %v2376 = vpop.permute.xlu0 %2375
      %2377 = vrot.lane.b32.xlu0 %v807, 109
      %v2378 = vpop.permute.xlu0 %2377
      %2379 = vrot.lane.b32.xlu0 %v808, 109
      %v2380 = vpop.permute.xlu0 %2379
      %v2381 = vsel %vm895, %v2376, %v2378
      %v2382 = vsel %vm895, %v2378, %v2380
      %v2386 = vadd.f32 %v2369, %v2381
      %v2387 = vadd.f32 %v2370, %v2382
      %v2388 = vadd.f32 %v2371, %v2380
      %2389 = vst [vmem:[#allocation4] sm:$0xf] %v2386
      %2390 = vst [vmem:[#allocation4 + $0x8] sm:$0xf] %v2387
      %2391 = vst.msk [vmem:[#allocation4 + $0x10] sm:$0xf] %vm811, %v2388
      %2395 = vrot.lane.b32.xlu0 %v2386, 19
      %v2396 = vpop.permute.xlu0 %2395
      %2397 = vrot.lane.b32.xlu0 %v2387, 19
      %v2398 = vpop.permute.xlu0 %2397
      %2399 = vrot.lane.b32.xlu0 %v2388, 19
      %v2400 = vpop.permute.xlu0 %2399
      %v2401 = vsel %vm1205, %v2396, %v2398
      %v2402 = vsel %vm1205, %v2398, %v2400
      %2406 = vst.msk [vmem:[#allocation2] sm:$0xf] %vm1582, %v2396
      %2407 = vst [vmem:[#allocation2 + $0x8] sm:$0xf] %v2401
      %2408 = vst.msk [vmem:[#allocation2 + $0x10] sm:$0xf] %vm1585, %v2402
      %v2409 = vld [vmem:[#allocation2] sm:$0xf]
      %v2410 = vld [vmem:[#allocation2 + $0x8] sm:$0xf]
      %v2411 = vld [vmem:[#allocation2 + $0x10] sm:$0xf]
      %2412 = vst [vmem:[#allocation3] sm:$0xf] %v2409
      %2413 = vst [vmem:[#allocation3 + $0x8] sm:$0xf] %v2410
      %2414 = vst.msk [vmem:[#allocation3 + $0x10] sm:$0xf] %vm811, %v2411
      %v2415 = vld [vmem:[#allocation2] sm:$0xf]
      %v2416 = vld [vmem:[#allocation2 + $0x8] sm:$0xf]
      %v2417 = vld [vmem:[#allocation2 + $0x10] sm:$0xf]
      %v2421 = vrot.slane %v2415, 4
      %v2422 = vrot.slane %v2416, 4
      %v2423 = vrot.slane %v2417, 4
      %2424 = vrot.lane.b32.xlu0 %v2421, 127
      %v2425 = vpop.permute.xlu0 %2424
      %2426 = vrot.lane.b32.xlu0 %v2422, 127
      %v2427 = vpop.permute.xlu0 %2426
      %2428 = vrot.lane.b32.xlu0 %v2423, 127
      %v2429 = vpop.permute.xlu0 %2428
      %v2430 = vsel %vm828, %v2425, %v2427
      %v2431 = vsel %vm828, %v2427, %v2429
      %2435 = vst [vmem:[#allocation3] sm:$0xf0] %v2430
      %2436 = vst [vmem:[#allocation3 + $0x8] sm:$0xf0] %v2431
      %2437 = vst.msk [vmem:[#allocation3 + $0x10] sm:$0xf0] %vm836, %v2429
      %v2438 = vld [vmem:[#allocation2] sm:$0xf]
      %v2439 = vld [vmem:[#allocation2 + $0x8] sm:$0xf]
      %v2440 = vld [vmem:[#allocation2 + $0x10] sm:$0xf]
      %2444 = vrot.lane.b32.xlu0 %v2438, 126
      %v2445 = vpop.permute.xlu0 %2444
      %2446 = vrot.lane.b32.xlu0 %v2439, 126
      %v2447 = vpop.permute.xlu0 %2446
      %2448 = vrot.lane.b32.xlu0 %v2440, 126
      %v2449 = vpop.permute.xlu0 %2448
      %v2450 = vsel %vm850, %v2445, %v2447
      %v2451 = vsel %vm850, %v2447, %v2449
      %2455 = vst [vmem:[#allocation3 + $0x18] sm:$0xf] %v2450
      %2456 = vst [vmem:[#allocation3 + $0x20] sm:$0xf] %v2451
      %2457 = vst.msk [vmem:[#allocation3 + $0x28] sm:$0xf] %vm811, %v2449
      %v2458 = vld [vmem:[#allocation2] sm:$0xf]
      %v2459 = vld [vmem:[#allocation2 + $0x8] sm:$0xf]
      %v2460 = vld [vmem:[#allocation2 + $0x10] sm:$0xf]
      %v2464 = vrot.slane %v2458, 4
      %v2465 = vrot.slane %v2459, 4
      %v2466 = vrot.slane %v2460, 4
      %2467 = vrot.lane.b32.xlu0 %v2464, 110
      %v2468 = vpop.permute.xlu0 %2467
      %2469 = vrot.lane.b32.xlu0 %v2465, 110
      %v2470 = vpop.permute.xlu0 %2469
      %2471 = vrot.lane.b32.xlu0 %v2466, 110
      %v2472 = vpop.permute.xlu0 %2471
      %v2473 = vsel %vm874, %v2468, %v2470
      %v2474 = vsel %vm874, %v2470, %v2472
      %2478 = vst [vmem:[#allocation3 + $0x18] sm:$0xf0] %v2473
      %2479 = vst [vmem:[#allocation3 + $0x20] sm:$0xf0] %v2474
      %2480 = vst.msk [vmem:[#allocation3 + $0x28] sm:$0xf0] %vm836, %v2472
      %v2481 = vld [vmem:[#allocation2] sm:$0xf]
      %v2482 = vld [vmem:[#allocation2 + $0x8] sm:$0xf]
      %v2483 = vld [vmem:[#allocation2 + $0x10] sm:$0xf]
      %2487 = vrot.lane.b32.xlu0 %v2481, 109
      %v2488 = vpop.permute.xlu0 %2487
      %2489 = vrot.lane.b32.xlu0 %v2482, 109
      %v2490 = vpop.permute.xlu0 %2489
      %2491 = vrot.lane.b32.xlu0 %v2483, 109
      %v2492 = vpop.permute.xlu0 %2491
      %v2493 = vsel %vm895, %v2488, %v2490
      %v2494 = vsel %vm895, %v2490, %v2492
      %2498 = vst [vmem:[#allocation3 + $0x30] sm:$0xf] %v2493
      %2499 = vst [vmem:[#allocation3 + $0x38] sm:$0xf] %v2494
      %2500 = vst.msk [vmem:[#allocation3 + $0x40] sm:$0xf] %vm811, %v2492
      %v2501 = vld [vmem:[#allocation2] sm:$0xf]
      %v2502 = vld [vmem:[#allocation2 + $0x8] sm:$0xf]
      %v2503 = vld [vmem:[#allocation2 + $0x10] sm:$0xf]
      %v2507 = vrot.slane %v2501, 4
      %v2508 = vrot.slane %v2502, 4
      %v2509 = vrot.slane %v2503, 4
      %2510 = vrot.lane.b32.xlu0 %v2507, 108
      %v2511 = vpop.permute.xlu0 %2510
      %2512 = vrot.lane.b32.xlu0 %v2508, 108
      %v2513 = vpop.permute.xlu0 %2512
      %2514 = vrot.lane.b32.xlu0 %v2509, 108
      %v2515 = vpop.permute.xlu0 %2514
      %v2516 = vsel %vm919, %v2511, %v2513
      %v2517 = vsel %vm919, %v2513, %v2515
      %2521 = vst [vmem:[#allocation3 + $0x30] sm:$0xf0] %v2516
      %2522 = vst [vmem:[#allocation3 + $0x38] sm:$0xf0] %v2517
      %2523 = vst.msk [vmem:[#allocation3 + $0x40] sm:$0xf0] %vm836, %v2515
      %v2524 = vld [vmem:[#allocation2] sm:$0xf]
      %v2525 = vld [vmem:[#allocation2 + $0x8] sm:$0xf]
      %v2526 = vld [vmem:[#allocation2 + $0x10] sm:$0xf]
      %2530 = vrot.lane.b32.xlu0 %v2524, 92
      %v2531 = vpop.permute.xlu0 %2530
      %2532 = vrot.lane.b32.xlu0 %v2525, 92
      %v2533 = vpop.permute.xlu0 %2532
      %2534 = vrot.lane.b32.xlu0 %v2526, 92
      %v2535 = vpop.permute.xlu0 %2534
      %v2536 = vsel %vm940, %v2531, %v2533
      %v2537 = vsel %vm940, %v2533, %v2535
      %2541 = vst [vmem:[#allocation3 + $0x48] sm:$0xf] %v2536
      %2542 = vst [vmem:[#allocation3 + $0x50] sm:$0xf] %v2537
      %2543 = vst.msk [vmem:[#allocation3 + $0x58] sm:$0xf] %vm811, %v2535
      %v2544 = vld [vmem:[#allocation2] sm:$0xf]
      %v2545 = vld [vmem:[#allocation2 + $0x8] sm:$0xf]
      %v2546 = vld [vmem:[#allocation2 + $0x10] sm:$0xf]
      %v2550 = vrot.slane %v2544, 4
      %v2551 = vrot.slane %v2545, 4
      %v2552 = vrot.slane %v2546, 4
      %2553 = vrot.lane.b32.xlu0 %v2550, 91
      %v2554 = vpop.permute.xlu0 %2553
      %2555 = vrot.lane.b32.xlu0 %v2551, 91
      %v2556 = vpop.permute.xlu0 %2555
      %2557 = vrot.lane.b32.xlu0 %v2552, 91
      %v2558 = vpop.permute.xlu0 %2557
      %v2559 = vsel %vm964, %v2554, %v2556
      %v2560 = vsel %vm964, %v2556, %v2558
      %2564 = vst [vmem:[#allocation3 + $0x48] sm:$0xf0] %v2559
      %2565 = vst [vmem:[#allocation3 + $0x50] sm:$0xf0] %v2560
      %2566 = vst.msk [vmem:[#allocation3 + $0x58] sm:$0xf0] %vm836, %v2558
      %v2567 = vld [vmem:[#allocation2] sm:$0xf]
      %v2568 = vld [vmem:[#allocation2 + $0x8] sm:$0xf]
      %v2569 = vld [vmem:[#allocation2 + $0x10] sm:$0xf]
      %2573 = vrot.lane.b32.xlu0 %v2567, 90
      %v2574 = vpop.permute.xlu0 %2573
      %2575 = vrot.lane.b32.xlu0 %v2568, 90
      %v2576 = vpop.permute.xlu0 %2575
      %2577 = vrot.lane.b32.xlu0 %v2569, 90
      %v2578 = vpop.permute.xlu0 %2577
      %v2579 = vsel %vm985, %v2574, %v2576
      %v2580 = vsel %vm985, %v2576, %v2578
      %2584 = vst [vmem:[#allocation3 + $0x60] sm:$0xf] %v2579
      %2585 = vst [vmem:[#allocation3 + $0x68] sm:$0xf] %v2580
      %2586 = vst.msk [vmem:[#allocation3 + $0x70] sm:$0xf] %vm811, %v2578
      %v2587 = vld [vmem:[%s10] sm:$0xf]
      %v2588 = vld [vmem:[#allocation3] sm:$0xff]
      %v2589 = vld [vmem:[#allocation3 + $0x8] sm:$0xff]
      %v2590 = vld [vmem:[#allocation3 + $0x10] sm:$0xff]
      %v2591 = vld [vmem:[#allocation3 + $0x18] sm:$0xff]
      %v2592 = vld [vmem:[#allocation3 + $0x20] sm:$0xff]
      %v2593 = vld [vmem:[#allocation3 + $0x28] sm:$0xff]
      %v2594 = vld [vmem:[#allocation3 + $0x30] sm:$0xff]
      %v2595 = vld [vmem:[#allocation3 + $0x38] sm:$0xff]
      %v2596 = vld [vmem:[#allocation3 + $0x40] sm:$0xff]
      %v2597 = vld [vmem:[#allocation3 + $0x48] sm:$0xff]
      %v2598 = vld [vmem:[#allocation3 + $0x50] sm:$0xff]
      %v2599 = vld [vmem:[#allocation3 + $0x58] sm:$0xff]
      %v2600 = vld [vmem:[#allocation3 + $0x60] sm:$0xf]
      %v2601 = vld [vmem:[#allocation3 + $0x68] sm:$0xf]
      %v2602 = vld [vmem:[#allocation3 + $0x70] sm:$0xf]
      %v2603 = vld [vmem:[%s11] sm:$0xf]
      %2605 = vset.pattern.permute.xlu0 0
      %2606 = vperm.xlu0 %2605, %v2603
      %v2607 = vpop.permute.xlu0 %2606
      %v2610 = vsel %vm1016, %v2587, 0
      %v2613 = vsel %vm1020, %v2600, 0
      %v2616 = vsel %vm1020, %v2601, 0
      %v2619 = vsel %vm1020, %v2602, 0
      %2621 = vmatprep.subr.mxu0 0.0
      %2622 = vmatpush1.msra.mxu0 0.0
      %2623 = vmatprep.subr.mxu0 0.0
      %2624 = vmatpush1.msra.mxu0 0.0
      %2625 = vmatprep.subr.mxu0 0.0
      %2626 = vmatpush1.msra.mxu0 0.0
      %2627 = vmatprep.subr.mxu0 0.0
      %2628 = vmatpush1.msra.mxu0 0.0
      %2629 = vmatprep.subr.mxu0 0.0
      %2630 = vmatpush1.msra.mxu0 0.0
      %2631 = vmatprep.subr.mxu0 0.0
      %2632 = vmatpush1.msra.mxu0 0.0
      %2633 = vmatprep.subr.mxu0 0.0
      %2634 = vmatpush1.msra.mxu0 0.0
      %2635 = vmatprep.subr.mxu0 0.0
      %2636 = vmatpush1.msra.mxu0 0.0
      %2637 = vmatprep.subr.mxu0 0.0
      %2638 = vmatpush1.msra.mxu0 0.0
      %2639 = vmatprep.subr.mxu0 0.0
      %2640 = vmatpush1.msra.mxu0 0.0
      %2641 = vmatprep.subr.mxu0 0.0
      %2642 = vmatpush1.msra.mxu0 0.0
      %2643 = vmatprep.subr.mxu0 %v2616
      %2644 = vmatpush1.msra.mxu0 %v2613
      %2645 = vmatprep.subr.mxu0 %v2598
      %2646 = vmatpush1.msra.mxu0 %v2597
      %2647 = vmatprep.subr.mxu0 %v2595
      %2648 = vmatpush1.msra.mxu0 %v2594
      %2649 = vmatprep.subr.mxu0 %v2592
      %2650 = vmatpush1.msra.mxu0 %v2591
      %2651 = vmatprep.subr.mxu0 %v2589
      %2652 = vmatpush1.msra.mxu0 %v2588
      %2653 = vmatprep.subr.mxu0 0.0
      %2654 = vmatpush2.msra.mxu0 0.0
      %2655 = vmatprep.subr.mxu0 0.0
      %2656 = vmatpush2.msra.mxu0 0.0
      %2657 = vmatprep.subr.mxu0 0.0
      %2658 = vmatpush2.msra.mxu0 0.0
      %2659 = vmatprep.subr.mxu0 0.0
      %2660 = vmatpush2.msra.mxu0 0.0
      %2661 = vmatprep.subr.mxu0 0.0
      %2662 = vmatpush2.msra.mxu0 0.0
      %2663 = vmatprep.subr.mxu0 0.0
      %2664 = vmatpush2.msra.mxu0 0.0
      %2665 = vmatprep.subr.mxu0 0.0
      %2666 = vmatpush2.msra.mxu0 0.0
      %2667 = vmatprep.subr.mxu0 0.0
      %2668 = vmatpush2.msra.mxu0 0.0
      %2669 = vmatprep.subr.mxu0 0.0
      %2670 = vmatpush2.msra.mxu0 0.0
      %2671 = vmatprep.subr.mxu0 0.0
      %2672 = vmatpush2.msra.mxu0 0.0
      %2673 = vmatprep.subr.mxu0 0.0
      %2674 = vmatpush2.msra.mxu0 0.0
      %2675 = vmatprep.subr.mxu0 0.0
      %2676 = vmatpush2.msra.mxu0 0.0
      %2677 = vmatprep.subr.mxu0 0.0
      %2678 = vmatpush2.msra.mxu0 0.0
      %2679 = vmatprep.subr.mxu0 0.0
      %2680 = vmatpush2.msra.mxu0 0.0
      %2681 = vmatprep.subr.mxu0 0.0
      %2682 = vmatpush2.msra.mxu0 0.0
      %2683 = vmatprep.subr.mxu0 0.0
      %2684 = vmatpush2.msra.mxu0 0.0
      %2685 = vmatprep.mubr.f32.mxu0 0.0
      %2686 = vmatmul.mubr.f32.gmra.mxu0 %v2610
      %v2687 = vpop.f32.mrf.mxu0
      %v2688 = vadd.f32 %v2607, %v2687
      %v2689 = vpop.f32.mrf.mxu0
      %v2690 = vadd.f32 %v2607, %v2689
      %2691 = vdwg.mxu0
      %2692 = vmatprep.subr.mxu0 0.0
      %2693 = vmatpush1.msra.mxu0 0.0
      %2694 = vmatprep.subr.mxu0 0.0
      %2695 = vmatpush1.msra.mxu0 0.0
      %2696 = vmatprep.subr.mxu0 0.0
      %2697 = vmatpush1.msra.mxu0 0.0
      %2698 = vmatprep.subr.mxu0 0.0
      %2699 = vmatpush1.msra.mxu0 0.0
      %2700 = vmatprep.subr.mxu0 0.0
      %2701 = vmatpush1.msra.mxu0 0.0
      %2702 = vmatprep.subr.mxu0 0.0
      %2703 = vmatpush1.msra.mxu0 0.0
      %2704 = vmatprep.subr.mxu0 0.0
      %2705 = vmatpush1.msra.mxu0 0.0
      %2706 = vmatprep.subr.mxu0 0.0
      %2707 = vmatpush1.msra.mxu0 0.0
      %2708 = vmatprep.subr.mxu0 0.0
      %2709 = vmatpush1.msra.mxu0 0.0
      %2710 = vmatprep.subr.mxu0 0.0
      %2711 = vmatpush1.msra.mxu0 0.0
      %2712 = vmatprep.subr.mxu0 0.0
      %2713 = vmatpush1.msra.mxu0 0.0
      %2714 = vmatprep.subr.mxu0 0.0
      %2715 = vmatpush1.msra.mxu0 %v2619
      %2716 = vmatprep.subr.mxu0 0.0
      %2717 = vmatpush1.msra.mxu0 %v2599
      %2718 = vmatprep.subr.mxu0 0.0
      %2719 = vmatpush1.msra.mxu0 %v2596
      %2720 = vmatprep.subr.mxu0 0.0
      %2721 = vmatpush1.msra.mxu0 %v2593
      %2722 = vmatprep.subr.mxu0 0.0
      %2723 = vmatpush1.msra.mxu0 %v2590
      %2724 = vmatprep.subr.mxu0 0.0
      %2725 = vmatpush2.msra.mxu0 0.0
      %2726 = vmatprep.subr.mxu0 0.0
      %2727 = vmatpush2.msra.mxu0 0.0
      %2728 = vmatprep.subr.mxu0 0.0
      %2729 = vmatpush2.msra.mxu0 0.0
      %2730 = vmatprep.subr.mxu0 0.0
      %2731 = vmatpush2.msra.mxu0 0.0
      %2732 = vmatprep.subr.mxu0 0.0
      %2733 = vmatpush2.msra.mxu0 0.0
      %2734 = vmatprep.subr.mxu0 0.0
      %2735 = vmatpush2.msra.mxu0 0.0
      %2736 = vmatprep.subr.mxu0 0.0
      %2737 = vmatpush2.msra.mxu0 0.0
      %2738 = vmatprep.subr.mxu0 0.0
      %2739 = vmatpush2.msra.mxu0 0.0
      %2740 = vmatprep.subr.mxu0 0.0
      %2741 = vmatpush2.msra.mxu0 0.0
      %2742 = vmatprep.subr.mxu0 0.0
      %2743 = vmatpush2.msra.mxu0 0.0
      %2744 = vmatprep.subr.mxu0 0.0
      %2745 = vmatpush2.msra.mxu0 0.0
      %2746 = vmatprep.subr.mxu0 0.0
      %2747 = vmatpush2.msra.mxu0 0.0
      %2748 = vmatprep.subr.mxu0 0.0
      %2749 = vmatpush2.msra.mxu0 0.0
      %2750 = vmatprep.subr.mxu0 0.0
      %2751 = vmatpush2.msra.mxu0 0.0
      %2752 = vmatprep.subr.mxu0 0.0
      %2753 = vmatpush2.msra.mxu0 0.0
      %2754 = vmatprep.subr.mxu0 0.0
      %2755 = vmatpush2.msra.mxu0 0.0
      %2756 = vmatprep.mubr.f32.mxu0 0.0
      %2757 = vmatmul.mubr.f32.gmra.mxu0 %v2610
      %v2758 = vpop.f32.mrf.mxu0
      %v2759 = vadd.f32 %v2607, %v2758
      %v2760 = vpop.f32.mrf.mxu0
      %2761 = vdwg.mxu0
      %v2762 = vmax.f32 %v2688, 0.0
      %v2763 = vmax.f32 %v2690, 0.0
      %v2764 = vmax.f32 %v2759, 0.0
      %v2765 = vmul.f32 %v2762, %v1178
      %v2766 = vmul.f32 %v2763, %v1182
      %v2767 = vmul.f32 %v2764, %v1186
      %v2771 = vrot.slane %v2765, 4
      %v2772 = vrot.slane %v2766, 4
      %v2773 = vrot.slane %v2767, 4
      %2774 = vrot.lane.b32.xlu0 %v2771, 19
      %v2775 = vpop.permute.xlu0 %2774
      %2776 = vrot.lane.b32.xlu0 %v2772, 19
      %v2777 = vpop.permute.xlu0 %2776
      %2778 = vrot.lane.b32.xlu0 %v2773, 19
      %v2779 = vpop.permute.xlu0 %2778
      %v2780 = vsel %vm1205, %v2775, %v2777
      %v2781 = vsel %vm1205, %v2777, %v2779
      %2785 = vst.msk [vmem:[#allocation2] sm:$0xf0] %vm1211, %v2775
      %2786 = vst [vmem:[#allocation2 + $0x8] sm:$0xf0] %v2780
      %2787 = vst.msk [vmem:[#allocation2 + $0x10] sm:$0xf0] %vm1214, %v2781
      %v2788 = vld [vmem:[#allocation2] sm:$0xff]
      %v2789 = vld [vmem:[#allocation2 + $0x8] sm:$0xff]
      %v2790 = vld [vmem:[#allocation2 + $0x10] sm:$0xff]
      %2791 = vst [vmem:[#allocation3] sm:$0xff] %v2788
      %2792 = vst [vmem:[#allocation3 + $0x8] sm:$0xff] %v2789
      %2793 = vst.msk [vmem:[#allocation3 + $0x10] sm:$0xff] %vm1221, %v2790
      %v2794 = vld [vmem:[#allocation2] sm:$0xff]
      %v2795 = vld [vmem:[#allocation2 + $0x8] sm:$0xff]
      %v2796 = vld [vmem:[#allocation2 + $0x10] sm:$0xff]
      %2800 = vrot.lane.b32.xlu0 %v2794, 127
      %v2801 = vpop.permute.xlu0 %2800
      %2802 = vrot.lane.b32.xlu0 %v2795, 127
      %v2803 = vpop.permute.xlu0 %2802
      %2804 = vrot.lane.b32.xlu0 %v2796, 127
      %v2805 = vpop.permute.xlu0 %2804
      %v2806 = vsel %vm828, %v2801, %v2803
      %v2807 = vsel %vm828, %v2803, %v2805
      %2811 = vst [vmem:[#allocation3 + $0x18] sm:$0xff] %v2806
      %2812 = vst [vmem:[#allocation3 + $0x20] sm:$0xff] %v2807
      %2813 = vst.msk [vmem:[#allocation3 + $0x28] sm:$0xff] %vm1221, %v2805
      %v2814 = vld [vmem:[#allocation2] sm:$0xff]
      %v2815 = vld [vmem:[#allocation2 + $0x8] sm:$0xff]
      %v2816 = vld [vmem:[#allocation2 + $0x10] sm:$0xff]
      %2820 = vrot.lane.b32.xlu0 %v2814, 126
      %v2821 = vpop.permute.xlu0 %2820
      %2822 = vrot.lane.b32.xlu0 %v2815, 126
      %v2823 = vpop.permute.xlu0 %2822
      %2824 = vrot.lane.b32.xlu0 %v2816, 126
      %v2825 = vpop.permute.xlu0 %2824
      %v2826 = vsel %vm850, %v2821, %v2823
      %v2827 = vsel %vm850, %v2823, %v2825
      %2831 = vst [vmem:[#allocation3 + $0x30] sm:$0xff] %v2826
      %2832 = vst [vmem:[#allocation3 + $0x38] sm:$0xff] %v2827
      %2833 = vst.msk [vmem:[#allocation3 + $0x40] sm:$0xff] %vm1221, %v2825
      %v2834 = vld [vmem:[#allocation2] sm:$0xff]
      %v2835 = vld [vmem:[#allocation2 + $0x8] sm:$0xff]
      %v2836 = vld [vmem:[#allocation2 + $0x10] sm:$0xff]
      %2840 = vrot.lane.b32.xlu0 %v2834, 110
      %v2841 = vpop.permute.xlu0 %2840
      %2842 = vrot.lane.b32.xlu0 %v2835, 110
      %v2843 = vpop.permute.xlu0 %2842
      %2844 = vrot.lane.b32.xlu0 %v2836, 110
      %v2845 = vpop.permute.xlu0 %2844
      %v2846 = vsel %vm874, %v2841, %v2843
      %v2847 = vsel %vm874, %v2843, %v2845
      %2851 = vst [vmem:[#allocation3 + $0x48] sm:$0xff] %v2846
      %2852 = vst [vmem:[#allocation3 + $0x50] sm:$0xff] %v2847
      %2853 = vst.msk [vmem:[#allocation3 + $0x58] sm:$0xff] %vm1221, %v2845
      %v2854 = vld [vmem:[#allocation2] sm:$0xff]
      %v2855 = vld [vmem:[#allocation2 + $0x8] sm:$0xff]
      %v2856 = vld [vmem:[#allocation2 + $0x10] sm:$0xff]
      %2860 = vrot.lane.b32.xlu0 %v2854, 109
      %v2861 = vpop.permute.xlu0 %2860
      %2862 = vrot.lane.b32.xlu0 %v2855, 109
      %v2863 = vpop.permute.xlu0 %2862
      %2864 = vrot.lane.b32.xlu0 %v2856, 109
      %v2865 = vpop.permute.xlu0 %2864
      %v2866 = vsel %vm895, %v2861, %v2863
      %v2867 = vsel %vm895, %v2863, %v2865
      %2871 = vst [vmem:[#allocation3 + $0x60] sm:$0xff] %v2866
      %2872 = vst [vmem:[#allocation3 + $0x68] sm:$0xff] %v2867
      %2873 = vst.msk [vmem:[#allocation3 + $0x70] sm:$0xff] %vm1221, %v2865
      %v2874 = vld [vmem:[#allocation2] sm:$0xff]
      %v2875 = vld [vmem:[#allocation2 + $0x8] sm:$0xff]
      %v2876 = vld [vmem:[#allocation2 + $0x10] sm:$0xff]
      %2880 = vrot.lane.b32.xlu0 %v2874, 108
      %v2881 = vpop.permute.xlu0 %2880
      %2882 = vrot.lane.b32.xlu0 %v2875, 108
      %v2883 = vpop.permute.xlu0 %2882
      %2884 = vrot.lane.b32.xlu0 %v2876, 108
      %v2885 = vpop.permute.xlu0 %2884
      %v2886 = vsel %vm919, %v2881, %v2883
      %v2887 = vsel %vm919, %v2883, %v2885
      %2891 = vst [vmem:[#allocation3 + $0x78] sm:$0xff] %v2886
      %2892 = vst [vmem:[#allocation3 + $0x80] sm:$0xff] %v2887
      %2893 = vst.msk [vmem:[#allocation3 + $0x88] sm:$0xff] %vm1221, %v2885
      %v2894 = vld [vmem:[#allocation2] sm:$0xff]
      %v2895 = vld [vmem:[#allocation2 + $0x8] sm:$0xff]
      %v2896 = vld [vmem:[#allocation2 + $0x10] sm:$0xff]
      %2900 = vrot.lane.b32.xlu0 %v2894, 92
      %v2901 = vpop.permute.xlu0 %2900
      %2902 = vrot.lane.b32.xlu0 %v2895, 92
      %v2903 = vpop.permute.xlu0 %2902
      %2904 = vrot.lane.b32.xlu0 %v2896, 92
      %v2905 = vpop.permute.xlu0 %2904
      %v2906 = vsel %vm940, %v2901, %v2903
      %v2907 = vsel %vm940, %v2903, %v2905
      %2911 = vst [vmem:[#allocation3 + $0x90] sm:$0xff] %v2906
      %2912 = vst [vmem:[#allocation3 + $0x98] sm:$0xff] %v2907
      %2913 = vst.msk [vmem:[#allocation3 + $0xa0] sm:$0xff] %vm1221, %v2905
      %v2914 = vld [vmem:[#allocation2] sm:$0xff]
      %v2915 = vld [vmem:[#allocation2 + $0x8] sm:$0xff]
      %v2916 = vld [vmem:[#allocation2 + $0x10] sm:$0xff]
      %2920 = vrot.lane.b32.xlu0 %v2914, 91
      %v2921 = vpop.permute.xlu0 %2920
      %2922 = vrot.lane.b32.xlu0 %v2915, 91
      %v2923 = vpop.permute.xlu0 %2922
      %2924 = vrot.lane.b32.xlu0 %v2916, 91
      %v2925 = vpop.permute.xlu0 %2924
      %v2926 = vsel %vm964, %v2921, %v2923
      %v2927 = vsel %vm964, %v2923, %v2925
      %2931 = vst [vmem:[#allocation3 + $0xa8] sm:$0xff] %v2926
      %2932 = vst [vmem:[#allocation3 + $0xb0] sm:$0xff] %v2927
      %2933 = vst.msk [vmem:[#allocation3 + $0xb8] sm:$0xff] %vm1221, %v2925
      %v2934 = vld [vmem:[#allocation2] sm:$0xff]
      %v2935 = vld [vmem:[#allocation2 + $0x8] sm:$0xff]
      %v2936 = vld [vmem:[#allocation2 + $0x10] sm:$0xff]
      %2940 = vrot.lane.b32.xlu0 %v2934, 90
      %v2941 = vpop.permute.xlu0 %2940
      %2942 = vrot.lane.b32.xlu0 %v2935, 90
      %v2943 = vpop.permute.xlu0 %2942
      %2944 = vrot.lane.b32.xlu0 %v2936, 90
      %v2945 = vpop.permute.xlu0 %2944
      %v2946 = vsel %vm985, %v2941, %v2943
      %v2947 = vsel %vm985, %v2943, %v2945
      %2951 = vst [vmem:[#allocation3 + $0xc0] sm:$0xff] %v2946
      %2952 = vst [vmem:[#allocation3 + $0xc8] sm:$0xff] %v2947
      %2953 = vst.msk [vmem:[#allocation3 + $0xd0] sm:$0xff] %vm1221, %v2945
      %v2954 = vld [vmem:[%s12] sm:$0xf]
      %v2955 = vld [vmem:[#allocation3] sm:$0xff]
      %v2956 = vld [vmem:[#allocation3 + $0x8] sm:$0xff]
      %v2957 = vld [vmem:[#allocation3 + $0x10] sm:$0xff]
      %v2958 = vld [vmem:[#allocation3 + $0x18] sm:$0xff]
      %v2959 = vld [vmem:[#allocation3 + $0x20] sm:$0xff]
      %v2960 = vld [vmem:[#allocation3 + $0x28] sm:$0xff]
      %v2961 = vld [vmem:[#allocation3 + $0x30] sm:$0xff]
      %v2962 = vld [vmem:[#allocation3 + $0x38] sm:$0xff]
      %v2963 = vld [vmem:[#allocation3 + $0x40] sm:$0xff]
      %v2964 = vld [vmem:[#allocation3 + $0x48] sm:$0xff]
      %v2965 = vld [vmem:[#allocation3 + $0x50] sm:$0xff]
      %v2966 = vld [vmem:[#allocation3 + $0x58] sm:$0xff]
      %v2967 = vld [vmem:[#allocation3 + $0x60] sm:$0xff]
      %v2968 = vld [vmem:[#allocation3 + $0x68] sm:$0xff]
      %v2969 = vld [vmem:[#allocation3 + $0x70] sm:$0xff]
      %v2970 = vld [vmem:[#allocation3 + $0x78] sm:$0xff]
      %v2971 = vld [vmem:[#allocation3 + $0x80] sm:$0xff]
      %v2972 = vld [vmem:[#allocation3 + $0x88] sm:$0xff]
      %v2973 = vld [vmem:[#allocation3 + $0x90] sm:$0xff]
      %v2974 = vld [vmem:[#allocation3 + $0x98] sm:$0xff]
      %v2975 = vld [vmem:[#allocation3 + $0xa0] sm:$0xff]
      %v2976 = vld [vmem:[#allocation3 + $0xa8] sm:$0xff]
      %v2977 = vld [vmem:[#allocation3 + $0xb0] sm:$0xff]
      %v2978 = vld [vmem:[#allocation3 + $0xb8] sm:$0xff]
      %v2979 = vld [vmem:[#allocation3 + $0xc0] sm:$0xff]
      %v2980 = vld [vmem:[#allocation3 + $0xc8] sm:$0xff]
      %v2981 = vld [vmem:[#allocation3 + $0xd0] sm:$0xff]
      %v2982 = vld [vmem:[%s13] sm:$0xf]
      %2984 = vset.pattern.permute.xlu0 0
      %2985 = vperm.xlu0 %2984, %v2982
      %v2986 = vpop.permute.xlu0 %2985
      %v2989 = vsel %vm1417, %v2954, 0
      %2991 = vmatprep.subr.mxu0 0.0
      %2992 = vmatpush1.msra.mxu0 0.0
      %2993 = vmatprep.subr.mxu0 0.0
      %2994 = vmatpush1.msra.mxu0 0.0
      %2995 = vmatprep.subr.mxu0 0.0
      %2996 = vmatpush1.msra.mxu0 0.0
      %2997 = vmatprep.subr.mxu0 0.0
      %2998 = vmatpush1.msra.mxu0 0.0
      %2999 = vmatprep.subr.mxu0 0.0
      %3000 = vmatpush1.msra.mxu0 0.0
      %3001 = vmatprep.subr.mxu0 0.0
      %3002 = vmatpush1.msra.mxu0 0.0
      %3003 = vmatprep.subr.mxu0 0.0
      %3004 = vmatpush1.msra.mxu0 0.0
      %3005 = vmatprep.subr.mxu0 %v2980
      %3006 = vmatpush1.msra.mxu0 %v2979
      %3007 = vmatprep.subr.mxu0 %v2977
      %3008 = vmatpush1.msra.mxu0 %v2976
      %3009 = vmatprep.subr.mxu0 %v2974
      %3010 = vmatpush1.msra.mxu0 %v2973
      %3011 = vmatprep.subr.mxu0 %v2971
      %3012 = vmatpush1.msra.mxu0 %v2970
      %3013 = vmatprep.subr.mxu0 %v2968
      %3014 = vmatpush1.msra.mxu0 %v2967
      %3015 = vmatprep.subr.mxu0 %v2965
      %3016 = vmatpush1.msra.mxu0 %v2964
      %3017 = vmatprep.subr.mxu0 %v2962
      %3018 = vmatpush1.msra.mxu0 %v2961
      %3019 = vmatprep.subr.mxu0 %v2959
      %3020 = vmatpush1.msra.mxu0 %v2958
      %3021 = vmatprep.subr.mxu0 %v2956
      %3022 = vmatpush1.msra.mxu0 %v2955
      %3023 = vmatprep.subr.mxu0 0.0
      %3024 = vmatpush2.msra.mxu0 0.0
      %3025 = vmatprep.subr.mxu0 0.0
      %3026 = vmatpush2.msra.mxu0 0.0
      %3027 = vmatprep.subr.mxu0 0.0
      %3028 = vmatpush2.msra.mxu0 0.0
      %3029 = vmatprep.subr.mxu0 0.0
      %3030 = vmatpush2.msra.mxu0 0.0
      %3031 = vmatprep.subr.mxu0 0.0
      %3032 = vmatpush2.msra.mxu0 0.0
      %3033 = vmatprep.subr.mxu0 0.0
      %3034 = vmatpush2.msra.mxu0 0.0
      %3035 = vmatprep.subr.mxu0 0.0
      %3036 = vmatpush2.msra.mxu0 0.0
      %3037 = vmatprep.subr.mxu0 0.0
      %3038 = vmatpush2.msra.mxu0 0.0
      %3039 = vmatprep.subr.mxu0 0.0
      %3040 = vmatpush2.msra.mxu0 0.0
      %3041 = vmatprep.subr.mxu0 0.0
      %3042 = vmatpush2.msra.mxu0 0.0
      %3043 = vmatprep.subr.mxu0 0.0
      %3044 = vmatpush2.msra.mxu0 0.0
      %3045 = vmatprep.subr.mxu0 0.0
      %3046 = vmatpush2.msra.mxu0 0.0
      %3047 = vmatprep.subr.mxu0 0.0
      %3048 = vmatpush2.msra.mxu0 0.0
      %3049 = vmatprep.subr.mxu0 0.0
      %3050 = vmatpush2.msra.mxu0 0.0
      %3051 = vmatprep.subr.mxu0 0.0
      %3052 = vmatpush2.msra.mxu0 0.0
      %3053 = vmatprep.subr.mxu0 0.0
      %3054 = vmatpush2.msra.mxu0 0.0
      %3055 = vmatprep.mubr.f32.mxu0 0.0
      %3056 = vmatmul.mubr.f32.gmra.mxu0 %v2989
      %v3057 = vpop.f32.mrf.mxu0
      %v3058 = vadd.f32 %v2986, %v3057
      %v3059 = vpop.f32.mrf.mxu0
      %v3060 = vadd.f32 %v2986, %v3059
      %3061 = vdwg.mxu0
      %3062 = vmatprep.subr.mxu0 0.0
      %3063 = vmatpush1.msra.mxu0 0.0
      %3064 = vmatprep.subr.mxu0 0.0
      %3065 = vmatpush1.msra.mxu0 0.0
      %3066 = vmatprep.subr.mxu0 0.0
      %3067 = vmatpush1.msra.mxu0 0.0
      %3068 = vmatprep.subr.mxu0 0.0
      %3069 = vmatpush1.msra.mxu0 0.0
      %3070 = vmatprep.subr.mxu0 0.0
      %3071 = vmatpush1.msra.mxu0 0.0
      %3072 = vmatprep.subr.mxu0 0.0
      %3073 = vmatpush1.msra.mxu0 0.0
      %3074 = vmatprep.subr.mxu0 0.0
      %3075 = vmatpush1.msra.mxu0 0.0
      %3076 = vmatprep.subr.mxu0 0.0
      %3077 = vmatpush1.msra.mxu0 %v2981
      %3078 = vmatprep.subr.mxu0 0.0
      %3079 = vmatpush1.msra.mxu0 %v2978
      %3080 = vmatprep.subr.mxu0 0.0
      %3081 = vmatpush1.msra.mxu0 %v2975
      %3082 = vmatprep.subr.mxu0 0.0
      %3083 = vmatpush1.msra.mxu0 %v2972
      %3084 = vmatprep.subr.mxu0 0.0
      %3085 = vmatpush1.msra.mxu0 %v2969
      %3086 = vmatprep.subr.mxu0 0.0
      %3087 = vmatpush1.msra.mxu0 %v2966
      %3088 = vmatprep.subr.mxu0 0.0
      %3089 = vmatpush1.msra.mxu0 %v2963
      %3090 = vmatprep.subr.mxu0 0.0
      %3091 = vmatpush1.msra.mxu0 %v2960
      %3092 = vmatprep.subr.mxu0 0.0
      %3093 = vmatpush1.msra.mxu0 %v2957
      %3094 = vmatprep.subr.mxu0 0.0
      %3095 = vmatpush2.msra.mxu0 0.0
      %3096 = vmatprep.subr.mxu0 0.0
      %3097 = vmatpush2.msra.mxu0 0.0
      %3098 = vmatprep.subr.mxu0 0.0
      %3099 = vmatpush2.msra.mxu0 0.0
      %3100 = vmatprep.subr.mxu0 0.0
      %3101 = vmatpush2.msra.mxu0 0.0
      %3102 = vmatprep.subr.mxu0 0.0
      %3103 = vmatpush2.msra.mxu0 0.0
      %3104 = vmatprep.subr.mxu0 0.0
      %3105 = vmatpush2.msra.mxu0 0.0
      %3106 = vmatprep.subr.mxu0 0.0
      %3107 = vmatpush2.msra.mxu0 0.0
      %3108 = vmatprep.subr.mxu0 0.0
      %3109 = vmatpush2.msra.mxu0 0.0
      %3110 = vmatprep.subr.mxu0 0.0
      %3111 = vmatpush2.msra.mxu0 0.0
      %3112 = vmatprep.subr.mxu0 0.0
      %3113 = vmatpush2.msra.mxu0 0.0
      %3114 = vmatprep.subr.mxu0 0.0
      %3115 = vmatpush2.msra.mxu0 0.0
      %3116 = vmatprep.subr.mxu0 0.0
      %3117 = vmatpush2.msra.mxu0 0.0
      %3118 = vmatprep.subr.mxu0 0.0
      %3119 = vmatpush2.msra.mxu0 0.0
      %3120 = vmatprep.subr.mxu0 0.0
      %3121 = vmatpush2.msra.mxu0 0.0
      %3122 = vmatprep.subr.mxu0 0.0
      %3123 = vmatpush2.msra.mxu0 0.0
      %3124 = vmatprep.subr.mxu0 0.0
      %3125 = vmatpush2.msra.mxu0 0.0
      %3126 = vmatprep.mubr.f32.mxu0 0.0
      %3127 = vmatmul.mubr.f32.gmra.mxu0 %v2989
      %v3128 = vpop.f32.mrf.mxu0
      %v3129 = vadd.f32 %v2986, %v3128
      %v3130 = vpop.f32.mrf.mxu0
      %3131 = vdwg.mxu0
      %v3132 = vmax.f32 %v3058, 0.0
      %v3133 = vmax.f32 %v3060, 0.0
      %v3134 = vmax.f32 %v3129, 0.0
      %v3135 = vmul.f32 %v3132, %v1178
      %v3136 = vmul.f32 %v3133, %v1182
      %v3137 = vmul.f32 %v3134, %v1186
      %3141 = vrot.lane.b32.xlu0 %v3135, 19
      %v3142 = vpop.permute.xlu0 %3141
      %3143 = vrot.lane.b32.xlu0 %v3136, 19
      %v3144 = vpop.permute.xlu0 %3143
      %3145 = vrot.lane.b32.xlu0 %v3137, 19
      %v3146 = vpop.permute.xlu0 %3145
      %v3147 = vsel %vm1205, %v3142, %v3144
      %v3148 = vsel %vm1205, %v3144, %v3146
      %3152 = vst.msk [vmem:[#allocation2 + $0x18] sm:$0xf] %vm1582, %v3142
      %3153 = vst [vmem:[#allocation2 + $0x20] sm:$0xf] %v3147
      %3154 = vst.msk [vmem:[#allocation2 + $0x28] sm:$0xf] %vm1585, %v3148
      %v3155 = vld [vmem:[#allocation2] sm:$0xff]
      %v3156 = vld [vmem:[#allocation2 + $0x8] sm:$0xff]
      %v3157 = vld [vmem:[#allocation2 + $0x10] sm:$0xff]
      %v3158 = vld [vmem:[#allocation2 + $0x18] sm:$0xf]
      %v3159 = vld [vmem:[#allocation2 + $0x20] sm:$0xf]
      %v3160 = vld [vmem:[#allocation2 + $0x28] sm:$0xf]
      %3161 = vst [vmem:[#allocation3] sm:$0xff] %v3155
      %3162 = vst [vmem:[#allocation3 + $0x8] sm:$0xff] %v3156
      %3163 = vst.msk [vmem:[#allocation3 + $0x10] sm:$0xff] %vm1221, %v3157
      %3164 = vst [vmem:[#allocation3 + $0x18] sm:$0xf] %v3158
      %3165 = vst [vmem:[#allocation3 + $0x20] sm:$0xf] %v3159
      %3166 = vst.msk [vmem:[#allocation3 + $0x28] sm:$0xf] %vm811, %v3160
      %v3167 = vld [vmem:[#allocation2] sm:$0xff]
      %v3168 = vld [vmem:[#allocation2 + $0x8] sm:$0xff]
      %v3169 = vld [vmem:[#allocation2 + $0x10] sm:$0xff]
      %v3170 = vld [vmem:[#allocation2 + $0x18] sm:$0xf]
      %v3171 = vld [vmem:[#allocation2 + $0x20] sm:$0xf]
      %v3172 = vld [vmem:[#allocation2 + $0x28] sm:$0xf]
      %v3179 = vrot.slane %v3167, 4
      %v3180 = vrot.slane %v3168, 4
      %v3181 = vrot.slane %v3169, 4
      %v3182 = vrot.slane %v3170, 4
      %v3183 = vsel %vm1020, %v3179, %v3182
      %v3184 = vrot.slane %v3171, 4
      %v3185 = vsel %vm1020, %v3180, %v3184
      %v3186 = vrot.slane %v3172, 4
      %v3187 = vsel %vm1020, %v3181, %v3186
      %3188 = vrot.lane.b32.xlu0 %v3179, 127
      %v3189 = vpop.permute.xlu0 %3188
      %3190 = vrot.lane.b32.xlu0 %v3180, 127
      %v3191 = vpop.permute.xlu0 %3190
      %3192 = vrot.lane.b32.xlu0 %v3181, 127
      %v3193 = vpop.permute.xlu0 %3192
      %3194 = vrot.lane.b32.xlu0 %v3183, 127
      %v3195 = vpop.permute.xlu0 %3194
      %3196 = vrot.lane.b32.xlu0 %v3185, 127
      %v3197 = vpop.permute.xlu0 %3196
      %3198 = vrot.lane.b32.xlu0 %v3187, 127
      %v3199 = vpop.permute.xlu0 %3198
      %v3200 = vsel %vm828, %v3189, %v3191
      %v3201 = vsel %vm828, %v3191, %v3193
      %v3202 = vsel %vm828, %v3195, %v3197
      %v3203 = vsel %vm828, %v3197, %v3199
      %3210 = vst [vmem:[#allocation3 + $0x18] sm:$0xf0] %v3200
      %3211 = vst [vmem:[#allocation3 + $0x20] sm:$0xf0] %v3201
      %3212 = vst.msk [vmem:[#allocation3 + $0x28] sm:$0xf0] %vm836, %v3193
      %3213 = vst [vmem:[#allocation3 + $0x30] sm:$0xff] %v3202
      %3214 = vst [vmem:[#allocation3 + $0x38] sm:$0xff] %v3203
      %3215 = vst.msk [vmem:[#allocation3 + $0x40] sm:$0xff] %vm1221, %v3199
      %v3216 = vld [vmem:[#allocation2] sm:$0xff]
      %v3217 = vld [vmem:[#allocation2 + $0x8] sm:$0xff]
      %v3218 = vld [vmem:[#allocation2 + $0x10] sm:$0xff]
      %v3219 = vld [vmem:[#allocation2 + $0x18] sm:$0xf]
      %v3220 = vld [vmem:[#allocation2 + $0x20] sm:$0xf]
      %v3221 = vld [vmem:[#allocation2 + $0x28] sm:$0xf]
      %3228 = vrot.lane.b32.xlu0 %v3216, 126
      %v3229 = vpop.permute.xlu0 %3228
      %3230 = vrot.lane.b32.xlu0 %v3217, 126
      %v3231 = vpop.permute.xlu0 %3230
      %3232 = vrot.lane.b32.xlu0 %v3218, 126
      %v3233 = vpop.permute.xlu0 %3232
      %3234 = vrot.lane.b32.xlu0 %v3219, 126
      %v3235 = vpop.permute.xlu0 %3234
      %3236 = vrot.lane.b32.xlu0 %v3220, 126
      %v3237 = vpop.permute.xlu0 %3236
      %3238 = vrot.lane.b32.xlu0 %v3221, 126
      %v3239 = vpop.permute.xlu0 %3238
      %v3240 = vsel %vm850, %v3229, %v3231
      %v3241 = vsel %vm850, %v3231, %v3233
      %v3242 = vsel %vm850, %v3235, %v3237
      %v3243 = vsel %vm850, %v3237, %v3239
      %3250 = vst [vmem:[#allocation3 + $0x48] sm:$0xff] %v3240
      %3251 = vst [vmem:[#allocation3 + $0x50] sm:$0xff] %v3241
      %3252 = vst.msk [vmem:[#allocation3 + $0x58] sm:$0xff] %vm1221, %v3233
      %3253 = vst [vmem:[#allocation3 + $0x60] sm:$0xf] %v3242
      %3254 = vst [vmem:[#allocation3 + $0x68] sm:$0xf] %v3243
      %3255 = vst.msk [vmem:[#allocation3 + $0x70] sm:$0xf] %vm811, %v3239
      %v3256 = vld [vmem:[#allocation2] sm:$0xff]
      %v3257 = vld [vmem:[#allocation2 + $0x8] sm:$0xff]
      %v3258 = vld [vmem:[#allocation2 + $0x10] sm:$0xff]
      %v3259 = vld [vmem:[#allocation2 + $0x18] sm:$0xf]
      %v3260 = vld [vmem:[#allocation2 + $0x20] sm:$0xf]
      %v3261 = vld [vmem:[#allocation2 + $0x28] sm:$0xf]
      %v3268 = vrot.slane %v3256, 4
      %v3269 = vrot.slane %v3257, 4
      %v3270 = vrot.slane %v3258, 4
      %v3271 = vrot.slane %v3259, 4
      %v3272 = vsel %vm1020, %v3268, %v3271
      %v3273 = vrot.slane %v3260, 4
      %v3274 = vsel %vm1020, %v3269, %v3273
      %v3275 = vrot.slane %v3261, 4
      %v3276 = vsel %vm1020, %v3270, %v3275
      %3277 = vrot.lane.b32.xlu0 %v3268, 110
      %v3278 = vpop.permute.xlu0 %3277
      %3279 = vrot.lane.b32.xlu0 %v3269, 110
      %v3280 = vpop.permute.xlu0 %3279
      %3281 = vrot.lane.b32.xlu0 %v3270, 110
      %v3282 = vpop.permute.xlu0 %3281
      %3283 = vrot.lane.b32.xlu0 %v3272, 110
      %v3284 = vpop.permute.xlu0 %3283
      %3285 = vrot.lane.b32.xlu0 %v3274, 110
      %v3286 = vpop.permute.xlu0 %3285
      %3287 = vrot.lane.b32.xlu0 %v3276, 110
      %v3288 = vpop.permute.xlu0 %3287
      %v3289 = vsel %vm874, %v3278, %v3280
      %v3290 = vsel %vm874, %v3280, %v3282
      %v3291 = vsel %vm874, %v3284, %v3286
      %v3292 = vsel %vm874, %v3286, %v3288
      %3299 = vst [vmem:[#allocation3 + $0x60] sm:$0xf0] %v3289
      %3300 = vst [vmem:[#allocation3 + $0x68] sm:$0xf0] %v3290
      %3301 = vst.msk [vmem:[#allocation3 + $0x70] sm:$0xf0] %vm836, %v3282
      %3302 = vst [vmem:[#allocation3 + $0x78] sm:$0xff] %v3291
      %3303 = vst [vmem:[#allocation3 + $0x80] sm:$0xff] %v3292
      %3304 = vst.msk [vmem:[#allocation3 + $0x88] sm:$0xff] %vm1221, %v3288
      %v3305 = vld [vmem:[#allocation2] sm:$0xff]
      %v3306 = vld [vmem:[#allocation2 + $0x8] sm:$0xff]
      %v3307 = vld [vmem:[#allocation2 + $0x10] sm:$0xff]
      %v3308 = vld [vmem:[#allocation2 + $0x18] sm:$0xf]
      %v3309 = vld [vmem:[#allocation2 + $0x20] sm:$0xf]
      %v3310 = vld [vmem:[#allocation2 + $0x28] sm:$0xf]
      %3317 = vrot.lane.b32.xlu0 %v3305, 109
      %v3318 = vpop.permute.xlu0 %3317
      %3319 = vrot.lane.b32.xlu0 %v3306, 109
      %v3320 = vpop.permute.xlu0 %3319
      %3321 = vrot.lane.b32.xlu0 %v3307, 109
      %v3322 = vpop.permute.xlu0 %3321
      %3323 = vrot.lane.b32.xlu0 %v3308, 109
      %v3324 = vpop.permute.xlu0 %3323
      %3325 = vrot.lane.b32.xlu0 %v3309, 109
      %v3326 = vpop.permute.xlu0 %3325
      %3327 = vrot.lane.b32.xlu0 %v3310, 109
      %v3328 = vpop.permute.xlu0 %3327
      %v3329 = vsel %vm895, %v3318, %v3320
      %v3330 = vsel %vm895, %v3320, %v3322
      %v3331 = vsel %vm895, %v3324, %v3326
      %v3332 = vsel %vm895, %v3326, %v3328
      %3339 = vst [vmem:[#allocation3 + $0x90] sm:$0xff] %v3329
      %3340 = vst [vmem:[#allocation3 + $0x98] sm:$0xff] %v3330
      %3341 = vst.msk [vmem:[#allocation3 + $0xa0] sm:$0xff] %vm1221, %v3322
      %3342 = vst [vmem:[#allocation3 + $0xa8] sm:$0xf] %v3331
      %3343 = vst [vmem:[#allocation3 + $0xb0] sm:$0xf] %v3332
      %3344 = vst.msk [vmem:[#allocation3 + $0xb8] sm:$0xf] %vm811, %v3328
      %v3345 = vld [vmem:[#allocation2] sm:$0xff]
      %v3346 = vld [vmem:[#allocation2 + $0x8] sm:$0xff]
      %v3347 = vld [vmem:[#allocation2 + $0x10] sm:$0xff]
      %v3348 = vld [vmem:[#allocation2 + $0x18] sm:$0xf]
      %v3349 = vld [vmem:[#allocation2 + $0x20] sm:$0xf]
      %v3350 = vld [vmem:[#allocation2 + $0x28] sm:$0xf]
      %v3357 = vrot.slane %v3345, 4
      %v3358 = vrot.slane %v3346, 4
      %v3359 = vrot.slane %v3347, 4
      %v3360 = vrot.slane %v3348, 4
      %v3361 = vsel %vm1020, %v3357, %v3360
      %v3362 = vrot.slane %v3349, 4
      %v3363 = vsel %vm1020, %v3358, %v3362
      %v3364 = vrot.slane %v3350, 4
      %v3365 = vsel %vm1020, %v3359, %v3364
      %3366 = vrot.lane.b32.xlu0 %v3357, 108
      %v3367 = vpop.permute.xlu0 %3366
      %3368 = vrot.lane.b32.xlu0 %v3358, 108
      %v3369 = vpop.permute.xlu0 %3368
      %3370 = vrot.lane.b32.xlu0 %v3359, 108
      %v3371 = vpop.permute.xlu0 %3370
      %3372 = vrot.lane.b32.xlu0 %v3361, 108
      %v3373 = vpop.permute.xlu0 %3372
      %3374 = vrot.lane.b32.xlu0 %v3363, 108
      %v3375 = vpop.permute.xlu0 %3374
      %3376 = vrot.lane.b32.xlu0 %v3365, 108
      %v3377 = vpop.permute.xlu0 %3376
      %v3378 = vsel %vm919, %v3367, %v3369
      %v3379 = vsel %vm919, %v3369, %v3371
      %v3380 = vsel %vm919, %v3373, %v3375
      %v3381 = vsel %vm919, %v3375, %v3377
      %3388 = vst [vmem:[#allocation3 + $0xa8] sm:$0xf0] %v3378
      %3389 = vst [vmem:[#allocation3 + $0xb0] sm:$0xf0] %v3379
      %3390 = vst.msk [vmem:[#allocation3 + $0xb8] sm:$0xf0] %vm836, %v3371
      %3391 = vst [vmem:[#allocation3 + $0xc0] sm:$0xff] %v3380
      %3392 = vst [vmem:[#allocation3 + $0xc8] sm:$0xff] %v3381
      %3393 = vst.msk [vmem:[#allocation3 + $0xd0] sm:$0xff] %vm1221, %v3377
      %v3394 = vld [vmem:[#allocation2] sm:$0xff]
      %v3395 = vld [vmem:[#allocation2 + $0x8] sm:$0xff]
      %v3396 = vld [vmem:[#allocation2 + $0x10] sm:$0xff]
      %v3397 = vld [vmem:[#allocation2 + $0x18] sm:$0xf]
      %v3398 = vld [vmem:[#allocation2 + $0x20] sm:$0xf]
      %v3399 = vld [vmem:[#allocation2 + $0x28] sm:$0xf]
      %3406 = vrot.lane.b32.xlu0 %v3394, 92
      %v3407 = vpop.permute.xlu0 %3406
      %3408 = vrot.lane.b32.xlu0 %v3395, 92
      %v3409 = vpop.permute.xlu0 %3408
      %3410 = vrot.lane.b32.xlu0 %v3396, 92
      %v3411 = vpop.permute.xlu0 %3410
      %3412 = vrot.lane.b32.xlu0 %v3397, 92
      %v3413 = vpop.permute.xlu0 %3412
      %3414 = vrot.lane.b32.xlu0 %v3398, 92
      %v3415 = vpop.permute.xlu0 %3414
      %3416 = vrot.lane.b32.xlu0 %v3399, 92
      %v3417 = vpop.permute.xlu0 %3416
      %v3418 = vsel %vm940, %v3407, %v3409
      %v3419 = vsel %vm940, %v3409, %v3411
      %v3420 = vsel %vm940, %v3413, %v3415
      %v3421 = vsel %vm940, %v3415, %v3417
      %3428 = vst [vmem:[#allocation3 + $0xd8] sm:$0xff] %v3418
      %3429 = vst [vmem:[#allocation3 + $0xe0] sm:$0xff] %v3419
      %3430 = vst.msk [vmem:[#allocation3 + $0xe8] sm:$0xff] %vm1221, %v3411
      %3431 = vst [vmem:[#allocation3 + $0xf0] sm:$0xf] %v3420
      %3432 = vst [vmem:[#allocation3 + $0xf8] sm:$0xf] %v3421
      %3433 = vst.msk [vmem:[#allocation3 + $0x100] sm:$0xf] %vm811, %v3417
      %v3434 = vld [vmem:[#allocation2] sm:$0xff]
      %v3435 = vld [vmem:[#allocation2 + $0x8] sm:$0xff]
      %v3436 = vld [vmem:[#allocation2 + $0x10] sm:$0xff]
      %v3437 = vld [vmem:[#allocation2 + $0x18] sm:$0xf]
      %v3438 = vld [vmem:[#allocation2 + $0x20] sm:$0xf]
      %v3439 = vld [vmem:[#allocation2 + $0x28] sm:$0xf]
      %v3446 = vrot.slane %v3434, 4
      %v3447 = vrot.slane %v3435, 4
      %v3448 = vrot.slane %v3436, 4
      %v3449 = vrot.slane %v3437, 4
      %v3450 = vsel %vm1020, %v3446, %v3449
      %v3451 = vrot.slane %v3438, 4
      %v3452 = vsel %vm1020, %v3447, %v3451
      %v3453 = vrot.slane %v3439, 4
      %v3454 = vsel %vm1020, %v3448, %v3453
      %3455 = vrot.lane.b32.xlu0 %v3446, 91
      %v3456 = vpop.permute.xlu0 %3455
      %3457 = vrot.lane.b32.xlu0 %v3447, 91
      %v3458 = vpop.permute.xlu0 %3457
      %3459 = vrot.lane.b32.xlu0 %v3448, 91
      %v3460 = vpop.permute.xlu0 %3459
      %3461 = vrot.lane.b32.xlu0 %v3450, 91
      %v3462 = vpop.permute.xlu0 %3461
      %3463 = vrot.lane.b32.xlu0 %v3452, 91
      %v3464 = vpop.permute.xlu0 %3463
      %3465 = vrot.lane.b32.xlu0 %v3454, 91
      %v3466 = vpop.permute.xlu0 %3465
      %v3467 = vsel %vm964, %v3456, %v3458
      %v3468 = vsel %vm964, %v3458, %v3460
      %v3469 = vsel %vm964, %v3462, %v3464
      %v3470 = vsel %vm964, %v3464, %v3466
      %3477 = vst [vmem:[#allocation3 + $0xf0] sm:$0xf0] %v3467
      %3478 = vst [vmem:[#allocation3 + $0xf8] sm:$0xf0] %v3468
      %3479 = vst.msk [vmem:[#allocation3 + $0x100] sm:$0xf0] %vm836, %v3460
      %3480 = vst [vmem:[#allocation3 + $0x108] sm:$0xff] %v3469
      %3481 = vst [vmem:[#allocation3 + $0x110] sm:$0xff] %v3470
      %3482 = vst.msk [vmem:[#allocation3 + $0x118] sm:$0xff] %vm1221, %v3466
      %v3483 = vld [vmem:[#allocation2] sm:$0xff]
      %v3484 = vld [vmem:[#allocation2 + $0x8] sm:$0xff]
      %v3485 = vld [vmem:[#allocation2 + $0x10] sm:$0xff]
      %v3486 = vld [vmem:[#allocation2 + $0x18] sm:$0xf]
      %v3487 = vld [vmem:[#allocation2 + $0x20] sm:$0xf]
      %v3488 = vld [vmem:[#allocation2 + $0x28] sm:$0xf]
      %3495 = vrot.lane.b32.xlu0 %v3483, 90
      %v3496 = vpop.permute.xlu0 %3495
      %3497 = vrot.lane.b32.xlu0 %v3484, 90
      %v3498 = vpop.permute.xlu0 %3497
      %3499 = vrot.lane.b32.xlu0 %v3485, 90
      %v3500 = vpop.permute.xlu0 %3499
      %3501 = vrot.lane.b32.xlu0 %v3486, 90
      %v3502 = vpop.permute.xlu0 %3501
      %3503 = vrot.lane.b32.xlu0 %v3487, 90
      %v3504 = vpop.permute.xlu0 %3503
      %3505 = vrot.lane.b32.xlu0 %v3488, 90
      %v3506 = vpop.permute.xlu0 %3505
      %v3507 = vsel %vm985, %v3496, %v3498
      %v3508 = vsel %vm985, %v3498, %v3500
      %v3509 = vsel %vm985, %v3502, %v3504
      %v3510 = vsel %vm985, %v3504, %v3506
      %3517 = vst [vmem:[#allocation3 + $0x120] sm:$0xff] %v3507
      %3518 = vst [vmem:[#allocation3 + $0x128] sm:$0xff] %v3508
      %3519 = vst.msk [vmem:[#allocation3 + $0x130] sm:$0xff] %vm1221, %v3500
      %3520 = vst [vmem:[#allocation3 + $0x138] sm:$0xf] %v3509
      %3521 = vst [vmem:[#allocation3 + $0x140] sm:$0xf] %v3510
      %3522 = vst.msk [vmem:[#allocation3 + $0x148] sm:$0xf] %vm811, %v3506
      %v3523 = vld [vmem:[%s14] sm:$0xf]
      %v3524 = vld [vmem:[#allocation3] sm:$0xff]
      %v3525 = vld [vmem:[#allocation3 + $0x8] sm:$0xff]
      %v3526 = vld [vmem:[#allocation3 + $0x10] sm:$0xff]
      %v3527 = vld [vmem:[#allocation3 + $0x18] sm:$0xff]
      %v3528 = vld [vmem:[#allocation3 + $0x20] sm:$0xff]
      %v3529 = vld [vmem:[#allocation3 + $0x28] sm:$0xff]
      %v3530 = vld [vmem:[#allocation3 + $0x30] sm:$0xff]
      %v3531 = vld [vmem:[#allocation3 + $0x38] sm:$0xff]
      %v3532 = vld [vmem:[#allocation3 + $0x40] sm:$0xff]
      %v3533 = vld [vmem:[#allocation3 + $0x48] sm:$0xff]
      %v3534 = vld [vmem:[#allocation3 + $0x50] sm:$0xff]
      %v3535 = vld [vmem:[#allocation3 + $0x58] sm:$0xff]
      %v3536 = vld [vmem:[#allocation3 + $0x60] sm:$0xff]
      %v3537 = vld [vmem:[#allocation3 + $0x68] sm:$0xff]
      %v3538 = vld [vmem:[#allocation3 + $0x70] sm:$0xff]
      %v3539 = vld [vmem:[#allocation3 + $0x78] sm:$0xff]
      %v3540 = vld [vmem:[#allocation3 + $0x80] sm:$0xff]
      %v3541 = vld [vmem:[#allocation3 + $0x88] sm:$0xff]
      %v3542 = vld [vmem:[#allocation3 + $0x90] sm:$0xff]
      %v3543 = vld [vmem:[#allocation3 + $0x98] sm:$0xff]
      %v3544 = vld [vmem:[#allocation3 + $0xa0] sm:$0xff]
      %v3545 = vld [vmem:[#allocation3 + $0xa8] sm:$0xff]
      %v3546 = vld [vmem:[#allocation3 + $0xb0] sm:$0xff]
      %v3547 = vld [vmem:[#allocation3 + $0xb8] sm:$0xff]
      %v3548 = vld [vmem:[#allocation3 + $0xc0] sm:$0xff]
      %v3549 = vld [vmem:[#allocation3 + $0xc8] sm:$0xff]
      %v3550 = vld [vmem:[#allocation3 + $0xd0] sm:$0xff]
      %v3551 = vld [vmem:[#allocation3 + $0xd8] sm:$0xff]
      %v3552 = vld [vmem:[#allocation3 + $0xe0] sm:$0xff]
      %v3553 = vld [vmem:[#allocation3 + $0xe8] sm:$0xff]
      %v3554 = vld [vmem:[#allocation3 + $0xf0] sm:$0xff]
      %v3555 = vld [vmem:[#allocation3 + $0xf8] sm:$0xff]
      %v3556 = vld [vmem:[#allocation3 + $0x100] sm:$0xff]
      %v3557 = vld [vmem:[#allocation3 + $0x108] sm:$0xff]
      %v3558 = vld [vmem:[#allocation3 + $0x110] sm:$0xff]
      %v3559 = vld [vmem:[#allocation3 + $0x118] sm:$0xff]
      %v3560 = vld [vmem:[#allocation3 + $0x120] sm:$0xff]
      %v3561 = vld [vmem:[#allocation3 + $0x128] sm:$0xff]
      %v3562 = vld [vmem:[#allocation3 + $0x130] sm:$0xff]
      %v3563 = vld [vmem:[#allocation3 + $0x138] sm:$0xf]
      %v3564 = vld [vmem:[#allocation3 + $0x140] sm:$0xf]
      %v3565 = vld [vmem:[#allocation3 + $0x148] sm:$0xf]
      %v3566 = vld [vmem:[%s15] sm:$0xf]
      %3568 = vset.pattern.permute.xlu0 0
      %3569 = vperm.xlu0 %3568, %v3566
      %v3570 = vpop.permute.xlu0 %3569
      %v3573 = vsel %vm919, %v3523, 0
      %v3576 = vsel %vm1020, %v3563, 0
      %v3579 = vsel %vm1020, %v3564, 0
      %v3582 = vsel %vm1020, %v3565, 0
      %3584 = vmatprep.subr.mxu0 0.0
      %3585 = vmatpush1.msra.mxu0 0.0
      %3586 = vmatprep.subr.mxu0 0.0
      %3587 = vmatpush1.msra.mxu0 0.0
      %3588 = vmatprep.subr.mxu0 %v3579
      %3589 = vmatpush1.msra.mxu0 %v3576
      %3590 = vmatprep.subr.mxu0 %v3561
      %3591 = vmatpush1.msra.mxu0 %v3560
      %3592 = vmatprep.subr.mxu0 %v3558
      %3593 = vmatpush1.msra.mxu0 %v3557
      %3594 = vmatprep.subr.mxu0 %v3555
      %3595 = vmatpush1.msra.mxu0 %v3554
      %3596 = vmatprep.subr.mxu0 %v3552
      %3597 = vmatpush1.msra.mxu0 %v3551
      %3598 = vmatprep.subr.mxu0 %v3549
      %3599 = vmatpush1.msra.mxu0 %v3548
      %3600 = vmatprep.subr.mxu0 %v3546
      %3601 = vmatpush1.msra.mxu0 %v3545
      %3602 = vmatprep.subr.mxu0 %v3543
      %3603 = vmatpush1.msra.mxu0 %v3542
      %3604 = vmatprep.subr.mxu0 %v3540
      %3605 = vmatpush1.msra.mxu0 %v3539
      %3606 = vmatprep.subr.mxu0 %v3537
      %3607 = vmatpush1.msra.mxu0 %v3536
      %3608 = vmatprep.subr.mxu0 %v3534
      %3609 = vmatpush1.msra.mxu0 %v3533
      %3610 = vmatprep.subr.mxu0 %v3531
      %3611 = vmatpush1.msra.mxu0 %v3530
      %3612 = vmatprep.subr.mxu0 %v3528
      %3613 = vmatpush1.msra.mxu0 %v3527
      %3614 = vmatprep.subr.mxu0 %v3525
      %3615 = vmatpush1.msra.mxu0 %v3524
      %3616 = vmatprep.subr.mxu0 0.0
      %3617 = vmatpush2.msra.mxu0 0.0
      %3618 = vmatprep.subr.mxu0 0.0
      %3619 = vmatpush2.msra.mxu0 0.0
      %3620 = vmatprep.subr.mxu0 0.0
      %3621 = vmatpush2.msra.mxu0 0.0
      %3622 = vmatprep.subr.mxu0 0.0
      %3623 = vmatpush2.msra.mxu0 0.0
      %3624 = vmatprep.subr.mxu0 0.0
      %3625 = vmatpush2.msra.mxu0 0.0
      %3626 = vmatprep.subr.mxu0 0.0
      %3627 = vmatpush2.msra.mxu0 0.0
      %3628 = vmatprep.subr.mxu0 0.0
      %3629 = vmatpush2.msra.mxu0 0.0
      %3630 = vmatprep.subr.mxu0 0.0
      %3631 = vmatpush2.msra.mxu0 0.0
      %3632 = vmatprep.subr.mxu0 0.0
      %3633 = vmatpush2.msra.mxu0 0.0
      %3634 = vmatprep.subr.mxu0 0.0
      %3635 = vmatpush2.msra.mxu0 0.0
      %3636 = vmatprep.subr.mxu0 0.0
      %3637 = vmatpush2.msra.mxu0 0.0
      %3638 = vmatprep.subr.mxu0 0.0
      %3639 = vmatpush2.msra.mxu0 0.0
      %3640 = vmatprep.subr.mxu0 0.0
      %3641 = vmatpush2.msra.mxu0 0.0
      %3642 = vmatprep.subr.mxu0 0.0
      %3643 = vmatpush2.msra.mxu0 0.0
      %3644 = vmatprep.subr.mxu0 0.0
      %3645 = vmatpush2.msra.mxu0 0.0
      %3646 = vmatprep.subr.mxu0 0.0
      %3647 = vmatpush2.msra.mxu0 0.0
      %3648 = vmatprep.mubr.f32.mxu0 0.0
      %3649 = vmatmul.mubr.f32.gmra.mxu0 %v3573
      %v3650 = vpop.f32.mrf.mxu0
      %v3651 = vadd.f32 %v3570, %v3650
      %v3652 = vpop.f32.mrf.mxu0
      %v3653 = vadd.f32 %v3570, %v3652
      %3654 = vdwg.mxu0
      %3655 = vmatprep.subr.mxu0 0.0
      %3656 = vmatpush1.msra.mxu0 0.0
      %3657 = vmatprep.subr.mxu0 0.0
      %3658 = vmatpush1.msra.mxu0 0.0
      %3659 = vmatprep.subr.mxu0 0.0
      %3660 = vmatpush1.msra.mxu0 %v3582
      %3661 = vmatprep.subr.mxu0 0.0
      %3662 = vmatpush1.msra.mxu0 %v3562
      %3663 = vmatprep.subr.mxu0 0.0
      %3664 = vmatpush1.msra.mxu0 %v3559
      %3665 = vmatprep.subr.mxu0 0.0
      %3666 = vmatpush1.msra.mxu0 %v3556
      %3667 = vmatprep.subr.mxu0 0.0
      %3668 = vmatpush1.msra.mxu0 %v3553
      %3669 = vmatprep.subr.mxu0 0.0
      %3670 = vmatpush1.msra.mxu0 %v3550
      %3671 = vmatprep.subr.mxu0 0.0
      %3672 = vmatpush1.msra.mxu0 %v3547
      %3673 = vmatprep.subr.mxu0 0.0
      %3674 = vmatpush1.msra.mxu0 %v3544
      %3675 = vmatprep.subr.mxu0 0.0
      %3676 = vmatpush1.msra.mxu0 %v3541
      %3677 = vmatprep.subr.mxu0 0.0
      %3678 = vmatpush1.msra.mxu0 %v3538
      %3679 = vmatprep.subr.mxu0 0.0
      %3680 = vmatpush1.msra.mxu0 %v3535
      %3681 = vmatprep.subr.mxu0 0.0
      %3682 = vmatpush1.msra.mxu0 %v3532
      %3683 = vmatprep.subr.mxu0 0.0
      %3684 = vmatpush1.msra.mxu0 %v3529
      %3685 = vmatprep.subr.mxu0 0.0
      %3686 = vmatpush1.msra.mxu0 %v3526
      %3687 = vmatprep.subr.mxu0 0.0
      %3688 = vmatpush2.msra.mxu0 0.0
      %3689 = vmatprep.subr.mxu0 0.0
      %3690 = vmatpush2.msra.mxu0 0.0
      %3691 = vmatprep.subr.mxu0 0.0
      %3692 = vmatpush2.msra.mxu0 0.0
      %3693 = vmatprep.subr.mxu0 0.0
      %3694 = vmatpush2.msra.mxu0 0.0
      %3695 = vmatprep.subr.mxu0 0.0
      %3696 = vmatpush2.msra.mxu0 0.0
      %3697 = vmatprep.subr.mxu0 0.0
      %3698 = vmatpush2.msra.mxu0 0.0
      %3699 = vmatprep.subr.mxu0 0.0
      %3700 = vmatpush2.msra.mxu0 0.0
      %3701 = vmatprep.subr.mxu0 0.0
      %3702 = vmatpush2.msra.mxu0 0.0
      %3703 = vmatprep.subr.mxu0 0.0
      %3704 = vmatpush2.msra.mxu0 0.0
      %3705 = vmatprep.subr.mxu0 0.0
      %3706 = vmatpush2.msra.mxu0 0.0
      %3707 = vmatprep.subr.mxu0 0.0
      %3708 = vmatpush2.msra.mxu0 0.0
      %3709 = vmatprep.subr.mxu0 0.0
      %3710 = vmatpush2.msra.mxu0 0.0
      %3711 = vmatprep.subr.mxu0 0.0
      %3712 = vmatpush2.msra.mxu0 0.0
      %3713 = vmatprep.subr.mxu0 0.0
      %3714 = vmatpush2.msra.mxu0 0.0
      %3715 = vmatprep.subr.mxu0 0.0
      %3716 = vmatpush2.msra.mxu0 0.0
      %3717 = vmatprep.subr.mxu0 0.0
      %3718 = vmatpush2.msra.mxu0 0.0
      %3719 = vmatprep.mubr.f32.mxu0 0.0
      %3720 = vmatmul.mubr.f32.gmra.mxu0 %v3573
      %v3721 = vpop.f32.mrf.mxu0
      %v3722 = vadd.f32 %v3570, %v3721
      %v3723 = vpop.f32.mrf.mxu0
      %3724 = vdwg.mxu0
      %v3725 = vmax.f32 %v3651, 0.0
      %v3726 = vmax.f32 %v3653, 0.0
      %v3727 = vmax.f32 %v3722, 0.0
      %v3728 = vmul.f32 %v3725, %v1178
      %v3729 = vmul.f32 %v3726, %v1182
      %v3730 = vmul.f32 %v3727, %v1186
      %v3734 = vrot.slane %v3728, 4
      %v3735 = vrot.slane %v3729, 4
      %v3736 = vrot.slane %v3730, 4
      %3737 = vrot.lane.b32.xlu0 %v3734, 19
      %v3738 = vpop.permute.xlu0 %3737
      %3739 = vrot.lane.b32.xlu0 %v3735, 19
      %v3740 = vpop.permute.xlu0 %3739
      %3741 = vrot.lane.b32.xlu0 %v3736, 19
      %v3742 = vpop.permute.xlu0 %3741
      %v3743 = vsel %vm1205, %v3738, %v3740
      %v3744 = vsel %vm1205, %v3740, %v3742
      %3748 = vst.msk [vmem:[#allocation2 + $0x18] sm:$0xf0] %vm1211, %v3738
      %3749 = vst [vmem:[#allocation2 + $0x20] sm:$0xf0] %v3743
      %3750 = vst.msk [vmem:[#allocation2 + $0x28] sm:$0xf0] %vm1214, %v3744
      %v3751 = vld [vmem:[#allocation2] sm:$0xff]
      %v3752 = vld [vmem:[#allocation2 + $0x8] sm:$0xff]
      %v3753 = vld [vmem:[#allocation2 + $0x10] sm:$0xff]
      %v3754 = vld [vmem:[#allocation2 + $0x18] sm:$0xff]
      %v3755 = vld [vmem:[#allocation2 + $0x20] sm:$0xff]
      %v3756 = vld [vmem:[#allocation2 + $0x28] sm:$0xff]
      %v3757 = vld [vmem:[%s16] sm:$0xf]
      %v3758 = vld [vmem:[%s17] sm:$0xf]
      %3760 = vset.pattern.permute.xlu0 0
      %3761 = vperm.xlu0 %3760, %v3758
      %v3762 = vpop.permute.xlu0 %3761
      %3770 = vrot.lane.b32.xlu0 %v3751, 109
      %v3771 = vpop.permute.xlu0 %3770
      %3772 = vrot.lane.b32.xlu0 %v3752, 109
      %v3773 = vpop.permute.xlu0 %3772
      %3774 = vrot.lane.b32.xlu0 %v3753, 109
      %v3775 = vpop.permute.xlu0 %3774
      %3776 = vrot.lane.b32.xlu0 %v3754, 109
      %v3777 = vpop.permute.xlu0 %3776
      %3778 = vrot.lane.b32.xlu0 %v3755, 109
      %v3779 = vpop.permute.xlu0 %3778
      %3780 = vrot.lane.b32.xlu0 %v3756, 109
      %v3781 = vpop.permute.xlu0 %3780
      %v3782 = vsel %vm895, %v3771, %v3773
      %v3783 = vsel %vm895, %v3773, %v3775
      %v3784 = vsel %vm895, %v3777, %v3779
      %v3785 = vsel %vm895, %v3779, %v3781
      %v3793 = vsel %vm2224, %v3757, 0
      %3795 = vmatprep.subr.mxu0 0.0
      %3796 = vmatpush1.msra.mxu0 0.0
      %3797 = vmatprep.subr.mxu0 0.0
      %3798 = vmatpush1.msra.mxu0 0.0
      %3799 = vmatprep.subr.mxu0 0.0
      %3800 = vmatpush1.msra.mxu0 0.0
      %3801 = vmatprep.subr.mxu0 0.0
      %3802 = vmatpush1.msra.mxu0 0.0
      %3803 = vmatprep.subr.mxu0 0.0
      %3804 = vmatpush1.msra.mxu0 0.0
      %3805 = vmatprep.subr.mxu0 0.0
      %3806 = vmatpush1.msra.mxu0 0.0
      %3807 = vmatprep.subr.mxu0 0.0
      %3808 = vmatpush1.msra.mxu0 0.0
      %3809 = vmatprep.subr.mxu0 0.0
      %3810 = vmatpush1.msra.mxu0 0.0
      %3811 = vmatprep.subr.mxu0 0.0
      %3812 = vmatpush1.msra.mxu0 0.0
      %3813 = vmatprep.subr.mxu0 0.0
      %3814 = vmatpush1.msra.mxu0 0.0
      %3815 = vmatprep.subr.mxu0 0.0
      %3816 = vmatpush1.msra.mxu0 0.0
      %3817 = vmatprep.subr.mxu0 0.0
      %3818 = vmatpush1.msra.mxu0 0.0
      %3819 = vmatprep.subr.mxu0 0.0
      %3820 = vmatpush1.msra.mxu0 0.0
      %3821 = vmatprep.subr.mxu0 0.0
      %3822 = vmatpush1.msra.mxu0 0.0
      %3823 = vmatprep.subr.mxu0 %v3785
      %3824 = vmatpush1.msra.mxu0 %v3784
      %3825 = vmatprep.subr.mxu0 %v3783
      %3826 = vmatpush1.msra.mxu0 %v3782
      %3827 = vmatprep.subr.mxu0 0.0
      %3828 = vmatpush2.msra.mxu0 0.0
      %3829 = vmatprep.subr.mxu0 0.0
      %3830 = vmatpush2.msra.mxu0 0.0
      %3831 = vmatprep.subr.mxu0 0.0
      %3832 = vmatpush2.msra.mxu0 0.0
      %3833 = vmatprep.subr.mxu0 0.0
      %3834 = vmatpush2.msra.mxu0 0.0
      %3835 = vmatprep.subr.mxu0 0.0
      %3836 = vmatpush2.msra.mxu0 0.0
      %3837 = vmatprep.subr.mxu0 0.0
      %3838 = vmatpush2.msra.mxu0 0.0
      %3839 = vmatprep.subr.mxu0 0.0
      %3840 = vmatpush2.msra.mxu0 0.0
      %3841 = vmatprep.subr.mxu0 0.0
      %3842 = vmatpush2.msra.mxu0 0.0
      %3843 = vmatprep.subr.mxu0 0.0
      %3844 = vmatpush2.msra.mxu0 0.0
      %3845 = vmatprep.subr.mxu0 0.0
      %3846 = vmatpush2.msra.mxu0 0.0
      %3847 = vmatprep.subr.mxu0 0.0
      %3848 = vmatpush2.msra.mxu0 0.0
      %3849 = vmatprep.subr.mxu0 0.0
      %3850 = vmatpush2.msra.mxu0 0.0
      %3851 = vmatprep.subr.mxu0 0.0
      %3852 = vmatpush2.msra.mxu0 0.0
      %3853 = vmatprep.subr.mxu0 0.0
      %3854 = vmatpush2.msra.mxu0 0.0
      %3855 = vmatprep.subr.mxu0 0.0
      %3856 = vmatpush2.msra.mxu0 0.0
      %3857 = vmatprep.subr.mxu0 0.0
      %3858 = vmatpush2.msra.mxu0 0.0
      %3859 = vmatprep.mubr.f32.mxu0 0.0
      %3860 = vmatmul.mubr.f32.gmra.mxu0 %v3793
      %v3861 = vpop.f32.mrf.mxu0
      %v3862 = vadd.f32 %v3762, %v3861
      %v3863 = vpop.f32.mrf.mxu0
      %v3864 = vadd.f32 %v3762, %v3863
      %3865 = vdwg.mxu0
      %3866 = vmatprep.subr.mxu0 0.0
      %3867 = vmatpush1.msra.mxu0 0.0
      %3868 = vmatprep.subr.mxu0 0.0
      %3869 = vmatpush1.msra.mxu0 0.0
      %3870 = vmatprep.subr.mxu0 0.0
      %3871 = vmatpush1.msra.mxu0 0.0
      %3872 = vmatprep.subr.mxu0 0.0
      %3873 = vmatpush1.msra.mxu0 0.0
      %3874 = vmatprep.subr.mxu0 0.0
      %3875 = vmatpush1.msra.mxu0 0.0
      %3876 = vmatprep.subr.mxu0 0.0
      %3877 = vmatpush1.msra.mxu0 0.0
      %3878 = vmatprep.subr.mxu0 0.0
      %3879 = vmatpush1.msra.mxu0 0.0
      %3880 = vmatprep.subr.mxu0 0.0
      %3881 = vmatpush1.msra.mxu0 0.0
      %3882 = vmatprep.subr.mxu0 0.0
      %3883 = vmatpush1.msra.mxu0 0.0
      %3884 = vmatprep.subr.mxu0 0.0
      %3885 = vmatpush1.msra.mxu0 0.0
      %3886 = vmatprep.subr.mxu0 0.0
      %3887 = vmatpush1.msra.mxu0 0.0
      %3888 = vmatprep.subr.mxu0 0.0
      %3889 = vmatpush1.msra.mxu0 0.0
      %3890 = vmatprep.subr.mxu0 0.0
      %3891 = vmatpush1.msra.mxu0 0.0
      %3892 = vmatprep.subr.mxu0 0.0
      %3893 = vmatpush1.msra.mxu0 0.0
      %3894 = vmatprep.subr.mxu0 0.0
      %3895 = vmatpush1.msra.mxu0 %v3781
      %3896 = vmatprep.subr.mxu0 0.0
      %3897 = vmatpush1.msra.mxu0 %v3775
      %3898 = vmatprep.subr.mxu0 0.0
      %3899 = vmatpush2.msra.mxu0 0.0
      %3900 = vmatprep.subr.mxu0 0.0
      %3901 = vmatpush2.msra.mxu0 0.0
      %3902 = vmatprep.subr.mxu0 0.0
      %3903 = vmatpush2.msra.mxu0 0.0
      %3904 = vmatprep.subr.mxu0 0.0
      %3905 = vmatpush2.msra.mxu0 0.0
      %3906 = vmatprep.subr.mxu0 0.0
      %3907 = vmatpush2.msra.mxu0 0.0
      %3908 = vmatprep.subr.mxu0 0.0
      %3909 = vmatpush2.msra.mxu0 0.0
      %3910 = vmatprep.subr.mxu0 0.0
      %3911 = vmatpush2.msra.mxu0 0.0
      %3912 = vmatprep.subr.mxu0 0.0
      %3913 = vmatpush2.msra.mxu0 0.0
      %3914 = vmatprep.subr.mxu0 0.0
      %3915 = vmatpush2.msra.mxu0 0.0
      %3916 = vmatprep.subr.mxu0 0.0
      %3917 = vmatpush2.msra.mxu0 0.0
      %3918 = vmatprep.subr.mxu0 0.0
      %3919 = vmatpush2.msra.mxu0 0.0
      %3920 = vmatprep.subr.mxu0 0.0
      %3921 = vmatpush2.msra.mxu0 0.0
      %3922 = vmatprep.subr.mxu0 0.0
      %3923 = vmatpush2.msra.mxu0 0.0
      %3924 = vmatprep.subr.mxu0 0.0
      %3925 = vmatpush2.msra.mxu0 0.0
      %3926 = vmatprep.subr.mxu0 0.0
      %3927 = vmatpush2.msra.mxu0 0.0
      %3928 = vmatprep.subr.mxu0 0.0
      %3929 = vmatpush2.msra.mxu0 0.0
      %3930 = vmatprep.mubr.f32.mxu0 0.0
      %3931 = vmatmul.mubr.f32.gmra.mxu0 %v3793
      %v3932 = vpop.f32.mrf.mxu0
      %v3933 = vadd.f32 %v3762, %v3932
      %v3934 = vpop.f32.mrf.mxu0
      %3935 = vdwg.mxu0
      %v3936 = vmul.f32 %v3862, %v1178
      %v3937 = vmul.f32 %v3864, %v1182
      %v3938 = vmul.f32 %v3933, %v1186
      %v3939 = vadd.f32 %v3936, %v2386
      %v3940 = vadd.f32 %v3937, %v2387
      %v3941 = vadd.f32 %v3938, %v2388
      %v3945 = vrot.slane %v3939, 4
      %v3946 = vrot.slane %v3940, 4
      %v3947 = vrot.slane %v3941, 4
      %3951 = vst [vmem:[#allocation4] sm:$0xf0] %v3945
      %3952 = vst [vmem:[#allocation4 + $0x8] sm:$0xf0] %v3946
      %3953 = vst.msk [vmem:[#allocation4 + $0x10] sm:$0xf0] %vm836, %v3947
      %3954 = vrot.lane.b32.xlu0 %v3939, 19
      %v3955 = vpop.permute.xlu0 %3954
      %3956 = vrot.lane.b32.xlu0 %v3940, 19
      %v3957 = vpop.permute.xlu0 %3956
      %3958 = vrot.lane.b32.xlu0 %v3941, 19
      %v3959 = vpop.permute.xlu0 %3958
      %v3960 = vsel %vm1205, %v3955, %v3957
      %v3961 = vsel %vm1205, %v3957, %v3959
      %3965 = vst.msk [vmem:[#allocation2] sm:$0xf] %vm1582, %v3955
      %3966 = vst [vmem:[#allocation2 + $0x8] sm:$0xf] %v3960
      %3967 = vst.msk [vmem:[#allocation2 + $0x10] sm:$0xf] %vm1585, %v3961
      %v3968 = vld [vmem:[%s18] sm:$0xf]
      %v3969 = vld [vmem:[#allocation4] sm:$0xff]
      %v3970 = vld [vmem:[#allocation4 + $0x8] sm:$0xff]
      %v3971 = vld [vmem:[#allocation4 + $0x10] sm:$0xff]
      %v3972 = vld [vmem:[%s19] sm:$0xf]
      %3974 = vset.pattern.permute.xlu0 0
      %3975 = vperm.xlu0 %3974, %v3972
      %v3976 = vpop.permute.xlu0 %3975
      %vm3978 = vcmask 64512
      %v3980 = vsel %vm3978, %v3968, 0
      %3982 = vmatprep.subr.mxu0 0.0
      %3983 = vmatpush1.msra.mxu0 0.0
      %3984 = vmatprep.subr.mxu0 0.0
      %3985 = vmatpush1.msra.mxu0 0.0
      %3986 = vmatprep.subr.mxu0 0.0
      %3987 = vmatpush1.msra.mxu0 0.0
      %3988 = vmatprep.subr.mxu0 0.0
      %3989 = vmatpush1.msra.mxu0 0.0
      %3990 = vmatprep.subr.mxu0 0.0
      %3991 = vmatpush1.msra.mxu0 0.0
      %3992 = vmatprep.subr.mxu0 0.0
      %3993 = vmatpush1.msra.mxu0 0.0
      %3994 = vmatprep.subr.mxu0 0.0
      %3995 = vmatpush1.msra.mxu0 0.0
      %3996 = vmatprep.subr.mxu0 0.0
      %3997 = vmatpush1.msra.mxu0 0.0
      %3998 = vmatprep.subr.mxu0 0.0
      %3999 = vmatpush1.msra.mxu0 0.0
      %4000 = vmatprep.subr.mxu0 0.0
      %4001 = vmatpush1.msra.mxu0 0.0
      %4002 = vmatprep.subr.mxu0 0.0
      %4003 = vmatpush1.msra.mxu0 0.0
      %4004 = vmatprep.subr.mxu0 0.0
      %4005 = vmatpush1.msra.mxu0 0.0
      %4006 = vmatprep.subr.mxu0 0.0
      %4007 = vmatpush1.msra.mxu0 0.0
      %4008 = vmatprep.subr.mxu0 0.0
      %4009 = vmatpush1.msra.mxu0 0.0
      %4010 = vmatprep.subr.mxu0 0.0
      %4011 = vmatpush1.msra.mxu0 0.0
      %4012 = vmatprep.subr.mxu0 %v3970
      %4013 = vmatpush1.msra.mxu0 %v3969
      %4014 = vmatprep.subr.mxu0 0.0
      %4015 = vmatpush2.msra.mxu0 0.0
      %4016 = vmatprep.subr.mxu0 0.0
      %4017 = vmatpush2.msra.mxu0 0.0
      %4018 = vmatprep.subr.mxu0 0.0
      %4019 = vmatpush2.msra.mxu0 0.0
      %4020 = vmatprep.subr.mxu0 0.0
      %4021 = vmatpush2.msra.mxu0 0.0
      %4022 = vmatprep.subr.mxu0 0.0
      %4023 = vmatpush2.msra.mxu0 0.0
      %4024 = vmatprep.subr.mxu0 0.0
      %4025 = vmatpush2.msra.mxu0 0.0
      %4026 = vmatprep.subr.mxu0 0.0
      %4027 = vmatpush2.msra.mxu0 0.0
      %4028 = vmatprep.subr.mxu0 0.0
      %4029 = vmatpush2.msra.mxu0 0.0
      %4030 = vmatprep.subr.mxu0 0.0
      %4031 = vmatpush2.msra.mxu0 0.0
      %4032 = vmatprep.subr.mxu0 0.0
      %4033 = vmatpush2.msra.mxu0 0.0
      %4034 = vmatprep.subr.mxu0 0.0
      %4035 = vmatpush2.msra.mxu0 0.0
      %4036 = vmatprep.subr.mxu0 0.0
      %4037 = vmatpush2.msra.mxu0 0.0
      %4038 = vmatprep.subr.mxu0 0.0
      %4039 = vmatpush2.msra.mxu0 0.0
      %4040 = vmatprep.subr.mxu0 0.0
      %4041 = vmatpush2.msra.mxu0 0.0
      %4042 = vmatprep.subr.mxu0 0.0
      %4043 = vmatpush2.msra.mxu0 0.0
      %4044 = vmatprep.subr.mxu0 0.0
      %4045 = vmatpush2.msra.mxu0 0.0
      %4046 = vmatprep.mubr.f32.mxu0 0.0
      %4047 = vmatmul.mubr.f32.gmra.mxu0 %v3980
      %v4048 = vpop.f32.mrf.mxu0
      %v4049 = vadd.f32 %v3976, %v4048
      %v4050 = vpop.f32.mrf.mxu0
      %v4051 = vadd.f32 %v3976, %v4050
      %4052 = vdwg.mxu0
      %4053 = vmatprep.subr.mxu0 0.0
      %4054 = vmatpush1.msra.mxu0 0.0
      %4055 = vmatprep.subr.mxu0 0.0
      %4056 = vmatpush1.msra.mxu0 0.0
      %4057 = vmatprep.subr.mxu0 0.0
      %4058 = vmatpush1.msra.mxu0 0.0
      %4059 = vmatprep.subr.mxu0 0.0
      %4060 = vmatpush1.msra.mxu0 0.0
      %4061 = vmatprep.subr.mxu0 0.0
      %4062 = vmatpush1.msra.mxu0 0.0
      %4063 = vmatprep.subr.mxu0 0.0
      %4064 = vmatpush1.msra.mxu0 0.0
      %4065 = vmatprep.subr.mxu0 0.0
      %4066 = vmatpush1.msra.mxu0 0.0
      %4067 = vmatprep.subr.mxu0 0.0
      %4068 = vmatpush1.msra.mxu0 0.0
      %4069 = vmatprep.subr.mxu0 0.0
      %4070 = vmatpush1.msra.mxu0 0.0
      %4071 = vmatprep.subr.mxu0 0.0
      %4072 = vmatpush1.msra.mxu0 0.0
      %4073 = vmatprep.subr.mxu0 0.0
      %4074 = vmatpush1.msra.mxu0 0.0
      %4075 = vmatprep.subr.mxu0 0.0
      %4076 = vmatpush1.msra.mxu0 0.0
      %4077 = vmatprep.subr.mxu0 0.0
      %4078 = vmatpush1.msra.mxu0 0.0
      %4079 = vmatprep.subr.mxu0 0.0
      %4080 = vmatpush1.msra.mxu0 0.0
      %4081 = vmatprep.subr.mxu0 0.0
      %4082 = vmatpush1.msra.mxu0 0.0
      %4083 = vmatprep.subr.mxu0 0.0
      %4084 = vmatpush1.msra.mxu0 %v3971
      %4085 = vmatprep.subr.mxu0 0.0
      %4086 = vmatpush2.msra.mxu0 0.0
      %4087 = vmatprep.subr.mxu0 0.0
      %4088 = vmatpush2.msra.mxu0 0.0
      %4089 = vmatprep.subr.mxu0 0.0
      %4090 = vmatpush2.msra.mxu0 0.0
      %4091 = vmatprep.subr.mxu0 0.0
      %4092 = vmatpush2.msra.mxu0 0.0
      %4093 = vmatprep.subr.mxu0 0.0
      %4094 = vmatpush2.msra.mxu0 0.0
      %4095 = vmatprep.subr.mxu0 0.0
      %4096 = vmatpush2.msra.mxu0 0.0
      %4097 = vmatprep.subr.mxu0 0.0
      %4098 = vmatpush2.msra.mxu0 0.0
      %4099 = vmatprep.subr.mxu0 0.0
      %4100 = vmatpush2.msra.mxu0 0.0
      %4101 = vmatprep.subr.mxu0 0.0
      %4102 = vmatpush2.msra.mxu0 0.0
      %4103 = vmatprep.subr.mxu0 0.0
      %4104 = vmatpush2.msra.mxu0 0.0
      %4105 = vmatprep.subr.mxu0 0.0
      %4106 = vmatpush2.msra.mxu0 0.0
      %4107 = vmatprep.subr.mxu0 0.0
      %4108 = vmatpush2.msra.mxu0 0.0
      %4109 = vmatprep.subr.mxu0 0.0
      %4110 = vmatpush2.msra.mxu0 0.0
      %4111 = vmatprep.subr.mxu0 0.0
      %4112 = vmatpush2.msra.mxu0 0.0
      %4113 = vmatprep.subr.mxu0 0.0
      %4114 = vmatpush2.msra.mxu0 0.0
      %4115 = vmatprep.subr.mxu0 0.0
      %4116 = vmatpush2.msra.mxu0 0.0
      %4117 = vmatprep.mubr.f32.mxu0 0.0
      %4118 = vmatmul.mubr.f32.gmra.mxu0 %v3980
      %v4119 = vpop.f32.mrf.mxu0
      %v4120 = vadd.f32 %v3976, %v4119
      %v4121 = vpop.f32.mrf.mxu0
      %4122 = vdwg.mxu0
      %v4123 = vmul.f32 %v4049, %v1178
      %v4124 = vmul.f32 %v4051, %v1182
      %v4125 = vmul.f32 %v4120, %v1186
      %4129 = vrot.lane.b32.xlu0 %v4123, 19
      %v4130 = vpop.permute.xlu0 %4129
      %4131 = vrot.lane.b32.xlu0 %v4124, 19
      %v4132 = vpop.permute.xlu0 %4131
      %4133 = vrot.lane.b32.xlu0 %v4125, 19
      %v4134 = vpop.permute.xlu0 %4133
      %v4135 = vsel %vm1205, %v4130, %v4132
      %v4136 = vsel %vm1205, %v4132, %v4134
      %4140 = vst.msk [vmem:[#allocation2] sm:$0xf] %vm1582, %v4130
      %4141 = vst [vmem:[#allocation2 + $0x8] sm:$0xf] %v4135
      %4142 = vst.msk [vmem:[#allocation2 + $0x10] sm:$0xf] %vm1585, %v4136
      %v4143 = vld [vmem:[#allocation2] sm:$0xf]
      %v4144 = vld [vmem:[#allocation2 + $0x8] sm:$0xf]
      %v4145 = vld [vmem:[#allocation2 + $0x10] sm:$0xf]
      %4146 = vst [vmem:[#allocation3] sm:$0xf] %v4143
      %4147 = vst [vmem:[#allocation3 + $0x8] sm:$0xf] %v4144
      %4148 = vst.msk [vmem:[#allocation3 + $0x10] sm:$0xf] %vm811, %v4145
      %v4149 = vld [vmem:[#allocation2] sm:$0xf]
      %v4150 = vld [vmem:[#allocation2 + $0x8] sm:$0xf]
      %v4151 = vld [vmem:[#allocation2 + $0x10] sm:$0xf]
      %v4155 = vrot.slane %v4149, 4
      %v4156 = vrot.slane %v4150, 4
      %v4157 = vrot.slane %v4151, 4
      %4158 = vrot.lane.b32.xlu0 %v4155, 127
      %v4159 = vpop.permute.xlu0 %4158
      %4160 = vrot.lane.b32.xlu0 %v4156, 127
      %v4161 = vpop.permute.xlu0 %4160
      %4162 = vrot.lane.b32.xlu0 %v4157, 127
      %v4163 = vpop.permute.xlu0 %4162
      %v4164 = vsel %vm828, %v4159, %v4161
      %v4165 = vsel %vm828, %v4161, %v4163
      %4169 = vst [vmem:[#allocation3] sm:$0xf0] %v4164
      %4170 = vst [vmem:[#allocation3 + $0x8] sm:$0xf0] %v4165
      %4171 = vst.msk [vmem:[#allocation3 + $0x10] sm:$0xf0] %vm836, %v4163
      %v4172 = vld [vmem:[#allocation2] sm:$0xf]
      %v4173 = vld [vmem:[#allocation2 + $0x8] sm:$0xf]
      %v4174 = vld [vmem:[#allocation2 + $0x10] sm:$0xf]
      %4178 = vrot.lane.b32.xlu0 %v4172, 126
      %v4179 = vpop.permute.xlu0 %4178
      %4180 = vrot.lane.b32.xlu0 %v4173, 126
      %v4181 = vpop.permute.xlu0 %4180
      %4182 = vrot.lane.b32.xlu0 %v4174, 126
      %v4183 = vpop.permute.xlu0 %4182
      %v4184 = vsel %vm850, %v4179, %v4181
      %v4185 = vsel %vm850, %v4181, %v4183
      %4189 = vst [vmem:[#allocation3 + $0x18] sm:$0xf] %v4184
      %4190 = vst [vmem:[#allocation3 + $0x20] sm:$0xf] %v4185
      %4191 = vst.msk [vmem:[#allocation3 + $0x28] sm:$0xf] %vm811, %v4183
      %v4192 = vld [vmem:[#allocation2] sm:$0xf]
      %v4193 = vld [vmem:[#allocation2 + $0x8] sm:$0xf]
      %v4194 = vld [vmem:[#allocation2 + $0x10] sm:$0xf]
      %v4198 = vrot.slane %v4192, 4
      %v4199 = vrot.slane %v4193, 4
      %v4200 = vrot.slane %v4194, 4
      %4201 = vrot.lane.b32.xlu0 %v4198, 110
      %v4202 = vpop.permute.xlu0 %4201
      %4203 = vrot.lane.b32.xlu0 %v4199, 110
      %v4204 = vpop.permute.xlu0 %4203
      %4205 = vrot.lane.b32.xlu0 %v4200, 110
      %v4206 = vpop.permute.xlu0 %4205
      %v4207 = vsel %vm874, %v4202, %v4204
      %v4208 = vsel %vm874, %v4204, %v4206
      %4212 = vst [vmem:[#allocation3 + $0x18] sm:$0xf0] %v4207
      %4213 = vst [vmem:[#allocation3 + $0x20] sm:$0xf0] %v4208
      %4214 = vst.msk [vmem:[#allocation3 + $0x28] sm:$0xf0] %vm836, %v4206
      %v4215 = vld [vmem:[#allocation2] sm:$0xf]
      %v4216 = vld [vmem:[#allocation2 + $0x8] sm:$0xf]
      %v4217 = vld [vmem:[#allocation2 + $0x10] sm:$0xf]
      %4221 = vrot.lane.b32.xlu0 %v4215, 109
      %v4222 = vpop.permute.xlu0 %4221
      %4223 = vrot.lane.b32.xlu0 %v4216, 109
      %v4224 = vpop.permute.xlu0 %4223
      %4225 = vrot.lane.b32.xlu0 %v4217, 109
      %v4226 = vpop.permute.xlu0 %4225
      %v4227 = vsel %vm895, %v4222, %v4224
      %v4228 = vsel %vm895, %v4224, %v4226
      %4232 = vst [vmem:[#allocation3 + $0x30] sm:$0xf] %v4227
      %4233 = vst [vmem:[#allocation3 + $0x38] sm:$0xf] %v4228
      %4234 = vst.msk [vmem:[#allocation3 + $0x40] sm:$0xf] %vm811, %v4226
      %v4235 = vld [vmem:[#allocation2] sm:$0xf]
      %v4236 = vld [vmem:[#allocation2 + $0x8] sm:$0xf]
      %v4237 = vld [vmem:[#allocation2 + $0x10] sm:$0xf]
      %v4241 = vrot.slane %v4235, 4
      %v4242 = vrot.slane %v4236, 4
      %v4243 = vrot.slane %v4237, 4
      %4244 = vrot.lane.b32.xlu0 %v4241, 108
      %v4245 = vpop.permute.xlu0 %4244
      %4246 = vrot.lane.b32.xlu0 %v4242, 108
      %v4247 = vpop.permute.xlu0 %4246
      %4248 = vrot.lane.b32.xlu0 %v4243, 108
      %v4249 = vpop.permute.xlu0 %4248
      %v4250 = vsel %vm919, %v4245, %v4247
      %v4251 = vsel %vm919, %v4247, %v4249
      %4255 = vst [vmem:[#allocation3 + $0x30] sm:$0xf0] %v4250
      %4256 = vst [vmem:[#allocation3 + $0x38] sm:$0xf0] %v4251
      %4257 = vst.msk [vmem:[#allocation3 + $0x40] sm:$0xf0] %vm836, %v4249
      %v4258 = vld [vmem:[#allocation2] sm:$0xf]
      %v4259 = vld [vmem:[#allocation2 + $0x8] sm:$0xf]
      %v4260 = vld [vmem:[#allocation2 + $0x10] sm:$0xf]
      %4264 = vrot.lane.b32.xlu0 %v4258, 92
      %v4265 = vpop.permute.xlu0 %4264
      %4266 = vrot.lane.b32.xlu0 %v4259, 92
      %v4267 = vpop.permute.xlu0 %4266
      %4268 = vrot.lane.b32.xlu0 %v4260, 92
      %v4269 = vpop.permute.xlu0 %4268
      %v4270 = vsel %vm940, %v4265, %v4267
      %v4271 = vsel %vm940, %v4267, %v4269
      %4275 = vst [vmem:[#allocation3 + $0x48] sm:$0xf] %v4270
      %4276 = vst [vmem:[#allocation3 + $0x50] sm:$0xf] %v4271
      %4277 = vst.msk [vmem:[#allocation3 + $0x58] sm:$0xf] %vm811, %v4269
      %v4278 = vld [vmem:[#allocation2] sm:$0xf]
      %v4279 = vld [vmem:[#allocation2 + $0x8] sm:$0xf]
      %v4280 = vld [vmem:[#allocation2 + $0x10] sm:$0xf]
      %v4284 = vrot.slane %v4278, 4
      %v4285 = vrot.slane %v4279, 4
      %v4286 = vrot.slane %v4280, 4
      %4287 = vrot.lane.b32.xlu0 %v4284, 91
      %v4288 = vpop.permute.xlu0 %4287
      %4289 = vrot.lane.b32.xlu0 %v4285, 91
      %v4290 = vpop.permute.xlu0 %4289
      %4291 = vrot.lane.b32.xlu0 %v4286, 91
      %v4292 = vpop.permute.xlu0 %4291
      %v4293 = vsel %vm964, %v4288, %v4290
      %v4294 = vsel %vm964, %v4290, %v4292
      %4298 = vst [vmem:[#allocation3 + $0x48] sm:$0xf0] %v4293
      %4299 = vst [vmem:[#allocation3 + $0x50] sm:$0xf0] %v4294
      %4300 = vst.msk [vmem:[#allocation3 + $0x58] sm:$0xf0] %vm836, %v4292
      %v4301 = vld [vmem:[#allocation2] sm:$0xf]
      %v4302 = vld [vmem:[#allocation2 + $0x8] sm:$0xf]
      %v4303 = vld [vmem:[#allocation2 + $0x10] sm:$0xf]
      %4307 = vrot.lane.b32.xlu0 %v4301, 90
      %v4308 = vpop.permute.xlu0 %4307
      %4309 = vrot.lane.b32.xlu0 %v4302, 90
      %v4310 = vpop.permute.xlu0 %4309
      %4311 = vrot.lane.b32.xlu0 %v4303, 90
      %v4312 = vpop.permute.xlu0 %4311
      %v4313 = vsel %vm985, %v4308, %v4310
      %v4314 = vsel %vm985, %v4310, %v4312
      %4318 = vst [vmem:[#allocation3 + $0x60] sm:$0xf] %v4313
      %4319 = vst [vmem:[#allocation3 + $0x68] sm:$0xf] %v4314
      %4320 = vst.msk [vmem:[#allocation3 + $0x70] sm:$0xf] %vm811, %v4312
      %v4321 = vld [vmem:[%s20] sm:$0xf]
      %v4322 = vld [vmem:[#allocation3] sm:$0xff]
      %v4323 = vld [vmem:[#allocation3 + $0x8] sm:$0xff]
      %v4324 = vld [vmem:[#allocation3 + $0x10] sm:$0xff]
      %v4325 = vld [vmem:[#allocation3 + $0x18] sm:$0xff]
      %v4326 = vld [vmem:[#allocation3 + $0x20] sm:$0xff]
      %v4327 = vld [vmem:[#allocation3 + $0x28] sm:$0xff]
      %v4328 = vld [vmem:[#allocation3 + $0x30] sm:$0xff]
      %v4329 = vld [vmem:[#allocation3 + $0x38] sm:$0xff]
      %v4330 = vld [vmem:[#allocation3 + $0x40] sm:$0xff]
      %v4331 = vld [vmem:[#allocation3 + $0x48] sm:$0xff]
      %v4332 = vld [vmem:[#allocation3 + $0x50] sm:$0xff]
      %v4333 = vld [vmem:[#allocation3 + $0x58] sm:$0xff]
      %v4334 = vld [vmem:[#allocation3 + $0x60] sm:$0xf]
      %v4335 = vld [vmem:[#allocation3 + $0x68] sm:$0xf]
      %v4336 = vld [vmem:[#allocation3 + $0x70] sm:$0xf]
      %v4337 = vld [vmem:[%s21] sm:$0xf]
      %4339 = vset.pattern.permute.xlu0 0
      %4340 = vperm.xlu0 %4339, %v4337
      %v4341 = vpop.permute.xlu0 %4340
      %v4344 = vsel %vm1016, %v4321, 0
      %v4347 = vsel %vm1020, %v4334, 0
      %v4350 = vsel %vm1020, %v4335, 0
      %v4353 = vsel %vm1020, %v4336, 0
      %4355 = vmatprep.subr.mxu0 0.0
      %4356 = vmatpush1.msra.mxu0 0.0
      %4357 = vmatprep.subr.mxu0 0.0
      %4358 = vmatpush1.msra.mxu0 0.0
      %4359 = vmatprep.subr.mxu0 0.0
      %4360 = vmatpush1.msra.mxu0 0.0
      %4361 = vmatprep.subr.mxu0 0.0
      %4362 = vmatpush1.msra.mxu0 0.0
      %4363 = vmatprep.subr.mxu0 0.0
      %4364 = vmatpush1.msra.mxu0 0.0
      %4365 = vmatprep.subr.mxu0 0.0
      %4366 = vmatpush1.msra.mxu0 0.0
      %4367 = vmatprep.subr.mxu0 0.0
      %4368 = vmatpush1.msra.mxu0 0.0
      %4369 = vmatprep.subr.mxu0 0.0
      %4370 = vmatpush1.msra.mxu0 0.0
      %4371 = vmatprep.subr.mxu0 0.0
      %4372 = vmatpush1.msra.mxu0 0.0
      %4373 = vmatprep.subr.mxu0 0.0
      %4374 = vmatpush1.msra.mxu0 0.0
      %4375 = vmatprep.subr.mxu0 0.0
      %4376 = vmatpush1.msra.mxu0 0.0
      %4377 = vmatprep.subr.mxu0 %v4350
      %4378 = vmatpush1.msra.mxu0 %v4347
      %4379 = vmatprep.subr.mxu0 %v4332
      %4380 = vmatpush1.msra.mxu0 %v4331
      %4381 = vmatprep.subr.mxu0 %v4329
      %4382 = vmatpush1.msra.mxu0 %v4328
      %4383 = vmatprep.subr.mxu0 %v4326
      %4384 = vmatpush1.msra.mxu0 %v4325
      %4385 = vmatprep.subr.mxu0 %v4323
      %4386 = vmatpush1.msra.mxu0 %v4322
      %4387 = vmatprep.subr.mxu0 0.0
      %4388 = vmatpush2.msra.mxu0 0.0
      %4389 = vmatprep.subr.mxu0 0.0
      %4390 = vmatpush2.msra.mxu0 0.0
      %4391 = vmatprep.subr.mxu0 0.0
      %4392 = vmatpush2.msra.mxu0 0.0
      %4393 = vmatprep.subr.mxu0 0.0
      %4394 = vmatpush2.msra.mxu0 0.0
      %4395 = vmatprep.subr.mxu0 0.0
      %4396 = vmatpush2.msra.mxu0 0.0
      %4397 = vmatprep.subr.mxu0 0.0
      %4398 = vmatpush2.msra.mxu0 0.0
      %4399 = vmatprep.subr.mxu0 0.0
      %4400 = vmatpush2.msra.mxu0 0.0
      %4401 = vmatprep.subr.mxu0 0.0
      %4402 = vmatpush2.msra.mxu0 0.0
      %4403 = vmatprep.subr.mxu0 0.0
      %4404 = vmatpush2.msra.mxu0 0.0
      %4405 = vmatprep.subr.mxu0 0.0
      %4406 = vmatpush2.msra.mxu0 0.0
      %4407 = vmatprep.subr.mxu0 0.0
      %4408 = vmatpush2.msra.mxu0 0.0
      %4409 = vmatprep.subr.mxu0 0.0
      %4410 = vmatpush2.msra.mxu0 0.0
      %4411 = vmatprep.subr.mxu0 0.0
      %4412 = vmatpush2.msra.mxu0 0.0
      %4413 = vmatprep.subr.mxu0 0.0
      %4414 = vmatpush2.msra.mxu0 0.0
      %4415 = vmatprep.subr.mxu0 0.0
      %4416 = vmatpush2.msra.mxu0 0.0
      %4417 = vmatprep.subr.mxu0 0.0
      %4418 = vmatpush2.msra.mxu0 0.0
      %4419 = vmatprep.mubr.f32.mxu0 0.0
      %4420 = vmatmul.mubr.f32.gmra.mxu0 %v4344
      %v4421 = vpop.f32.mrf.mxu0
      %v4422 = vadd.f32 %v4341, %v4421
      %v4423 = vpop.f32.mrf.mxu0
      %v4424 = vadd.f32 %v4341, %v4423
      %4425 = vdwg.mxu0
      %4426 = vmatprep.subr.mxu0 0.0
      %4427 = vmatpush1.msra.mxu0 0.0
      %4428 = vmatprep.subr.mxu0 0.0
      %4429 = vmatpush1.msra.mxu0 0.0
      %4430 = vmatprep.subr.mxu0 0.0
      %4431 = vmatpush1.msra.mxu0 0.0
      %4432 = vmatprep.subr.mxu0 0.0
      %4433 = vmatpush1.msra.mxu0 0.0
      %4434 = vmatprep.subr.mxu0 0.0
      %4435 = vmatpush1.msra.mxu0 0.0
      %4436 = vmatprep.subr.mxu0 0.0
      %4437 = vmatpush1.msra.mxu0 0.0
      %4438 = vmatprep.subr.mxu0 0.0
      %4439 = vmatpush1.msra.mxu0 0.0
      %4440 = vmatprep.subr.mxu0 0.0
      %4441 = vmatpush1.msra.mxu0 0.0
      %4442 = vmatprep.subr.mxu0 0.0
      %4443 = vmatpush1.msra.mxu0 0.0
      %4444 = vmatprep.subr.mxu0 0.0
      %4445 = vmatpush1.msra.mxu0 0.0
      %4446 = vmatprep.subr.mxu0 0.0
      %4447 = vmatpush1.msra.mxu0 0.0
      %4448 = vmatprep.subr.mxu0 0.0
      %4449 = vmatpush1.msra.mxu0 %v4353
      %4450 = vmatprep.subr.mxu0 0.0
      %4451 = vmatpush1.msra.mxu0 %v4333
      %4452 = vmatprep.subr.mxu0 0.0
      %4453 = vmatpush1.msra.mxu0 %v4330
      %4454 = vmatprep.subr.mxu0 0.0
      %4455 = vmatpush1.msra.mxu0 %v4327
      %4456 = vmatprep.subr.mxu0 0.0
      %4457 = vmatpush1.msra.mxu0 %v4324
      %4458 = vmatprep.subr.mxu0 0.0
      %4459 = vmatpush2.msra.mxu0 0.0
      %4460 = vmatprep.subr.mxu0 0.0
      %4461 = vmatpush2.msra.mxu0 0.0
      %4462 = vmatprep.subr.mxu0 0.0
      %4463 = vmatpush2.msra.mxu0 0.0
      %4464 = vmatprep.subr.mxu0 0.0
      %4465 = vmatpush2.msra.mxu0 0.0
      %4466 = vmatprep.subr.mxu0 0.0
      %4467 = vmatpush2.msra.mxu0 0.0
      %4468 = vmatprep.subr.mxu0 0.0
      %4469 = vmatpush2.msra.mxu0 0.0
      %4470 = vmatprep.subr.mxu0 0.0
      %4471 = vmatpush2.msra.mxu0 0.0
      %4472 = vmatprep.subr.mxu0 0.0
      %4473 = vmatpush2.msra.mxu0 0.0
      %4474 = vmatprep.subr.mxu0 0.0
      %4475 = vmatpush2.msra.mxu0 0.0
      %4476 = vmatprep.subr.mxu0 0.0
      %4477 = vmatpush2.msra.mxu0 0.0
      %4478 = vmatprep.subr.mxu0 0.0
      %4479 = vmatpush2.msra.mxu0 0.0
      %4480 = vmatprep.subr.mxu0 0.0
      %4481 = vmatpush2.msra.mxu0 0.0
      %4482 = vmatprep.subr.mxu0 0.0
      %4483 = vmatpush2.msra.mxu0 0.0
      %4484 = vmatprep.subr.mxu0 0.0
      %4485 = vmatpush2.msra.mxu0 0.0
      %4486 = vmatprep.subr.mxu0 0.0
      %4487 = vmatpush2.msra.mxu0 0.0
      %4488 = vmatprep.subr.mxu0 0.0
      %4489 = vmatpush2.msra.mxu0 0.0
      %4490 = vmatprep.mubr.f32.mxu0 0.0
      %4491 = vmatmul.mubr.f32.gmra.mxu0 %v4344
      %v4492 = vpop.f32.mrf.mxu0
      %v4493 = vadd.f32 %v4341, %v4492
      %v4494 = vpop.f32.mrf.mxu0
      %4495 = vdwg.mxu0
      %v4496 = vmul.f32 %v4422, %v1178
      %v4497 = vmul.f32 %v4424, %v1182
      %v4498 = vmul.f32 %v4493, %v1186
      %4502 = vrot.lane.b32.xlu0 %v4496, 19
      %v4503 = vpop.permute.xlu0 %4502
      %4504 = vrot.lane.b32.xlu0 %v4497, 19
      %v4505 = vpop.permute.xlu0 %4504
      %4506 = vrot.lane.b32.xlu0 %v4498, 19
      %v4507 = vpop.permute.xlu0 %4506
      %v4508 = vsel %vm1205, %v4503, %v4505
      %v4509 = vsel %vm1205, %v4505, %v4507
      %4513 = vst.msk [vmem:[#allocation2] sm:$0xf] %vm1582, %v4503
      %4514 = vst [vmem:[#allocation2 + $0x8] sm:$0xf] %v4508
      %4515 = vst.msk [vmem:[#allocation2 + $0x10] sm:$0xf] %vm1585, %v4509
      %v4516 = vld [vmem:[#allocation2] sm:$0xf]
      %4518 = vrot.lane.b32.xlu0 %v4516, 90
      %v4519 = vpop.permute.xlu0 %4518
      %4521 = vst.msk [vmem:[%s683] sm:$0xf] %vm732, %v4519
      %v4522 = vld [vmem:[#allocation2] sm:$0xf]
      %4524 = vrot.lane.b32.xlu0 %v4522, 88
      %v4525 = vpop.permute.xlu0 %4524
      %4527 = vst.msk [vmem:[%s683] sm:$0xf] %vm790, %v4525
      %v4528 = vld [vmem:[#allocation2] sm:$0xf]
      %4530 = vrot.lane.b32.xlu0 %v4528, 86
      %v4531 = vpop.permute.xlu0 %4530
      %vm4533 = vcmask 388352
      %4534 = vst.msk [vmem:[%s683] sm:$0xf] %vm4533, %v4531
      %v4535 = vld [vmem:[#allocation2] sm:$0xf]
      %4537 = vrot.lane.b32.xlu0 %v4535, 84
      %v4538 = vpop.permute.xlu0 %4537
      %vm4540 = vcmask 519552
      %4541 = vst.msk [vmem:[%s683] sm:$0xf] %vm4540, %v4538
      %v4542 = vld [vmem:[#allocation2] sm:$0xf]
      %4544 = vrot.lane.b32.xlu0 %v4542, 82
      %v4545 = vpop.permute.xlu0 %4544
      %vm4547 = vcmask 650752
      %4548 = vst.msk [vmem:[%s683] sm:$0xf] %vm4547, %v4545
      %v4549 = vld [vmem:[#allocation2 + $0x8] sm:$0xf]
      %4551 = vrot.lane.b32.xlu0 %v4549, 80
      %v4552 = vpop.permute.xlu0 %4551
      %vm4554 = vcmask 781952
      %4555 = vst.msk [vmem:[%s683] sm:$0xf] %vm4554, %v4552
      %v4556 = vld [vmem:[#allocation2 + $0x8] sm:$0xf]
      %4558 = vrot.lane.b32.xlu0 %v4556, 78
      %v4559 = vpop.permute.xlu0 %4558
      %vm4561 = vcmask 913152
      %4562 = vst.msk [vmem:[%s683] sm:$0xf] %vm4561, %v4559
      %v4563 = vld [vmem:[#allocation2 + $0x8] sm:$0xf]
      %4565 = vrot.lane.b32.xlu0 %v4563, 76
      %v4566 = vpop.permute.xlu0 %4565
      %vm4568 = vcmask 1044352
      %4569 = vst.msk [vmem:[%s683] sm:$0xf] %vm4568, %v4566
      %v4570 = vld [vmem:[#allocation2 + $0x8] sm:$0xf]
      %4572 = vrot.lane.b32.xlu0 %v4570, 74
      %v4573 = vpop.permute.xlu0 %4572
      %4575 = vst.msk [vmem:[%s683 + $0x4] sm:$0xf] %vm732, %v4573
      %v4576 = vld [vmem:[#allocation2 + $0x8] sm:$0xf]
      %4578 = vrot.lane.b32.xlu0 %v4576, 72
      %v4579 = vpop.permute.xlu0 %4578
      %4581 = vst.msk [vmem:[%s683 + $0x4] sm:$0xf] %vm790, %v4579
      %v4582 = vld [vmem:[#allocation2 + $0x8] sm:$0xf]
      %4584 = vrot.lane.b32.xlu0 %v4582, 70
      %v4585 = vpop.permute.xlu0 %4584
      %4587 = vst.msk [vmem:[%s683 + $0x4] sm:$0xf] %vm4533, %v4585
      %v4588 = vld [vmem:[#allocation2 + $0x8] sm:$0xf]
      %4590 = vrot.lane.b32.xlu0 %v4588, 68
      %v4591 = vpop.permute.xlu0 %4590
      %4593 = vst.msk [vmem:[%s683 + $0x4] sm:$0xf] %vm4540, %v4591
      %v4594 = vld [vmem:[#allocation2 + $0x8] sm:$0xf]
      %v4595 = vld [vmem:[#allocation2 + $0x10] sm:$0xf]
      %v4598 = vcombine.low %v4594, %v4595
      %4599 = vrot.lane.b32.xlu0 %v4598, 66
      %v4600 = vpop.permute.xlu0 %4599
      %v4601 = vrot.slane %v4600, 4
      %vm4602 = vcmask 539648
      %v4603 = vsel %vm4602, %v4600, %v4601
      %4605 = vst.msk [vmem:[%s683 + $0x4] sm:$0xf] %vm4547, %v4603
      %v4606 = vld [vmem:[#allocation2 + $0x10] sm:$0xf]
      %4608 = vrot.lane.b32.xlu0 %v4606, 64
      %v4609 = vpop.permute.xlu0 %4608
      %4611 = vst.msk [vmem:[%s683 + $0x4] sm:$0xf] %vm4554, %v4609
      %v4612 = vld [vmem:[#allocation2 + $0x10] sm:$0xf]
      %4614 = vrot.lane.b32.xlu0 %v4612, 62
      %v4615 = vpop.permute.xlu0 %4614
      %4617 = vst.msk [vmem:[%s683 + $0x4] sm:$0xf] %vm4561, %v4615
      %v4618 = vld [vmem:[#allocation2 + $0x10] sm:$0xf]
      %4620 = vrot.lane.b32.xlu0 %v4618, 60
      %v4621 = vpop.permute.xlu0 %4620
      %4623 = vst.msk [vmem:[%s683 + $0x4] sm:$0xf] %vm4568, %v4621
      %p4624 = scmp.lt.s32.totalorder %s33, 1
      %s4625 = scalar_select %p4624, %s33, 1
      %s4626 = smul.addr %s4625, 2
      %s4627 = smul.addr %s4626, 4
      %s4628 = scalar_lea.vmem %s22, %s4627
      // Predicated region
      $region109: #{rdbs_forward.1} parent=107 // pred_check
        %p4629 = pneg %p518
      $region110: #{rdbs_forward.1} parent=107 // pred_check_branch
        %4631 = sbr.rel (%p4629) target = $region112
      $region111: #{rdbs_forward.1} parent=107 // pred_region
        _
      $region112: #{rdbs_forward.1} parent=107 // pred_fallthru
        _
    $region108: #{rdbs_forward.1} parent=5 // pred_fallthru
      _
    %p4632 = scmp.le.s32.totalorder 2, %s28
    // Predicated region
    $region113: #{rdbs_forward.1} parent=5 // pred_check
      %p4633 = pneg %p4632
    $region114: #{rdbs_forward.1} parent=5 // pred_check_branch
      %4635 = sbr.rel (%p4633) target = $region116
    $region115: #{rdbs_forward.1} parent=5 // pred_region
      %s4636 = ssub.s32 %s28, 2
      // Predicated region
      $region117: #{rdbs_forward.1} parent=115 // pred_check
        %p4637 = pneg %p524
      $region118: #{rdbs_forward.1} parent=115 // pred_check_branch
        %4639 = sbr.rel (%p4637) target = $region120
      $region119: #{rdbs_forward.1} parent=115 // pred_region
        %p4640 = scmp.lt.s32.totalorder %s34, 1
        %s4641 = scalar_select %p4640, %s34, 1
        %s4642 = smul.addr %s4641, 2
        %s4643 = smul.addr %s4642, 4
        %s4644 = scalar_lea.vmem %s22, %s4643
      $region120: #{rdbs_forward.1} parent=115 // pred_fallthru
        _
    $region116: #{rdbs_forward.1} parent=5 // pred_fallthru
      _
  $region6: #{rdbs_forward.1} parent=0 // loop_footer
    %s32 = sadd.s32 1, %s28
  $region7: #{rdbs_forward.1} parent=0 // loop_footer_branch
    %27 = sbr.rel target = $region3
  $region8: #{rdbs_forward.1} parent=0 // loop_exit
    _

</llo_original>
